<compile_context>
chip_gen: v7x
topology: tpu7x:2x2x1
jax: 0.10.0
libtpu: 0.0.40
codegen_flags: <defaults>
</compile_context>

<pallas_src>
import math
from collections import namedtuple

import jax
import jax.numpy as jnp
from jax.experimental import pallas as pl
from jax.experimental.pallas import tpu as pltpu


# ----------------------------------------------------------------------------
# Architecture description (mirrors the `layer` namedtuples of GenericDeepNet).
# ----------------------------------------------------------------------------
Layer = namedtuple("Layer", ["type", "parameters", "gate"])

ARCHITECTURE = [
    Layer("conv2d", (1, 4, (3, 3), (1, 1)), "relu"),   # 1x16x16 -> 4x14x14
    Layer("maxpool", ((2, 2), (2, 2)), None),          # 4x14x14 -> 4x7x7
    Layer("flatten", (), None),                        # -> 196
    Layer("linear", (None, 32), "relu"),               # 196 -> 32
    Layer("linear", (None, 10), None),                 # 32 -> 10
]
IMAGE_DIMS = (16, 16)
USE_BIAS = True

# Gates for which gate(max(s) + b) == max(gate(s + b)) (monotone non-decreasing).
_MONOTONE_GATES = (None, "relu", "sigmoid", "tanh")


def get_conv_layer_output_dims(h, w, kernel_size, stride):
    kh, kw = kernel_size
    sh, sw = stride
    return (h - kh) // sh + 1, (w - kw) // sw + 1


def _apply_gate(y, gate):
    if gate is None:
        return y
    if gate == "relu":
        return jnp.maximum(y, 0.0)
    if gate == "sigmoid":
        return jax.nn.sigmoid(y)
    if gate == "tanh":
        return jnp.tanh(y)
    raise ValueError(f"unsupported gate: {gate}")


def _round_up(x, m):
    return -(-x // m) * m


# ----------------------------------------------------------------------------
# Static architecture parsing for the fused kernel.
# Supported pattern: conv2d -> maxpool -> flatten -> linear [-> linear ...]
# ----------------------------------------------------------------------------
def _parse_architecture(architecture, image_dims):
    assert len(architecture) >= 4, "fused kernel needs conv/pool/flatten/linear"
    conv, pool, flat = architecture[0], architecture[1], architecture[2]
    assert conv.type == "conv2d" and pool.type == "maxpool" and flat.type == "flatten", (
        "fused kernel supports the pattern conv2d -> maxpool -> flatten -> linear...")
    linears = architecture[3:]
    assert len(linears) >= 1 and all(l.type == "linear" for l in linears)
    # TODO(synk): architectures outside this pattern (multiple convs, dropout in
    # training mode, no pooling) are not covered by the fused kernel.

    cin, cout, (kh, kw), (sh, sw) = conv.parameters
    assert (sh, sw) == (1, 1), "fused kernel supports conv stride (1, 1) only"
    (pkh, pkw), (psh, psw) = pool.parameters
    assert (pkh, pkw) == (psh, psw), "fused kernel supports pool kernel == stride"
    # The maxpool is folded in front of the conv bias + gate, which is only
    # valid for monotone non-decreasing gates.
    assert conv.gate in _MONOTONE_GATES, (
        f"conv gate {conv.gate} is not monotone; pool folding would be wrong")

    h, w = image_dims
    hc, wc = get_conv_layer_output_dims(h, w, (kh, kw), (sh, sw))
    assert hc % pkh == 0 and wc % pkw == 0, "pool must tile the conv output exactly"
    hp, wp = hc // pkh, wc // pkw

    n_or, n_oc = pkh + kh - 1, pkw + kw - 1      # row / col shift ranges
    wp8 = _round_up(wp, 8)                       # pooled cols padded to sublanes
    u_dim = hp + (n_or - 1) // pkh               # rows kept per row-phase slab

    return dict(
        cin=cin, cout=cout, kh=kh, kw=kw, ph=pkh, pw=pkw,
        n_or=n_or, n_oc=n_oc,
        h=h, w=w, hp=hp, wp=wp, wp8=wp8, u_dim=u_dim,
        conv_gate=conv.gate, pool_gate=pool.gate, flat_gate=flat.gate,
        linear_gates=tuple(l.gate for l in linears),
        linear_out=tuple(l.parameters[1] for l in linears),
    )


# ----------------------------------------------------------------------------
# Fused kernel body: one TB-sized batch block per grid step, batch on lanes.
# ----------------------------------------------------------------------------
def _make_fused_kernel(cfg):
    cin, cout = cfg["cin"], cfg["cout"]
    kh, kw = cfg["kh"], cfg["kw"]
    ph, pw = cfg["ph"], cfg["pw"]
    hp, wp8 = cfg["hp"], cfg["wp8"]
    n_or, n_oc = cfg["n_or"], cfg["n_oc"]
    n_lead = cin * ph * n_oc
    conv_gate, pool_gate, flat_gate = cfg["conv_gate"], cfg["pool_gate"], cfg["flat_gate"]
    lin_gates = cfg["linear_gates"]
    n_lin = len(lin_gates)

    def kernel(xs_ref, wc_ref, bc_ref, *rest):
        lin_refs = rest[:2 * n_lin]
        o_ref = rest[2 * n_lin]
        tb = xs_ref.shape[-1]

        w1_all = lin_refs[0][...]            # (cout, N1, hp*wp8)
        b1 = lin_refs[1][...]                # (N1, 1)
        n1 = w1_all.shape[1]

        # Load each distinct (channel, row-phase, column-shift) slab once per
        # grid step; every conv tap below reuses these (load hoisting).
        slabs = [xs_ref[l] for l in range(n_lead)]           # (u_dim, wp8, tb)
        taps = {}
        for ci in range(cin):
            for s_r in range(n_or):
                alpha, a = s_r % ph, s_r // ph
                for s_c in range(n_oc):
                    lead = (ci * ph + alpha) * n_oc + s_c
                    # Row shift is a free outer-dim value slice.
                    taps[(ci, s_r, s_c)] = slabs[lead][a:a + hp]   # (hp, wp8, tb)

        acc = jnp.zeros((n1, tb), jnp.float32)
        for co in range(cout):
            # Conv taps accumulated on the VPU for every pool phase; the
            # maxpool is the running max over phases (valid: monotone gate,
            # per-channel constant bias).
            phase_max = None
            for p in range(ph):
                for q in range(pw):
                    s = None
                    for ci in range(cin):
                        for i in range(kh):
                            for j in range(kw):
                                wsc = wc_ref[((co * cin + ci) * kh + i) * kw + j]
                                t = taps[(ci, p + i, q + j)] * wsc
                                s = t if s is None else s + t
                    phase_max = s if phase_max is None else jnp.maximum(phase_max, s)
            pooled = phase_max + bc_ref[co]                   # (hp, wp8, tb)
            pooled = _apply_gate(pooled, conv_gate)
            pooled = _apply_gate(pooled, pool_gate)
            pooled = _apply_gate(pooled, flat_gate)
            # wp8 == sublane multiple => this reshape is a free relabeling.
            feat = pooled.reshape(hp * wp8, tb)               # (hp*wp8, tb)
            # First linear: batched MXU matmul per channel, accumulated in f32.
            # (w1 columns that map to padded cols c >= wp are zero.)
            acc = acc + jnp.dot(w1_all[co], feat,
                                preferred_element_type=jnp.float32)

        hidden = _apply_gate(acc + b1, lin_gates[0])          # (N1, tb)
        for li in range(1, n_lin):
            w_t = lin_refs[2 * li][...]                       # (out_f, in_f)
            b_l = lin_refs[2 * li + 1][...]                   # (out_f, 1)
            hidden = jnp.dot(w_t, hidden,
                             preferred_element_type=jnp.float32) + b_l
            hidden = _apply_gate(hidden, lin_gates[li])

        o_ref[...] = hidden.astype(o_ref.dtype)               # (n_out, tb) lane-dense

    return kernel


def _full_spec(shape):
    rank = len(shape)
    return pl.BlockSpec(shape, lambda *args, _r=rank: (0,) * _r)


# ----------------------------------------------------------------------------
# Forward-pass builder.
# ----------------------------------------------------------------------------
def make_forward_fn(architecture=ARCHITECTURE, image_dims=IMAGE_DIMS,
                    use_bias=USE_BIAS):
    cfg = _parse_architecture(architecture, image_dims)
    kernel = _make_fused_kernel(cfg)

    cin, cout = cfg["cin"], cfg["cout"]
    ph, pw = cfg["ph"], cfg["pw"]
    n_oc = cfg["n_oc"]
    hp, wp, wp8 = cfg["hp"], cfg["wp"], cfg["wp8"]
    u_dim = cfg["u_dim"]
    h, w = cfg["h"], cfg["w"]
    n_lead = cin * ph * n_oc
    n_lin = len(cfg["linear_gates"])
    n_out = cfg["linear_out"][-1]

    h_pad = max(ph * u_dim, h)
    w_pad = max(pw * (wp8 - 1) + n_oc, w)

    def forward(params, obs_nchw, return_activations=False):
        if return_activations:
            # TODO(synk): per-layer activations are not exposed by the fused
            # kernel (would need extra kernel outputs).
            raise NotImplementedError(
                "return_activations is not supported by the fused kernel")

        obs = obs_nchw.astype(jnp.float32)
        B = obs.shape[0]
        assert obs.shape[1:] == (cin, h, w), obs.shape

        # Batch block size: multiple of 128 lanes; keep >=2 grid steps once the
        # batch is large enough for v7x's two TensorCores to matter.
        tb = 128 if B <= 256 else 256
        b_pad = _round_up(B, tb)

        # Row-phase / column-shift decomposition of the input, built once in
        # XLA (~2x the raw input bytes, vs ~3x for full pool-phase views).
        obs_p = jnp.pad(obs, ((0, b_pad - B), (0, 0),
                              (0, h_pad - h), (0, w_pad - w)))
        views = []
        for ci in range(cin):
            for alpha in range(ph):
                for s_c in range(n_oc):
                    v = obs_p[:, ci, alpha::ph, s_c::pw]
                    views.append(v[:, :u_dim, :wp8])          # (b_pad, u_dim, wp8)
        xs = jnp.stack(views, axis=0)                         # (n_lead, b_pad, u_dim, wp8)
        xs = jnp.transpose(xs, (0, 2, 3, 1))                  # (n_lead, u_dim, wp8, b_pad)

        wc, bc = params[0]                                    # (cout, cin, kh, kw), (cout,)
        inputs = [xs,
                  wc.reshape(-1).astype(jnp.float32),         # scalar conv taps -> SMEM
                  bc.astype(jnp.float32)]                     # conv bias        -> SMEM
        in_specs = [
            pl.BlockSpec((n_lead, u_dim, wp8, tb), lambda n: (0, 0, 0, n)),
            pl.BlockSpec(memory_space=pltpu.MemorySpace.SMEM),
            pl.BlockSpec(memory_space=pltpu.MemorySpace.SMEM),
        ]

        lin_params = [p for p, a in zip(params, architecture) if a.type == "linear"]
        for li, (wl, bl) in enumerate(lin_params):
            wl = wl.astype(jnp.float32)
            if li == 0:
                n1 = wl.shape[1]
                assert wl.shape[0] == cout * hp * wp
                # Split by conv channel, zero-pad the pooled-column axis to wp8
                # and transpose so the kernel does (N1, hp*wp8) @ (hp*wp8, TB).
                wl = wl.reshape(cout, hp, wp, n1)
                wl = jnp.pad(wl, ((0, 0), (0, 0), (0, wp8 - wp), (0, 0)))
                wl = jnp.transpose(wl, (0, 3, 1, 2)).reshape(cout, n1, hp * wp8)
            else:
                wl = wl.T                                     # (out_f, in_f)
            bl = bl.astype(jnp.float32).reshape(-1, 1)        # (out_f, 1)
            inputs += [wl, bl]
            in_specs += [_full_spec(wl.shape), _full_spec(bl.shape)]

        out = pl.pallas_call(
            kernel,
            out_shape=jax.ShapeDtypeStruct((n_out, b_pad), jnp.float32),
            grid_spec=pltpu.PrefetchScalarGridSpec(
                num_scalar_prefetch=0,
                grid=(b_pad // tb,),
                in_specs=in_specs,
                out_specs=pl.BlockSpec((n_out, tb), lambda n: (0, n)),
            ),
            compiler_params=pltpu.CompilerParams(
                dimension_semantics=("parallel",)),
        )(*inputs)
        return out[:, :B].T                                   # (B, n_out)

    return forward


# ----------------------------------------------------------------------------
# Parameter init (deterministic, PyTorch-style uniform bounds).
# Conv weights use the PyTorch (out_c, in_c, kh, kw) layout; linear weights are
# stored (in_features, out_features) — transpose nn.Linear weights if importing.
# ----------------------------------------------------------------------------
def init_params(architecture, image_dims, key, use_bias=True):
    params = []
    out_channels = 1
    h, w = image_dims
    for a_layer in architecture:
        if a_layer.type == "conv2d":
            in_c, out_c, (kh, kw), (sh, sw) = a_layer.parameters
            key, k1, k2 = jax.random.split(key, 3)
            bound = 1.0 / math.sqrt(in_c * kh * kw)
            wgt = jax.random.uniform(k1, (out_c, in_c, kh, kw), jnp.float32,
                                     -bound, bound)
            bias = (jax.random.uniform(k2, (out_c,), jnp.float32, -bound, bound)
                    if use_bias else jnp.zeros((out_c,), jnp.float32))
            params.append((wgt, bias))
            h, w = get_conv_layer_output_dims(h, w, (kh, kw), (sh, sw))
            out_channels = out_c
        elif a_layer.type == "maxpool":
            ks, st = a_layer.parameters
            h, w = get_conv_layer_output_dims(h, w, ks, st)
            params.append(None)
        elif a_layer.type == "linear":
            _, out_f = a_layer.parameters
            in_f = h * w * out_channels
            key, k1, k2 = jax.random.split(key, 3)
            bound = 1.0 / math.sqrt(in_f)
            wgt = jax.random.uniform(k1, (in_f, out_f), jnp.float32,
                                     -bound, bound)
            bias = (jax.random.uniform(k2, (out_f,), jnp.float32, -bound, bound)
                    if use_bias else jnp.zeros((out_f,), jnp.float32))
            params.append((wgt, bias))
            h, w, out_channels = out_f, 1, 1
        elif a_layer.type in ("flatten", "dropout"):
            params.append(None)
        else:
            raise ValueError(f"{a_layer} is not a valid layer!")
    return params


# ----------------------------------------------------------------------------
# Pure-JAX reference (for correctness checking only).
# ----------------------------------------------------------------------------
def reference_forward(params, obs, architecture=ARCHITECTURE):
    x = obs.astype(jnp.float32)
    for a_layer, p in zip(architecture, params):
        if a_layer.type == "conv2d":
            w, b = p
            _, _, _, (sh, sw) = a_layer.parameters
            x = jax.lax.conv_general_dilated(
                x, w, window_strides=(sh, sw), padding="VALID",
                dimension_numbers=("NCHW", "OIHW", "NCHW"))
            x = x + b[None, :, None, None]
        elif a_layer.type == "maxpool":
            (kh, kw), _ = a_layer.parameters
            n, c, h, w_ = x.shape
            x = x.reshape(n, c, h // kh, kh, w_ // kw, kw).max(axis=(3, 5))
        elif a_layer.type == "flatten":
            x = x.reshape(x.shape[0], -1)
        elif a_layer.type == "linear":
            w, b = p
            x = x @ w + b
        elif a_layer.type == "dropout":
            pass  # eval-mode identity
        x = _apply_gate(x, a_layer.gate)
    return x


if __name__ == "__main__":
    key = jax.random.PRNGKey(0)
    k_in, k_params = jax.random.split(key)

    # Input matches PyTorch convention: NCHW, C = first conv's in_channels.
    obs = jax.random.normal(k_in, (2, 1, 16, 16), dtype=jnp.float32)
    params = init_params(ARCHITECTURE, IMAGE_DIMS, k_params, use_bias=USE_BIAS)

    forward = make_forward_fn(ARCHITECTURE, IMAGE_DIMS, USE_BIAS)
    fwd = jax.jit(forward)
    out = jax.block_until_ready(fwd(params, obs))

    assert out.shape == (2, 10), out.shape
    assert out.dtype == jnp.float32

    ref = jax.block_until_ready(jax.jit(reference_forward)(params, obs))
    assert jnp.allclose(out, ref, rtol=1e-4, atol=1e-4), (
        float(jnp.max(jnp.abs(out - ref))))

    print("KERNEL_OK")
</pallas_src>

<mosaic_0001>
module attributes {stable_mosaic.version = 11 : i64} {
  func.func @kernel(%arg0: i32, %arg1: memref<8x8x8x128xf32, #tpu.memory_space<vmem>>, %arg2: memref<36xf32, #tpu.memory_space<smem>>, %arg3: memref<4xf32, #tpu.memory_space<smem>>, %arg4: memref<4x32x56xf32, #tpu.memory_space<vmem>>, %arg5: memref<32x1xf32, #tpu.memory_space<vmem>>, %arg6: memref<10x32xf32, #tpu.memory_space<vmem>>, %arg7: memref<10x1xf32, #tpu.memory_space<vmem>>, %arg8: memref<10x128xf32, #tpu.memory_space<vmem>>) attributes {dimension_semantics = [#tpu.dimension_semantics<parallel>], iteration_bounds = array<i64: 1>, scalar_prefetch = 0 : i64, scratch_operands = 0 : i64, tpu.core_type = #tpu.core_type<tc>, window_params = [{transform_indices = @transform_0, window_bounds = array<i64: 8, 8, 8, 128>}, {transform_indices = @transform_1, window_bounds = array<i64: 36>}, {transform_indices = @transform_2, window_bounds = array<i64: 4>}, {pipeline_mode = #tpu.pipeline_mode<synchronous>, transform_indices = @transform_3, window_bounds = array<i64: 4, 32, 56>}, {pipeline_mode = #tpu.pipeline_mode<synchronous>, transform_indices = @transform_4, window_bounds = array<i64: 32, 1>}, {pipeline_mode = #tpu.pipeline_mode<synchronous>, transform_indices = @transform_5, window_bounds = array<i64: 10, 32>}, {pipeline_mode = #tpu.pipeline_mode<synchronous>, transform_indices = @transform_6, window_bounds = array<i64: 10, 1>}, {transform_indices = @transform_7, window_bounds = array<i64: 10, 128>}]} {
    %c0 = arith.constant 0 : index
    %c0_0 = arith.constant 0 : index
    %c0_1 = arith.constant 0 : index
    %0 = vector.load %arg4[%c0, %c0_0, %c0_1] : memref<4x32x56xf32, #tpu.memory_space<vmem>>, vector<4x32x56xf32>
    %c0_2 = arith.constant 0 : index
    %c0_3 = arith.constant 0 : index
    %1 = vector.load %arg5[%c0_2, %c0_3] : memref<32x1xf32, #tpu.memory_space<vmem>>, vector<32x1xf32>
    %c0_4 = arith.constant 0 : index
    %c0_5 = arith.constant 0 : index
    %c0_6 = arith.constant 0 : index
    %c0_7 = arith.constant 0 : index
    %2 = vector.load %arg1[%c0_4, %c0_5, %c0_6, %c0_7] : memref<8x8x8x128xf32, #tpu.memory_space<vmem>>, vector<1x8x8x128xf32>
    %3 = vector.shape_cast %2 : vector<1x8x8x128xf32> to vector<8x8x128xf32>
    %c1 = arith.constant 1 : index
    %c0_8 = arith.constant 0 : index
    %c0_9 = arith.constant 0 : index
    %c0_10 = arith.constant 0 : index
    %4 = vector.load %arg1[%c1, %c0_8, %c0_9, %c0_10] : memref<8x8x8x128xf32, #tpu.memory_space<vmem>>, vector<1x8x8x128xf32>
    %5 = vector.shape_cast %4 : vector<1x8x8x128xf32> to vector<8x8x128xf32>
    %c2 = arith.constant 2 : index
    %c0_11 = arith.constant 0 : index
    %c0_12 = arith.constant 0 : index
    %c0_13 = arith.constant 0 : index
    %6 = vector.load %arg1[%c2, %c0_11, %c0_12, %c0_13] : memref<8x8x8x128xf32, #tpu.memory_space<vmem>>, vector<1x8x8x128xf32>
    %7 = vector.shape_cast %6 : vector<1x8x8x128xf32> to vector<8x8x128xf32>
    %c3 = arith.constant 3 : index
    %c0_14 = arith.constant 0 : index
    %c0_15 = arith.constant 0 : index
    %c0_16 = arith.constant 0 : index
    %8 = vector.load %arg1[%c3, %c0_14, %c0_15, %c0_16] : memref<8x8x8x128xf32, #tpu.memory_space<vmem>>, vector<1x8x8x128xf32>
    %9 = vector.shape_cast %8 : vector<1x8x8x128xf32> to vector<8x8x128xf32>
    %c4 = arith.constant 4 : index
    %c0_17 = arith.constant 0 : index
    %c0_18 = arith.constant 0 : index
    %c0_19 = arith.constant 0 : index
    %10 = vector.load %arg1[%c4, %c0_17, %c0_18, %c0_19] : memref<8x8x8x128xf32, #tpu.memory_space<vmem>>, vector<1x8x8x128xf32>
    %11 = vector.shape_cast %10 : vector<1x8x8x128xf32> to vector<8x8x128xf32>
    %c5 = arith.constant 5 : index
    %c0_20 = arith.constant 0 : index
    %c0_21 = arith.constant 0 : index
    %c0_22 = arith.constant 0 : index
    %12 = vector.load %arg1[%c5, %c0_20, %c0_21, %c0_22] : memref<8x8x8x128xf32, #tpu.memory_space<vmem>>, vector<1x8x8x128xf32>
    %13 = vector.shape_cast %12 : vector<1x8x8x128xf32> to vector<8x8x128xf32>
    %c6 = arith.constant 6 : index
    %c0_23 = arith.constant 0 : index
    %c0_24 = arith.constant 0 : index
    %c0_25 = arith.constant 0 : index
    %14 = vector.load %arg1[%c6, %c0_23, %c0_24, %c0_25] : memref<8x8x8x128xf32, #tpu.memory_space<vmem>>, vector<1x8x8x128xf32>
    %15 = vector.shape_cast %14 : vector<1x8x8x128xf32> to vector<8x8x128xf32>
    %c7 = arith.constant 7 : index
    %c0_26 = arith.constant 0 : index
    %c0_27 = arith.constant 0 : index
    %c0_28 = arith.constant 0 : index
    %16 = vector.load %arg1[%c7, %c0_26, %c0_27, %c0_28] : memref<8x8x8x128xf32, #tpu.memory_space<vmem>>, vector<1x8x8x128xf32>
    %17 = vector.shape_cast %16 : vector<1x8x8x128xf32> to vector<8x8x128xf32>
    %18 = vector.extract_strided_slice %3 {offsets = [0, 0, 0], sizes = [7, 8, 128], strides = [1, 1, 1]} : vector<8x8x128xf32> to vector<7x8x128xf32>
    %19 = vector.extract_strided_slice %5 {offsets = [0, 0, 0], sizes = [7, 8, 128], strides = [1, 1, 1]} : vector<8x8x128xf32> to vector<7x8x128xf32>
    %20 = vector.extract_strided_slice %7 {offsets = [0, 0, 0], sizes = [7, 8, 128], strides = [1, 1, 1]} : vector<8x8x128xf32> to vector<7x8x128xf32>
    %21 = vector.extract_strided_slice %9 {offsets = [0, 0, 0], sizes = [7, 8, 128], strides = [1, 1, 1]} : vector<8x8x128xf32> to vector<7x8x128xf32>
    %22 = vector.extract_strided_slice %11 {offsets = [0, 0, 0], sizes = [7, 8, 128], strides = [1, 1, 1]} : vector<8x8x128xf32> to vector<7x8x128xf32>
    %23 = vector.extract_strided_slice %13 {offsets = [0, 0, 0], sizes = [7, 8, 128], strides = [1, 1, 1]} : vector<8x8x128xf32> to vector<7x8x128xf32>
    %24 = vector.extract_strided_slice %15 {offsets = [0, 0, 0], sizes = [7, 8, 128], strides = [1, 1, 1]} : vector<8x8x128xf32> to vector<7x8x128xf32>
    %25 = vector.extract_strided_slice %17 {offsets = [0, 0, 0], sizes = [7, 8, 128], strides = [1, 1, 1]} : vector<8x8x128xf32> to vector<7x8x128xf32>
    %26 = vector.extract_strided_slice %3 {offsets = [1, 0, 0], sizes = [7, 8, 128], strides = [1, 1, 1]} : vector<8x8x128xf32> to vector<7x8x128xf32>
    %27 = vector.extract_strided_slice %5 {offsets = [1, 0, 0], sizes = [7, 8, 128], strides = [1, 1, 1]} : vector<8x8x128xf32> to vector<7x8x128xf32>
    %28 = vector.extract_strided_slice %7 {offsets = [1, 0, 0], sizes = [7, 8, 128], strides = [1, 1, 1]} : vector<8x8x128xf32> to vector<7x8x128xf32>
    %29 = vector.extract_strided_slice %9 {offsets = [1, 0, 0], sizes = [7, 8, 128], strides = [1, 1, 1]} : vector<8x8x128xf32> to vector<7x8x128xf32>
    %30 = vector.extract_strided_slice %11 {offsets = [1, 0, 0], sizes = [7, 8, 128], strides = [1, 1, 1]} : vector<8x8x128xf32> to vector<7x8x128xf32>
    %31 = vector.extract_strided_slice %13 {offsets = [1, 0, 0], sizes = [7, 8, 128], strides = [1, 1, 1]} : vector<8x8x128xf32> to vector<7x8x128xf32>
    %32 = vector.extract_strided_slice %15 {offsets = [1, 0, 0], sizes = [7, 8, 128], strides = [1, 1, 1]} : vector<8x8x128xf32> to vector<7x8x128xf32>
    %33 = vector.extract_strided_slice %17 {offsets = [1, 0, 0], sizes = [7, 8, 128], strides = [1, 1, 1]} : vector<8x8x128xf32> to vector<7x8x128xf32>
    %cst = arith.constant 0.000000e+00 : f32
    %34 = vector.broadcast %cst : f32 to vector<32x128xf32>
    %c0_29 = arith.constant 0 : index
    %35 = memref.load %arg2[%c0_29] : memref<36xf32, #tpu.memory_space<smem>>
    %36 = vector.broadcast %35 : f32 to vector<7x8x128xf32>
    %37 = arith.mulf %18, %36 : vector<7x8x128xf32>
    %c1_30 = arith.constant 1 : index
    %38 = memref.load %arg2[%c1_30] : memref<36xf32, #tpu.memory_space<smem>>
    %39 = vector.broadcast %38 : f32 to vector<7x8x128xf32>
    %40 = arith.mulf %19, %39 : vector<7x8x128xf32>
    %41 = arith.addf %37, %40 : vector<7x8x128xf32>
    %c2_31 = arith.constant 2 : index
    %42 = memref.load %arg2[%c2_31] : memref<36xf32, #tpu.memory_space<smem>>
    %43 = vector.broadcast %42 : f32 to vector<7x8x128xf32>
    %44 = arith.mulf %20, %43 : vector<7x8x128xf32>
    %45 = arith.addf %41, %44 : vector<7x8x128xf32>
    %c3_32 = arith.constant 3 : index
    %46 = memref.load %arg2[%c3_32] : memref<36xf32, #tpu.memory_space<smem>>
    %47 = vector.broadcast %46 : f32 to vector<7x8x128xf32>
    %48 = arith.mulf %22, %47 : vector<7x8x128xf32>
    %49 = arith.addf %45, %48 : vector<7x8x128xf32>
    %c4_33 = arith.constant 4 : index
    %50 = memref.load %arg2[%c4_33] : memref<36xf32, #tpu.memory_space<smem>>
    %51 = vector.broadcast %50 : f32 to vector<7x8x128xf32>
    %52 = arith.mulf %23, %51 : vector<7x8x128xf32>
    %53 = arith.addf %49, %52 : vector<7x8x128xf32>
    %c5_34 = arith.constant 5 : index
    %54 = memref.load %arg2[%c5_34] : memref<36xf32, #tpu.memory_space<smem>>
    %55 = vector.broadcast %54 : f32 to vector<7x8x128xf32>
    %56 = arith.mulf %24, %55 : vector<7x8x128xf32>
    %57 = arith.addf %53, %56 : vector<7x8x128xf32>
    %c6_35 = arith.constant 6 : index
    %58 = memref.load %arg2[%c6_35] : memref<36xf32, #tpu.memory_space<smem>>
    %59 = vector.broadcast %58 : f32 to vector<7x8x128xf32>
    %60 = arith.mulf %26, %59 : vector<7x8x128xf32>
    %61 = arith.addf %57, %60 : vector<7x8x128xf32>
    %c7_36 = arith.constant 7 : index
    %62 = memref.load %arg2[%c7_36] : memref<36xf32, #tpu.memory_space<smem>>
    %63 = vector.broadcast %62 : f32 to vector<7x8x128xf32>
    %64 = arith.mulf %27, %63 : vector<7x8x128xf32>
    %65 = arith.addf %61, %64 : vector<7x8x128xf32>
    %c8 = arith.constant 8 : index
    %66 = memref.load %arg2[%c8] : memref<36xf32, #tpu.memory_space<smem>>
    %67 = vector.broadcast %66 : f32 to vector<7x8x128xf32>
    %68 = arith.mulf %28, %67 : vector<7x8x128xf32>
    %69 = arith.addf %65, %68 : vector<7x8x128xf32>
    %c0_37 = arith.constant 0 : index
    %70 = memref.load %arg2[%c0_37] : memref<36xf32, #tpu.memory_space<smem>>
    %71 = vector.broadcast %70 : f32 to vector<7x8x128xf32>
    %72 = arith.mulf %19, %71 : vector<7x8x128xf32>
    %c1_38 = arith.constant 1 : index
    %73 = memref.load %arg2[%c1_38] : memref<36xf32, #tpu.memory_space<smem>>
    %74 = vector.broadcast %73 : f32 to vector<7x8x128xf32>
    %75 = arith.mulf %20, %74 : vector<7x8x128xf32>
    %76 = arith.addf %72, %75 : vector<7x8x128xf32>
    %c2_39 = arith.constant 2 : index
    %77 = memref.load %arg2[%c2_39] : memref<36xf32, #tpu.memory_space<smem>>
    %78 = vector.broadcast %77 : f32 to vector<7x8x128xf32>
    %79 = arith.mulf %21, %78 : vector<7x8x128xf32>
    %80 = arith.addf %76, %79 : vector<7x8x128xf32>
    %c3_40 = arith.constant 3 : index
    %81 = memref.load %arg2[%c3_40] : memref<36xf32, #tpu.memory_space<smem>>
    %82 = vector.broadcast %81 : f32 to vector<7x8x128xf32>
    %83 = arith.mulf %23, %82 : vector<7x8x128xf32>
    %84 = arith.addf %80, %83 : vector<7x8x128xf32>
    %c4_41 = arith.constant 4 : index
    %85 = memref.load %arg2[%c4_41] : memref<36xf32, #tpu.memory_space<smem>>
    %86 = vector.broadcast %85 : f32 to vector<7x8x128xf32>
    %87 = arith.mulf %24, %86 : vector<7x8x128xf32>
    %88 = arith.addf %84, %87 : vector<7x8x128xf32>
    %c5_42 = arith.constant 5 : index
    %89 = memref.load %arg2[%c5_42] : memref<36xf32, #tpu.memory_space<smem>>
    %90 = vector.broadcast %89 : f32 to vector<7x8x128xf32>
    %91 = arith.mulf %25, %90 : vector<7x8x128xf32>
    %92 = arith.addf %88, %91 : vector<7x8x128xf32>
    %c6_43 = arith.constant 6 : index
    %93 = memref.load %arg2[%c6_43] : memref<36xf32, #tpu.memory_space<smem>>
    %94 = vector.broadcast %93 : f32 to vector<7x8x128xf32>
    %95 = arith.mulf %27, %94 : vector<7x8x128xf32>
    %96 = arith.addf %92, %95 : vector<7x8x128xf32>
    %c7_44 = arith.constant 7 : index
    %97 = memref.load %arg2[%c7_44] : memref<36xf32, #tpu.memory_space<smem>>
    %98 = vector.broadcast %97 : f32 to vector<7x8x128xf32>
    %99 = arith.mulf %28, %98 : vector<7x8x128xf32>
    %100 = arith.addf %96, %99 : vector<7x8x128xf32>
    %c8_45 = arith.constant 8 : index
    %101 = memref.load %arg2[%c8_45] : memref<36xf32, #tpu.memory_space<smem>>
    %102 = vector.broadcast %101 : f32 to vector<7x8x128xf32>
    %103 = arith.mulf %29, %102 : vector<7x8x128xf32>
    %104 = arith.addf %100, %103 : vector<7x8x128xf32>
    %105 = arith.maximumf %69, %104 : vector<7x8x128xf32>
    %c0_46 = arith.constant 0 : index
    %106 = memref.load %arg2[%c0_46] : memref<36xf32, #tpu.memory_space<smem>>
    %107 = vector.broadcast %106 : f32 to vector<7x8x128xf32>
    %108 = arith.mulf %22, %107 : vector<7x8x128xf32>
    %c1_47 = arith.constant 1 : index
    %109 = memref.load %arg2[%c1_47] : memref<36xf32, #tpu.memory_space<smem>>
    %110 = vector.broadcast %109 : f32 to vector<7x8x128xf32>
    %111 = arith.mulf %23, %110 : vector<7x8x128xf32>
    %112 = arith.addf %108, %111 : vector<7x8x128xf32>
    %c2_48 = arith.constant 2 : index
    %113 = memref.load %arg2[%c2_48] : memref<36xf32, #tpu.memory_space<smem>>
    %114 = vector.broadcast %113 : f32 to vector<7x8x128xf32>
    %115 = arith.mulf %24, %114 : vector<7x8x128xf32>
    %116 = arith.addf %112, %115 : vector<7x8x128xf32>
    %c3_49 = arith.constant 3 : index
    %117 = memref.load %arg2[%c3_49] : memref<36xf32, #tpu.memory_space<smem>>
    %118 = vector.broadcast %117 : f32 to vector<7x8x128xf32>
    %119 = arith.mulf %26, %118 : vector<7x8x128xf32>
    %120 = arith.addf %116, %119 : vector<7x8x128xf32>
    %c4_50 = arith.constant 4 : index
    %121 = memref.load %arg2[%c4_50] : memref<36xf32, #tpu.memory_space<smem>>
    %122 = vector.broadcast %121 : f32 to vector<7x8x128xf32>
    %123 = arith.mulf %27, %122 : vector<7x8x128xf32>
    %124 = arith.addf %120, %123 : vector<7x8x128xf32>
    %c5_51 = arith.constant 5 : index
    %125 = memref.load %arg2[%c5_51] : memref<36xf32, #tpu.memory_space<smem>>
    %126 = vector.broadcast %125 : f32 to vector<7x8x128xf32>
    %127 = arith.mulf %28, %126 : vector<7x8x128xf32>
    %128 = arith.addf %124, %127 : vector<7x8x128xf32>
    %c6_52 = arith.constant 6 : index
    %129 = memref.load %arg2[%c6_52] : memref<36xf32, #tpu.memory_space<smem>>
    %130 = vector.broadcast %129 : f32 to vector<7x8x128xf32>
    %131 = arith.mulf %30, %130 : vector<7x8x128xf32>
    %132 = arith.addf %128, %131 : vector<7x8x128xf32>
    %c7_53 = arith.constant 7 : index
    %133 = memref.load %arg2[%c7_53] : memref<36xf32, #tpu.memory_space<smem>>
    %134 = vector.broadcast %133 : f32 to vector<7x8x128xf32>
    %135 = arith.mulf %31, %134 : vector<7x8x128xf32>
    %136 = arith.addf %132, %135 : vector<7x8x128xf32>
    %c8_54 = arith.constant 8 : index
    %137 = memref.load %arg2[%c8_54] : memref<36xf32, #tpu.memory_space<smem>>
    %138 = vector.broadcast %137 : f32 to vector<7x8x128xf32>
    %139 = arith.mulf %32, %138 : vector<7x8x128xf32>
    %140 = arith.addf %136, %139 : vector<7x8x128xf32>
    %141 = arith.maximumf %105, %140 : vector<7x8x128xf32>
    %c0_55 = arith.constant 0 : index
    %142 = memref.load %arg2[%c0_55] : memref<36xf32, #tpu.memory_space<smem>>
    %143 = vector.broadcast %142 : f32 to vector<7x8x128xf32>
    %144 = arith.mulf %23, %143 : vector<7x8x128xf32>
    %c1_56 = arith.constant 1 : index
    %145 = memref.load %arg2[%c1_56] : memref<36xf32, #tpu.memory_space<smem>>
    %146 = vector.broadcast %145 : f32 to vector<7x8x128xf32>
    %147 = arith.mulf %24, %146 : vector<7x8x128xf32>
    %148 = arith.addf %144, %147 : vector<7x8x128xf32>
    %c2_57 = arith.constant 2 : index
    %149 = memref.load %arg2[%c2_57] : memref<36xf32, #tpu.memory_space<smem>>
    %150 = vector.broadcast %149 : f32 to vector<7x8x128xf32>
    %151 = arith.mulf %25, %150 : vector<7x8x128xf32>
    %152 = arith.addf %148, %151 : vector<7x8x128xf32>
    %c3_58 = arith.constant 3 : index
    %153 = memref.load %arg2[%c3_58] : memref<36xf32, #tpu.memory_space<smem>>
    %154 = vector.broadcast %153 : f32 to vector<7x8x128xf32>
    %155 = arith.mulf %27, %154 : vector<7x8x128xf32>
    %156 = arith.addf %152, %155 : vector<7x8x128xf32>
    %c4_59 = arith.constant 4 : index
    %157 = memref.load %arg2[%c4_59] : memref<36xf32, #tpu.memory_space<smem>>
    %158 = vector.broadcast %157 : f32 to vector<7x8x128xf32>
    %159 = arith.mulf %28, %158 : vector<7x8x128xf32>
    %160 = arith.addf %156, %159 : vector<7x8x128xf32>
    %c5_60 = arith.constant 5 : index
    %161 = memref.load %arg2[%c5_60] : memref<36xf32, #tpu.memory_space<smem>>
    %162 = vector.broadcast %161 : f32 to vector<7x8x128xf32>
    %163 = arith.mulf %29, %162 : vector<7x8x128xf32>
    %164 = arith.addf %160, %163 : vector<7x8x128xf32>
    %c6_61 = arith.constant 6 : index
    %165 = memref.load %arg2[%c6_61] : memref<36xf32, #tpu.memory_space<smem>>
    %166 = vector.broadcast %165 : f32 to vector<7x8x128xf32>
    %167 = arith.mulf %31, %166 : vector<7x8x128xf32>
    %168 = arith.addf %164, %167 : vector<7x8x128xf32>
    %c7_62 = arith.constant 7 : index
    %169 = memref.load %arg2[%c7_62] : memref<36xf32, #tpu.memory_space<smem>>
    %170 = vector.broadcast %169 : f32 to vector<7x8x128xf32>
    %171 = arith.mulf %32, %170 : vector<7x8x128xf32>
    %172 = arith.addf %168, %171 : vector<7x8x128xf32>
    %c8_63 = arith.constant 8 : index
    %173 = memref.load %arg2[%c8_63] : memref<36xf32, #tpu.memory_space<smem>>
    %174 = vector.broadcast %173 : f32 to vector<7x8x128xf32>
    %175 = arith.mulf %33, %174 : vector<7x8x128xf32>
    %176 = arith.addf %172, %175 : vector<7x8x128xf32>
    %177 = arith.maximumf %141, %176 : vector<7x8x128xf32>
    %c0_64 = arith.constant 0 : index
    %178 = memref.load %arg3[%c0_64] : memref<4xf32, #tpu.memory_space<smem>>
    %179 = vector.broadcast %178 : f32 to vector<7x8x128xf32>
    %180 = arith.addf %177, %179 : vector<7x8x128xf32>
    %cst_65 = arith.constant 0.000000e+00 : f32
    %181 = vector.broadcast %cst_65 : f32 to vector<7x8x128xf32>
    %182 = arith.maximumf %180, %181 : vector<7x8x128xf32>
    %183 = vector.shape_cast %182 : vector<7x8x128xf32> to vector<56x128xf32>
    %184 = vector.extract_strided_slice %0 {offsets = [0, 0, 0], sizes = [1, 32, 56], strides = [1, 1, 1]} : vector<4x32x56xf32> to vector<1x32x56xf32>
    %185 = vector.shape_cast %184 : vector<1x32x56xf32> to vector<32x56xf32>
    %cst_66 = arith.constant dense<0.000000e+00> : vector<32x128xf32>
    %186 = tpu.matmul %185, %183, %cst_66 {dimension_numbers = #tpu.dot_dimension_numbers<[1], [0], [0], [1], [0, 0, 1, 1], [], []>} : vector<32x56xf32>, vector<56x128xf32>, vector<32x128xf32> -> vector<32x128xf32>
    %187 = arith.addf %34, %186 : vector<32x128xf32>
    %c9 = arith.constant 9 : index
    %188 = memref.load %arg2[%c9] : memref<36xf32, #tpu.memory_space<smem>>
    %189 = vector.broadcast %188 : f32 to vector<7x8x128xf32>
    %190 = arith.mulf %18, %189 : vector<7x8x128xf32>
    %c10 = arith.constant 10 : index
    %191 = memref.load %arg2[%c10] : memref<36xf32, #tpu.memory_space<smem>>
    %192 = vector.broadcast %191 : f32 to vector<7x8x128xf32>
    %193 = arith.mulf %19, %192 : vector<7x8x128xf32>
    %194 = arith.addf %190, %193 : vector<7x8x128xf32>
    %c11 = arith.constant 11 : index
    %195 = memref.load %arg2[%c11] : memref<36xf32, #tpu.memory_space<smem>>
    %196 = vector.broadcast %195 : f32 to vector<7x8x128xf32>
    %197 = arith.mulf %20, %196 : vector<7x8x128xf32>
    %198 = arith.addf %194, %197 : vector<7x8x128xf32>
    %c12 = arith.constant 12 : index
    %199 = memref.load %arg2[%c12] : memref<36xf32, #tpu.memory_space<smem>>
    %200 = vector.broadcast %199 : f32 to vector<7x8x128xf32>
    %201 = arith.mulf %22, %200 : vector<7x8x128xf32>
    %202 = arith.addf %198, %201 : vector<7x8x128xf32>
    %c13 = arith.constant 13 : index
    %203 = memref.load %arg2[%c13] : memref<36xf32, #tpu.memory_space<smem>>
    %204 = vector.broadcast %203 : f32 to vector<7x8x128xf32>
    %205 = arith.mulf %23, %204 : vector<7x8x128xf32>
    %206 = arith.addf %202, %205 : vector<7x8x128xf32>
    %c14 = arith.constant 14 : index
    %207 = memref.load %arg2[%c14] : memref<36xf32, #tpu.memory_space<smem>>
    %208 = vector.broadcast %207 : f32 to vector<7x8x128xf32>
    %209 = arith.mulf %24, %208 : vector<7x8x128xf32>
    %210 = arith.addf %206, %209 : vector<7x8x128xf32>
    %c15 = arith.constant 15 : index
    %211 = memref.load %arg2[%c15] : memref<36xf32, #tpu.memory_space<smem>>
    %212 = vector.broadcast %211 : f32 to vector<7x8x128xf32>
    %213 = arith.mulf %26, %212 : vector<7x8x128xf32>
    %214 = arith.addf %210, %213 : vector<7x8x128xf32>
    %c16 = arith.constant 16 : index
    %215 = memref.load %arg2[%c16] : memref<36xf32, #tpu.memory_space<smem>>
    %216 = vector.broadcast %215 : f32 to vector<7x8x128xf32>
    %217 = arith.mulf %27, %216 : vector<7x8x128xf32>
    %218 = arith.addf %214, %217 : vector<7x8x128xf32>
    %c17 = arith.constant 17 : index
    %219 = memref.load %arg2[%c17] : memref<36xf32, #tpu.memory_space<smem>>
    %220 = vector.broadcast %219 : f32 to vector<7x8x128xf32>
    %221 = arith.mulf %28, %220 : vector<7x8x128xf32>
    %222 = arith.addf %218, %221 : vector<7x8x128xf32>
    %c9_67 = arith.constant 9 : index
    %223 = memref.load %arg2[%c9_67] : memref<36xf32, #tpu.memory_space<smem>>
    %224 = vector.broadcast %223 : f32 to vector<7x8x128xf32>
    %225 = arith.mulf %19, %224 : vector<7x8x128xf32>
    %c10_68 = arith.constant 10 : index
    %226 = memref.load %arg2[%c10_68] : memref<36xf32, #tpu.memory_space<smem>>
    %227 = vector.broadcast %226 : f32 to vector<7x8x128xf32>
    %228 = arith.mulf %20, %227 : vector<7x8x128xf32>
    %229 = arith.addf %225, %228 : vector<7x8x128xf32>
    %c11_69 = arith.constant 11 : index
    %230 = memref.load %arg2[%c11_69] : memref<36xf32, #tpu.memory_space<smem>>
    %231 = vector.broadcast %230 : f32 to vector<7x8x128xf32>
    %232 = arith.mulf %21, %231 : vector<7x8x128xf32>
    %233 = arith.addf %229, %232 : vector<7x8x128xf32>
    %c12_70 = arith.constant 12 : index
    %234 = memref.load %arg2[%c12_70] : memref<36xf32, #tpu.memory_space<smem>>
    %235 = vector.broadcast %234 : f32 to vector<7x8x128xf32>
    %236 = arith.mulf %23, %235 : vector<7x8x128xf32>
    %237 = arith.addf %233, %236 : vector<7x8x128xf32>
    %c13_71 = arith.constant 13 : index
    %238 = memref.load %arg2[%c13_71] : memref<36xf32, #tpu.memory_space<smem>>
    %239 = vector.broadcast %238 : f32 to vector<7x8x128xf32>
    %240 = arith.mulf %24, %239 : vector<7x8x128xf32>
    %241 = arith.addf %237, %240 : vector<7x8x128xf32>
    %c14_72 = arith.constant 14 : index
    %242 = memref.load %arg2[%c14_72] : memref<36xf32, #tpu.memory_space<smem>>
    %243 = vector.broadcast %242 : f32 to vector<7x8x128xf32>
    %244 = arith.mulf %25, %243 : vector<7x8x128xf32>
    %245 = arith.addf %241, %244 : vector<7x8x128xf32>
    %c15_73 = arith.constant 15 : index
    %246 = memref.load %arg2[%c15_73] : memref<36xf32, #tpu.memory_space<smem>>
    %247 = vector.broadcast %246 : f32 to vector<7x8x128xf32>
    %248 = arith.mulf %27, %247 : vector<7x8x128xf32>
    %249 = arith.addf %245, %248 : vector<7x8x128xf32>
    %c16_74 = arith.constant 16 : index
    %250 = memref.load %arg2[%c16_74] : memref<36xf32, #tpu.memory_space<smem>>
    %251 = vector.broadcast %250 : f32 to vector<7x8x128xf32>
    %252 = arith.mulf %28, %251 : vector<7x8x128xf32>
    %253 = arith.addf %249, %252 : vector<7x8x128xf32>
    %c17_75 = arith.constant 17 : index
    %254 = memref.load %arg2[%c17_75] : memref<36xf32, #tpu.memory_space<smem>>
    %255 = vector.broadcast %254 : f32 to vector<7x8x128xf32>
    %256 = arith.mulf %29, %255 : vector<7x8x128xf32>
    %257 = arith.addf %253, %256 : vector<7x8x128xf32>
    %258 = arith.maximumf %222, %257 : vector<7x8x128xf32>
    %c9_76 = arith.constant 9 : index
    %259 = memref.load %arg2[%c9_76] : memref<36xf32, #tpu.memory_space<smem>>
    %260 = vector.broadcast %259 : f32 to vector<7x8x128xf32>
    %261 = arith.mulf %22, %260 : vector<7x8x128xf32>
    %c10_77 = arith.constant 10 : index
    %262 = memref.load %arg2[%c10_77] : memref<36xf32, #tpu.memory_space<smem>>
    %263 = vector.broadcast %262 : f32 to vector<7x8x128xf32>
    %264 = arith.mulf %23, %263 : vector<7x8x128xf32>
    %265 = arith.addf %261, %264 : vector<7x8x128xf32>
    %c11_78 = arith.constant 11 : index
    %266 = memref.load %arg2[%c11_78] : memref<36xf32, #tpu.memory_space<smem>>
    %267 = vector.broadcast %266 : f32 to vector<7x8x128xf32>
    %268 = arith.mulf %24, %267 : vector<7x8x128xf32>
    %269 = arith.addf %265, %268 : vector<7x8x128xf32>
    %c12_79 = arith.constant 12 : index
    %270 = memref.load %arg2[%c12_79] : memref<36xf32, #tpu.memory_space<smem>>
    %271 = vector.broadcast %270 : f32 to vector<7x8x128xf32>
    %272 = arith.mulf %26, %271 : vector<7x8x128xf32>
    %273 = arith.addf %269, %272 : vector<7x8x128xf32>
    %c13_80 = arith.constant 13 : index
    %274 = memref.load %arg2[%c13_80] : memref<36xf32, #tpu.memory_space<smem>>
    %275 = vector.broadcast %274 : f32 to vector<7x8x128xf32>
    %276 = arith.mulf %27, %275 : vector<7x8x128xf32>
    %277 = arith.addf %273, %276 : vector<7x8x128xf32>
    %c14_81 = arith.constant 14 : index
    %278 = memref.load %arg2[%c14_81] : memref<36xf32, #tpu.memory_space<smem>>
    %279 = vector.broadcast %278 : f32 to vector<7x8x128xf32>
    %280 = arith.mulf %28, %279 : vector<7x8x128xf32>
    %281 = arith.addf %277, %280 : vector<7x8x128xf32>
    %c15_82 = arith.constant 15 : index
    %282 = memref.load %arg2[%c15_82] : memref<36xf32, #tpu.memory_space<smem>>
    %283 = vector.broadcast %282 : f32 to vector<7x8x128xf32>
    %284 = arith.mulf %30, %283 : vector<7x8x128xf32>
    %285 = arith.addf %281, %284 : vector<7x8x128xf32>
    %c16_83 = arith.constant 16 : index
    %286 = memref.load %arg2[%c16_83] : memref<36xf32, #tpu.memory_space<smem>>
    %287 = vector.broadcast %286 : f32 to vector<7x8x128xf32>
    %288 = arith.mulf %31, %287 : vector<7x8x128xf32>
    %289 = arith.addf %285, %288 : vector<7x8x128xf32>
    %c17_84 = arith.constant 17 : index
    %290 = memref.load %arg2[%c17_84] : memref<36xf32, #tpu.memory_space<smem>>
    %291 = vector.broadcast %290 : f32 to vector<7x8x128xf32>
    %292 = arith.mulf %32, %291 : vector<7x8x128xf32>
    %293 = arith.addf %289, %292 : vector<7x8x128xf32>
    %294 = arith.maximumf %258, %293 : vector<7x8x128xf32>
    %c9_85 = arith.constant 9 : index
    %295 = memref.load %arg2[%c9_85] : memref<36xf32, #tpu.memory_space<smem>>
    %296 = vector.broadcast %295 : f32 to vector<7x8x128xf32>
    %297 = arith.mulf %23, %296 : vector<7x8x128xf32>
    %c10_86 = arith.constant 10 : index
    %298 = memref.load %arg2[%c10_86] : memref<36xf32, #tpu.memory_space<smem>>
    %299 = vector.broadcast %298 : f32 to vector<7x8x128xf32>
    %300 = arith.mulf %24, %299 : vector<7x8x128xf32>
    %301 = arith.addf %297, %300 : vector<7x8x128xf32>
    %c11_87 = arith.constant 11 : index
    %302 = memref.load %arg2[%c11_87] : memref<36xf32, #tpu.memory_space<smem>>
    %303 = vector.broadcast %302 : f32 to vector<7x8x128xf32>
    %304 = arith.mulf %25, %303 : vector<7x8x128xf32>
    %305 = arith.addf %301, %304 : vector<7x8x128xf32>
    %c12_88 = arith.constant 12 : index
    %306 = memref.load %arg2[%c12_88] : memref<36xf32, #tpu.memory_space<smem>>
    %307 = vector.broadcast %306 : f32 to vector<7x8x128xf32>
    %308 = arith.mulf %27, %307 : vector<7x8x128xf32>
    %309 = arith.addf %305, %308 : vector<7x8x128xf32>
    %c13_89 = arith.constant 13 : index
    %310 = memref.load %arg2[%c13_89] : memref<36xf32, #tpu.memory_space<smem>>
    %311 = vector.broadcast %310 : f32 to vector<7x8x128xf32>
    %312 = arith.mulf %28, %311 : vector<7x8x128xf32>
    %313 = arith.addf %309, %312 : vector<7x8x128xf32>
    %c14_90 = arith.constant 14 : index
    %314 = memref.load %arg2[%c14_90] : memref<36xf32, #tpu.memory_space<smem>>
    %315 = vector.broadcast %314 : f32 to vector<7x8x128xf32>
    %316 = arith.mulf %29, %315 : vector<7x8x128xf32>
    %317 = arith.addf %313, %316 : vector<7x8x128xf32>
    %c15_91 = arith.constant 15 : index
    %318 = memref.load %arg2[%c15_91] : memref<36xf32, #tpu.memory_space<smem>>
    %319 = vector.broadcast %318 : f32 to vector<7x8x128xf32>
    %320 = arith.mulf %31, %319 : vector<7x8x128xf32>
    %321 = arith.addf %317, %320 : vector<7x8x128xf32>
    %c16_92 = arith.constant 16 : index
    %322 = memref.load %arg2[%c16_92] : memref<36xf32, #tpu.memory_space<smem>>
    %323 = vector.broadcast %322 : f32 to vector<7x8x128xf32>
    %324 = arith.mulf %32, %323 : vector<7x8x128xf32>
    %325 = arith.addf %321, %324 : vector<7x8x128xf32>
    %c17_93 = arith.constant 17 : index
    %326 = memref.load %arg2[%c17_93] : memref<36xf32, #tpu.memory_space<smem>>
    %327 = vector.broadcast %326 : f32 to vector<7x8x128xf32>
    %328 = arith.mulf %33, %327 : vector<7x8x128xf32>
    %329 = arith.addf %325, %328 : vector<7x8x128xf32>
    %330 = arith.maximumf %294, %329 : vector<7x8x128xf32>
    %c1_94 = arith.constant 1 : index
    %331 = memref.load %arg3[%c1_94] : memref<4xf32, #tpu.memory_space<smem>>
    %332 = vector.broadcast %331 : f32 to vector<7x8x128xf32>
    %333 = arith.addf %330, %332 : vector<7x8x128xf32>
    %cst_95 = arith.constant 0.000000e+00 : f32
    %334 = vector.broadcast %cst_95 : f32 to vector<7x8x128xf32>
    %335 = arith.maximumf %333, %334 : vector<7x8x128xf32>
    %336 = vector.shape_cast %335 : vector<7x8x128xf32> to vector<56x128xf32>
    %337 = vector.extract_strided_slice %0 {offsets = [1, 0, 0], sizes = [1, 32, 56], strides = [1, 1, 1]} : vector<4x32x56xf32> to vector<1x32x56xf32>
    %338 = vector.shape_cast %337 : vector<1x32x56xf32> to vector<32x56xf32>
    %cst_96 = arith.constant dense<0.000000e+00> : vector<32x128xf32>
    %339 = tpu.matmul %338, %336, %cst_96 {dimension_numbers = #tpu.dot_dimension_numbers<[1], [0], [0], [1], [0, 0, 1, 1], [], []>} : vector<32x56xf32>, vector<56x128xf32>, vector<32x128xf32> -> vector<32x128xf32>
    %340 = arith.addf %187, %339 : vector<32x128xf32>
    %c18 = arith.constant 18 : index
    %341 = memref.load %arg2[%c18] : memref<36xf32, #tpu.memory_space<smem>>
    %342 = vector.broadcast %341 : f32 to vector<7x8x128xf32>
    %343 = arith.mulf %18, %342 : vector<7x8x128xf32>
    %c19 = arith.constant 19 : index
    %344 = memref.load %arg2[%c19] : memref<36xf32, #tpu.memory_space<smem>>
    %345 = vector.broadcast %344 : f32 to vector<7x8x128xf32>
    %346 = arith.mulf %19, %345 : vector<7x8x128xf32>
    %347 = arith.addf %343, %346 : vector<7x8x128xf32>
    %c20 = arith.constant 20 : index
    %348 = memref.load %arg2[%c20] : memref<36xf32, #tpu.memory_space<smem>>
    %349 = vector.broadcast %348 : f32 to vector<7x8x128xf32>
    %350 = arith.mulf %20, %349 : vector<7x8x128xf32>
    %351 = arith.addf %347, %350 : vector<7x8x128xf32>
    %c21 = arith.constant 21 : index
    %352 = memref.load %arg2[%c21] : memref<36xf32, #tpu.memory_space<smem>>
    %353 = vector.broadcast %352 : f32 to vector<7x8x128xf32>
    %354 = arith.mulf %22, %353 : vector<7x8x128xf32>
    %355 = arith.addf %351, %354 : vector<7x8x128xf32>
    %c22 = arith.constant 22 : index
    %356 = memref.load %arg2[%c22] : memref<36xf32, #tpu.memory_space<smem>>
    %357 = vector.broadcast %356 : f32 to vector<7x8x128xf32>
    %358 = arith.mulf %23, %357 : vector<7x8x128xf32>
    %359 = arith.addf %355, %358 : vector<7x8x128xf32>
    %c23 = arith.constant 23 : index
    %360 = memref.load %arg2[%c23] : memref<36xf32, #tpu.memory_space<smem>>
    %361 = vector.broadcast %360 : f32 to vector<7x8x128xf32>
    %362 = arith.mulf %24, %361 : vector<7x8x128xf32>
    %363 = arith.addf %359, %362 : vector<7x8x128xf32>
    %c24 = arith.constant 24 : index
    %364 = memref.load %arg2[%c24] : memref<36xf32, #tpu.memory_space<smem>>
    %365 = vector.broadcast %364 : f32 to vector<7x8x128xf32>
    %366 = arith.mulf %26, %365 : vector<7x8x128xf32>
    %367 = arith.addf %363, %366 : vector<7x8x128xf32>
    %c25 = arith.constant 25 : index
    %368 = memref.load %arg2[%c25] : memref<36xf32, #tpu.memory_space<smem>>
    %369 = vector.broadcast %368 : f32 to vector<7x8x128xf32>
    %370 = arith.mulf %27, %369 : vector<7x8x128xf32>
    %371 = arith.addf %367, %370 : vector<7x8x128xf32>
    %c26 = arith.constant 26 : index
    %372 = memref.load %arg2[%c26] : memref<36xf32, #tpu.memory_space<smem>>
    %373 = vector.broadcast %372 : f32 to vector<7x8x128xf32>
    %374 = arith.mulf %28, %373 : vector<7x8x128xf32>
    %375 = arith.addf %371, %374 : vector<7x8x128xf32>
    %c18_97 = arith.constant 18 : index
    %376 = memref.load %arg2[%c18_97] : memref<36xf32, #tpu.memory_space<smem>>
    %377 = vector.broadcast %376 : f32 to vector<7x8x128xf32>
    %378 = arith.mulf %19, %377 : vector<7x8x128xf32>
    %c19_98 = arith.constant 19 : index
    %379 = memref.load %arg2[%c19_98] : memref<36xf32, #tpu.memory_space<smem>>
    %380 = vector.broadcast %379 : f32 to vector<7x8x128xf32>
    %381 = arith.mulf %20, %380 : vector<7x8x128xf32>
    %382 = arith.addf %378, %381 : vector<7x8x128xf32>
    %c20_99 = arith.constant 20 : index
    %383 = memref.load %arg2[%c20_99] : memref<36xf32, #tpu.memory_space<smem>>
    %384 = vector.broadcast %383 : f32 to vector<7x8x128xf32>
    %385 = arith.mulf %21, %384 : vector<7x8x128xf32>
    %386 = arith.addf %382, %385 : vector<7x8x128xf32>
    %c21_100 = arith.constant 21 : index
    %387 = memref.load %arg2[%c21_100] : memref<36xf32, #tpu.memory_space<smem>>
    %388 = vector.broadcast %387 : f32 to vector<7x8x128xf32>
    %389 = arith.mulf %23, %388 : vector<7x8x128xf32>
    %390 = arith.addf %386, %389 : vector<7x8x128xf32>
    %c22_101 = arith.constant 22 : index
    %391 = memref.load %arg2[%c22_101] : memref<36xf32, #tpu.memory_space<smem>>
    %392 = vector.broadcast %391 : f32 to vector<7x8x128xf32>
    %393 = arith.mulf %24, %392 : vector<7x8x128xf32>
    %394 = arith.addf %390, %393 : vector<7x8x128xf32>
    %c23_102 = arith.constant 23 : index
    %395 = memref.load %arg2[%c23_102] : memref<36xf32, #tpu.memory_space<smem>>
    %396 = vector.broadcast %395 : f32 to vector<7x8x128xf32>
    %397 = arith.mulf %25, %396 : vector<7x8x128xf32>
    %398 = arith.addf %394, %397 : vector<7x8x128xf32>
    %c24_103 = arith.constant 24 : index
    %399 = memref.load %arg2[%c24_103] : memref<36xf32, #tpu.memory_space<smem>>
    %400 = vector.broadcast %399 : f32 to vector<7x8x128xf32>
    %401 = arith.mulf %27, %400 : vector<7x8x128xf32>
    %402 = arith.addf %398, %401 : vector<7x8x128xf32>
    %c25_104 = arith.constant 25 : index
    %403 = memref.load %arg2[%c25_104] : memref<36xf32, #tpu.memory_space<smem>>
    %404 = vector.broadcast %403 : f32 to vector<7x8x128xf32>
    %405 = arith.mulf %28, %404 : vector<7x8x128xf32>
    %406 = arith.addf %402, %405 : vector<7x8x128xf32>
    %c26_105 = arith.constant 26 : index
    %407 = memref.load %arg2[%c26_105] : memref<36xf32, #tpu.memory_space<smem>>
    %408 = vector.broadcast %407 : f32 to vector<7x8x128xf32>
    %409 = arith.mulf %29, %408 : vector<7x8x128xf32>
    %410 = arith.addf %406, %409 : vector<7x8x128xf32>
    %411 = arith.maximumf %375, %410 : vector<7x8x128xf32>
    %c18_106 = arith.constant 18 : index
    %412 = memref.load %arg2[%c18_106] : memref<36xf32, #tpu.memory_space<smem>>
    %413 = vector.broadcast %412 : f32 to vector<7x8x128xf32>
    %414 = arith.mulf %22, %413 : vector<7x8x128xf32>
    %c19_107 = arith.constant 19 : index
    %415 = memref.load %arg2[%c19_107] : memref<36xf32, #tpu.memory_space<smem>>
    %416 = vector.broadcast %415 : f32 to vector<7x8x128xf32>
    %417 = arith.mulf %23, %416 : vector<7x8x128xf32>
    %418 = arith.addf %414, %417 : vector<7x8x128xf32>
    %c20_108 = arith.constant 20 : index
    %419 = memref.load %arg2[%c20_108] : memref<36xf32, #tpu.memory_space<smem>>
    %420 = vector.broadcast %419 : f32 to vector<7x8x128xf32>
    %421 = arith.mulf %24, %420 : vector<7x8x128xf32>
    %422 = arith.addf %418, %421 : vector<7x8x128xf32>
    %c21_109 = arith.constant 21 : index
    %423 = memref.load %arg2[%c21_109] : memref<36xf32, #tpu.memory_space<smem>>
    %424 = vector.broadcast %423 : f32 to vector<7x8x128xf32>
    %425 = arith.mulf %26, %424 : vector<7x8x128xf32>
    %426 = arith.addf %422, %425 : vector<7x8x128xf32>
    %c22_110 = arith.constant 22 : index
    %427 = memref.load %arg2[%c22_110] : memref<36xf32, #tpu.memory_space<smem>>
    %428 = vector.broadcast %427 : f32 to vector<7x8x128xf32>
    %429 = arith.mulf %27, %428 : vector<7x8x128xf32>
    %430 = arith.addf %426, %429 : vector<7x8x128xf32>
    %c23_111 = arith.constant 23 : index
    %431 = memref.load %arg2[%c23_111] : memref<36xf32, #tpu.memory_space<smem>>
    %432 = vector.broadcast %431 : f32 to vector<7x8x128xf32>
    %433 = arith.mulf %28, %432 : vector<7x8x128xf32>
    %434 = arith.addf %430, %433 : vector<7x8x128xf32>
    %c24_112 = arith.constant 24 : index
    %435 = memref.load %arg2[%c24_112] : memref<36xf32, #tpu.memory_space<smem>>
    %436 = vector.broadcast %435 : f32 to vector<7x8x128xf32>
    %437 = arith.mulf %30, %436 : vector<7x8x128xf32>
    %438 = arith.addf %434, %437 : vector<7x8x128xf32>
    %c25_113 = arith.constant 25 : index
    %439 = memref.load %arg2[%c25_113] : memref<36xf32, #tpu.memory_space<smem>>
    %440 = vector.broadcast %439 : f32 to vector<7x8x128xf32>
    %441 = arith.mulf %31, %440 : vector<7x8x128xf32>
    %442 = arith.addf %438, %441 : vector<7x8x128xf32>
    %c26_114 = arith.constant 26 : index
    %443 = memref.load %arg2[%c26_114] : memref<36xf32, #tpu.memory_space<smem>>
    %444 = vector.broadcast %443 : f32 to vector<7x8x128xf32>
    %445 = arith.mulf %32, %444 : vector<7x8x128xf32>
    %446 = arith.addf %442, %445 : vector<7x8x128xf32>
    %447 = arith.maximumf %411, %446 : vector<7x8x128xf32>
    %c18_115 = arith.constant 18 : index
    %448 = memref.load %arg2[%c18_115] : memref<36xf32, #tpu.memory_space<smem>>
    %449 = vector.broadcast %448 : f32 to vector<7x8x128xf32>
    %450 = arith.mulf %23, %449 : vector<7x8x128xf32>
    %c19_116 = arith.constant 19 : index
    %451 = memref.load %arg2[%c19_116] : memref<36xf32, #tpu.memory_space<smem>>
    %452 = vector.broadcast %451 : f32 to vector<7x8x128xf32>
    %453 = arith.mulf %24, %452 : vector<7x8x128xf32>
    %454 = arith.addf %450, %453 : vector<7x8x128xf32>
    %c20_117 = arith.constant 20 : index
    %455 = memref.load %arg2[%c20_117] : memref<36xf32, #tpu.memory_space<smem>>
    %456 = vector.broadcast %455 : f32 to vector<7x8x128xf32>
    %457 = arith.mulf %25, %456 : vector<7x8x128xf32>
    %458 = arith.addf %454, %457 : vector<7x8x128xf32>
    %c21_118 = arith.constant 21 : index
    %459 = memref.load %arg2[%c21_118] : memref<36xf32, #tpu.memory_space<smem>>
    %460 = vector.broadcast %459 : f32 to vector<7x8x128xf32>
    %461 = arith.mulf %27, %460 : vector<7x8x128xf32>
    %462 = arith.addf %458, %461 : vector<7x8x128xf32>
    %c22_119 = arith.constant 22 : index
    %463 = memref.load %arg2[%c22_119] : memref<36xf32, #tpu.memory_space<smem>>
    %464 = vector.broadcast %463 : f32 to vector<7x8x128xf32>
    %465 = arith.mulf %28, %464 : vector<7x8x128xf32>
    %466 = arith.addf %462, %465 : vector<7x8x128xf32>
    %c23_120 = arith.constant 23 : index
    %467 = memref.load %arg2[%c23_120] : memref<36xf32, #tpu.memory_space<smem>>
    %468 = vector.broadcast %467 : f32 to vector<7x8x128xf32>
    %469 = arith.mulf %29, %468 : vector<7x8x128xf32>
    %470 = arith.addf %466, %469 : vector<7x8x128xf32>
    %c24_121 = arith.constant 24 : index
    %471 = memref.load %arg2[%c24_121] : memref<36xf32, #tpu.memory_space<smem>>
    %472 = vector.broadcast %471 : f32 to vector<7x8x128xf32>
    %473 = arith.mulf %31, %472 : vector<7x8x128xf32>
    %474 = arith.addf %470, %473 : vector<7x8x128xf32>
    %c25_122 = arith.constant 25 : index
    %475 = memref.load %arg2[%c25_122] : memref<36xf32, #tpu.memory_space<smem>>
    %476 = vector.broadcast %475 : f32 to vector<7x8x128xf32>
    %477 = arith.mulf %32, %476 : vector<7x8x128xf32>
    %478 = arith.addf %474, %477 : vector<7x8x128xf32>
    %c26_123 = arith.constant 26 : index
    %479 = memref.load %arg2[%c26_123] : memref<36xf32, #tpu.memory_space<smem>>
    %480 = vector.broadcast %479 : f32 to vector<7x8x128xf32>
    %481 = arith.mulf %33, %480 : vector<7x8x128xf32>
    %482 = arith.addf %478, %481 : vector<7x8x128xf32>
    %483 = arith.maximumf %447, %482 : vector<7x8x128xf32>
    %c2_124 = arith.constant 2 : index
    %484 = memref.load %arg3[%c2_124] : memref<4xf32, #tpu.memory_space<smem>>
    %485 = vector.broadcast %484 : f32 to vector<7x8x128xf32>
    %486 = arith.addf %483, %485 : vector<7x8x128xf32>
    %cst_125 = arith.constant 0.000000e+00 : f32
    %487 = vector.broadcast %cst_125 : f32 to vector<7x8x128xf32>
    %488 = arith.maximumf %486, %487 : vector<7x8x128xf32>
    %489 = vector.shape_cast %488 : vector<7x8x128xf32> to vector<56x128xf32>
    %490 = vector.extract_strided_slice %0 {offsets = [2, 0, 0], sizes = [1, 32, 56], strides = [1, 1, 1]} : vector<4x32x56xf32> to vector<1x32x56xf32>
    %491 = vector.shape_cast %490 : vector<1x32x56xf32> to vector<32x56xf32>
    %cst_126 = arith.constant dense<0.000000e+00> : vector<32x128xf32>
    %492 = tpu.matmul %491, %489, %cst_126 {dimension_numbers = #tpu.dot_dimension_numbers<[1], [0], [0], [1], [0, 0, 1, 1], [], []>} : vector<32x56xf32>, vector<56x128xf32>, vector<32x128xf32> -> vector<32x128xf32>
    %493 = arith.addf %340, %492 : vector<32x128xf32>
    %c27 = arith.constant 27 : index
    %494 = memref.load %arg2[%c27] : memref<36xf32, #tpu.memory_space<smem>>
    %495 = vector.broadcast %494 : f32 to vector<7x8x128xf32>
    %496 = arith.mulf %18, %495 : vector<7x8x128xf32>
    %c28 = arith.constant 28 : index
    %497 = memref.load %arg2[%c28] : memref<36xf32, #tpu.memory_space<smem>>
    %498 = vector.broadcast %497 : f32 to vector<7x8x128xf32>
    %499 = arith.mulf %19, %498 : vector<7x8x128xf32>
    %500 = arith.addf %496, %499 : vector<7x8x128xf32>
    %c29 = arith.constant 29 : index
    %501 = memref.load %arg2[%c29] : memref<36xf32, #tpu.memory_space<smem>>
    %502 = vector.broadcast %501 : f32 to vector<7x8x128xf32>
    %503 = arith.mulf %20, %502 : vector<7x8x128xf32>
    %504 = arith.addf %500, %503 : vector<7x8x128xf32>
    %c30 = arith.constant 30 : index
    %505 = memref.load %arg2[%c30] : memref<36xf32, #tpu.memory_space<smem>>
    %506 = vector.broadcast %505 : f32 to vector<7x8x128xf32>
    %507 = arith.mulf %22, %506 : vector<7x8x128xf32>
    %508 = arith.addf %504, %507 : vector<7x8x128xf32>
    %c31 = arith.constant 31 : index
    %509 = memref.load %arg2[%c31] : memref<36xf32, #tpu.memory_space<smem>>
    %510 = vector.broadcast %509 : f32 to vector<7x8x128xf32>
    %511 = arith.mulf %23, %510 : vector<7x8x128xf32>
    %512 = arith.addf %508, %511 : vector<7x8x128xf32>
    %c32 = arith.constant 32 : index
    %513 = memref.load %arg2[%c32] : memref<36xf32, #tpu.memory_space<smem>>
    %514 = vector.broadcast %513 : f32 to vector<7x8x128xf32>
    %515 = arith.mulf %24, %514 : vector<7x8x128xf32>
    %516 = arith.addf %512, %515 : vector<7x8x128xf32>
    %c33 = arith.constant 33 : index
    %517 = memref.load %arg2[%c33] : memref<36xf32, #tpu.memory_space<smem>>
    %518 = vector.broadcast %517 : f32 to vector<7x8x128xf32>
    %519 = arith.mulf %26, %518 : vector<7x8x128xf32>
    %520 = arith.addf %516, %519 : vector<7x8x128xf32>
    %c34 = arith.constant 34 : index
    %521 = memref.load %arg2[%c34] : memref<36xf32, #tpu.memory_space<smem>>
    %522 = vector.broadcast %521 : f32 to vector<7x8x128xf32>
    %523 = arith.mulf %27, %522 : vector<7x8x128xf32>
    %524 = arith.addf %520, %523 : vector<7x8x128xf32>
    %c35 = arith.constant 35 : index
    %525 = memref.load %arg2[%c35] : memref<36xf32, #tpu.memory_space<smem>>
    %526 = vector.broadcast %525 : f32 to vector<7x8x128xf32>
    %527 = arith.mulf %28, %526 : vector<7x8x128xf32>
    %528 = arith.addf %524, %527 : vector<7x8x128xf32>
    %c27_127 = arith.constant 27 : index
    %529 = memref.load %arg2[%c27_127] : memref<36xf32, #tpu.memory_space<smem>>
    %530 = vector.broadcast %529 : f32 to vector<7x8x128xf32>
    %531 = arith.mulf %19, %530 : vector<7x8x128xf32>
    %c28_128 = arith.constant 28 : index
    %532 = memref.load %arg2[%c28_128] : memref<36xf32, #tpu.memory_space<smem>>
    %533 = vector.broadcast %532 : f32 to vector<7x8x128xf32>
    %534 = arith.mulf %20, %533 : vector<7x8x128xf32>
    %535 = arith.addf %531, %534 : vector<7x8x128xf32>
    %c29_129 = arith.constant 29 : index
    %536 = memref.load %arg2[%c29_129] : memref<36xf32, #tpu.memory_space<smem>>
    %537 = vector.broadcast %536 : f32 to vector<7x8x128xf32>
    %538 = arith.mulf %21, %537 : vector<7x8x128xf32>
    %539 = arith.addf %535, %538 : vector<7x8x128xf32>
    %c30_130 = arith.constant 30 : index
    %540 = memref.load %arg2[%c30_130] : memref<36xf32, #tpu.memory_space<smem>>
    %541 = vector.broadcast %540 : f32 to vector<7x8x128xf32>
    %542 = arith.mulf %23, %541 : vector<7x8x128xf32>
    %543 = arith.addf %539, %542 : vector<7x8x128xf32>
    %c31_131 = arith.constant 31 : index
    %544 = memref.load %arg2[%c31_131] : memref<36xf32, #tpu.memory_space<smem>>
    %545 = vector.broadcast %544 : f32 to vector<7x8x128xf32>
    %546 = arith.mulf %24, %545 : vector<7x8x128xf32>
    %547 = arith.addf %543, %546 : vector<7x8x128xf32>
    %c32_132 = arith.constant 32 : index
    %548 = memref.load %arg2[%c32_132] : memref<36xf32, #tpu.memory_space<smem>>
    %549 = vector.broadcast %548 : f32 to vector<7x8x128xf32>
    %550 = arith.mulf %25, %549 : vector<7x8x128xf32>
    %551 = arith.addf %547, %550 : vector<7x8x128xf32>
    %c33_133 = arith.constant 33 : index
    %552 = memref.load %arg2[%c33_133] : memref<36xf32, #tpu.memory_space<smem>>
    %553 = vector.broadcast %552 : f32 to vector<7x8x128xf32>
    %554 = arith.mulf %27, %553 : vector<7x8x128xf32>
    %555 = arith.addf %551, %554 : vector<7x8x128xf32>
    %c34_134 = arith.constant 34 : index
    %556 = memref.load %arg2[%c34_134] : memref<36xf32, #tpu.memory_space<smem>>
    %557 = vector.broadcast %556 : f32 to vector<7x8x128xf32>
    %558 = arith.mulf %28, %557 : vector<7x8x128xf32>
    %559 = arith.addf %555, %558 : vector<7x8x128xf32>
    %c35_135 = arith.constant 35 : index
    %560 = memref.load %arg2[%c35_135] : memref<36xf32, #tpu.memory_space<smem>>
    %561 = vector.broadcast %560 : f32 to vector<7x8x128xf32>
    %562 = arith.mulf %29, %561 : vector<7x8x128xf32>
    %563 = arith.addf %559, %562 : vector<7x8x128xf32>
    %564 = arith.maximumf %528, %563 : vector<7x8x128xf32>
    %c27_136 = arith.constant 27 : index
    %565 = memref.load %arg2[%c27_136] : memref<36xf32, #tpu.memory_space<smem>>
    %566 = vector.broadcast %565 : f32 to vector<7x8x128xf32>
    %567 = arith.mulf %22, %566 : vector<7x8x128xf32>
    %c28_137 = arith.constant 28 : index
    %568 = memref.load %arg2[%c28_137] : memref<36xf32, #tpu.memory_space<smem>>
    %569 = vector.broadcast %568 : f32 to vector<7x8x128xf32>
    %570 = arith.mulf %23, %569 : vector<7x8x128xf32>
    %571 = arith.addf %567, %570 : vector<7x8x128xf32>
    %c29_138 = arith.constant 29 : index
    %572 = memref.load %arg2[%c29_138] : memref<36xf32, #tpu.memory_space<smem>>
    %573 = vector.broadcast %572 : f32 to vector<7x8x128xf32>
    %574 = arith.mulf %24, %573 : vector<7x8x128xf32>
    %575 = arith.addf %571, %574 : vector<7x8x128xf32>
    %c30_139 = arith.constant 30 : index
    %576 = memref.load %arg2[%c30_139] : memref<36xf32, #tpu.memory_space<smem>>
    %577 = vector.broadcast %576 : f32 to vector<7x8x128xf32>
    %578 = arith.mulf %26, %577 : vector<7x8x128xf32>
    %579 = arith.addf %575, %578 : vector<7x8x128xf32>
    %c31_140 = arith.constant 31 : index
    %580 = memref.load %arg2[%c31_140] : memref<36xf32, #tpu.memory_space<smem>>
    %581 = vector.broadcast %580 : f32 to vector<7x8x128xf32>
    %582 = arith.mulf %27, %581 : vector<7x8x128xf32>
    %583 = arith.addf %579, %582 : vector<7x8x128xf32>
    %c32_141 = arith.constant 32 : index
    %584 = memref.load %arg2[%c32_141] : memref<36xf32, #tpu.memory_space<smem>>
    %585 = vector.broadcast %584 : f32 to vector<7x8x128xf32>
    %586 = arith.mulf %28, %585 : vector<7x8x128xf32>
    %587 = arith.addf %583, %586 : vector<7x8x128xf32>
    %c33_142 = arith.constant 33 : index
    %588 = memref.load %arg2[%c33_142] : memref<36xf32, #tpu.memory_space<smem>>
    %589 = vector.broadcast %588 : f32 to vector<7x8x128xf32>
    %590 = arith.mulf %30, %589 : vector<7x8x128xf32>
    %591 = arith.addf %587, %590 : vector<7x8x128xf32>
    %c34_143 = arith.constant 34 : index
    %592 = memref.load %arg2[%c34_143] : memref<36xf32, #tpu.memory_space<smem>>
    %593 = vector.broadcast %592 : f32 to vector<7x8x128xf32>
    %594 = arith.mulf %31, %593 : vector<7x8x128xf32>
    %595 = arith.addf %591, %594 : vector<7x8x128xf32>
    %c35_144 = arith.constant 35 : index
    %596 = memref.load %arg2[%c35_144] : memref<36xf32, #tpu.memory_space<smem>>
    %597 = vector.broadcast %596 : f32 to vector<7x8x128xf32>
    %598 = arith.mulf %32, %597 : vector<7x8x128xf32>
    %599 = arith.addf %595, %598 : vector<7x8x128xf32>
    %600 = arith.maximumf %564, %599 : vector<7x8x128xf32>
    %c27_145 = arith.constant 27 : index
    %601 = memref.load %arg2[%c27_145] : memref<36xf32, #tpu.memory_space<smem>>
    %602 = vector.broadcast %601 : f32 to vector<7x8x128xf32>
    %603 = arith.mulf %23, %602 : vector<7x8x128xf32>
    %c28_146 = arith.constant 28 : index
    %604 = memref.load %arg2[%c28_146] : memref<36xf32, #tpu.memory_space<smem>>
    %605 = vector.broadcast %604 : f32 to vector<7x8x128xf32>
    %606 = arith.mulf %24, %605 : vector<7x8x128xf32>
    %607 = arith.addf %603, %606 : vector<7x8x128xf32>
    %c29_147 = arith.constant 29 : index
    %608 = memref.load %arg2[%c29_147] : memref<36xf32, #tpu.memory_space<smem>>
    %609 = vector.broadcast %608 : f32 to vector<7x8x128xf32>
    %610 = arith.mulf %25, %609 : vector<7x8x128xf32>
    %611 = arith.addf %607, %610 : vector<7x8x128xf32>
    %c30_148 = arith.constant 30 : index
    %612 = memref.load %arg2[%c30_148] : memref<36xf32, #tpu.memory_space<smem>>
    %613 = vector.broadcast %612 : f32 to vector<7x8x128xf32>
    %614 = arith.mulf %27, %613 : vector<7x8x128xf32>
    %615 = arith.addf %611, %614 : vector<7x8x128xf32>
    %c31_149 = arith.constant 31 : index
    %616 = memref.load %arg2[%c31_149] : memref<36xf32, #tpu.memory_space<smem>>
    %617 = vector.broadcast %616 : f32 to vector<7x8x128xf32>
    %618 = arith.mulf %28, %617 : vector<7x8x128xf32>
    %619 = arith.addf %615, %618 : vector<7x8x128xf32>
    %c32_150 = arith.constant 32 : index
    %620 = memref.load %arg2[%c32_150] : memref<36xf32, #tpu.memory_space<smem>>
    %621 = vector.broadcast %620 : f32 to vector<7x8x128xf32>
    %622 = arith.mulf %29, %621 : vector<7x8x128xf32>
    %623 = arith.addf %619, %622 : vector<7x8x128xf32>
    %c33_151 = arith.constant 33 : index
    %624 = memref.load %arg2[%c33_151] : memref<36xf32, #tpu.memory_space<smem>>
    %625 = vector.broadcast %624 : f32 to vector<7x8x128xf32>
    %626 = arith.mulf %31, %625 : vector<7x8x128xf32>
    %627 = arith.addf %623, %626 : vector<7x8x128xf32>
    %c34_152 = arith.constant 34 : index
    %628 = memref.load %arg2[%c34_152] : memref<36xf32, #tpu.memory_space<smem>>
    %629 = vector.broadcast %628 : f32 to vector<7x8x128xf32>
    %630 = arith.mulf %32, %629 : vector<7x8x128xf32>
    %631 = arith.addf %627, %630 : vector<7x8x128xf32>
    %c35_153 = arith.constant 35 : index
    %632 = memref.load %arg2[%c35_153] : memref<36xf32, #tpu.memory_space<smem>>
    %633 = vector.broadcast %632 : f32 to vector<7x8x128xf32>
    %634 = arith.mulf %33, %633 : vector<7x8x128xf32>
    %635 = arith.addf %631, %634 : vector<7x8x128xf32>
    %636 = arith.maximumf %600, %635 : vector<7x8x128xf32>
    %c3_154 = arith.constant 3 : index
    %637 = memref.load %arg3[%c3_154] : memref<4xf32, #tpu.memory_space<smem>>
    %638 = vector.broadcast %637 : f32 to vector<7x8x128xf32>
    %639 = arith.addf %636, %638 : vector<7x8x128xf32>
    %cst_155 = arith.constant 0.000000e+00 : f32
    %640 = vector.broadcast %cst_155 : f32 to vector<7x8x128xf32>
    %641 = arith.maximumf %639, %640 : vector<7x8x128xf32>
    %642 = vector.shape_cast %641 : vector<7x8x128xf32> to vector<56x128xf32>
    %643 = vector.extract_strided_slice %0 {offsets = [3, 0, 0], sizes = [1, 32, 56], strides = [1, 1, 1]} : vector<4x32x56xf32> to vector<1x32x56xf32>
    %644 = vector.shape_cast %643 : vector<1x32x56xf32> to vector<32x56xf32>
    %cst_156 = arith.constant dense<0.000000e+00> : vector<32x128xf32>
    %645 = tpu.matmul %644, %642, %cst_156 {dimension_numbers = #tpu.dot_dimension_numbers<[1], [0], [0], [1], [0, 0, 1, 1], [], []>} : vector<32x56xf32>, vector<56x128xf32>, vector<32x128xf32> -> vector<32x128xf32>
    %646 = arith.addf %493, %645 : vector<32x128xf32>
    %647 = vector.broadcast %1 : vector<32x1xf32> to vector<32x128xf32>
    %648 = arith.addf %646, %647 : vector<32x128xf32>
    %cst_157 = arith.constant 0.000000e+00 : f32
    %649 = vector.broadcast %cst_157 : f32 to vector<32x128xf32>
    %650 = arith.maximumf %648, %649 : vector<32x128xf32>
    %c0_158 = arith.constant 0 : index
    %c0_159 = arith.constant 0 : index
    %651 = vector.load %arg6[%c0_158, %c0_159] : memref<10x32xf32, #tpu.memory_space<vmem>>, vector<10x32xf32>
    %c0_160 = arith.constant 0 : index
    %c0_161 = arith.constant 0 : index
    %652 = vector.load %arg7[%c0_160, %c0_161] : memref<10x1xf32, #tpu.memory_space<vmem>>, vector<10x1xf32>
    %cst_162 = arith.constant dense<0.000000e+00> : vector<10x128xf32>
    %653 = tpu.matmul %651, %650, %cst_162 {dimension_numbers = #tpu.dot_dimension_numbers<[1], [0], [0], [1], [0, 0, 1, 1], [], []>} : vector<10x32xf32>, vector<32x128xf32>, vector<10x128xf32> -> vector<10x128xf32>
    %654 = vector.broadcast %652 : vector<10x1xf32> to vector<10x128xf32>
    %655 = arith.addf %653, %654 : vector<10x128xf32>
    %c0_163 = arith.constant 0 : index
    %c0_164 = arith.constant 0 : index
    %656 = vector.load %arg8[%c0_163, %c0_164] : memref<10x128xf32, #tpu.memory_space<vmem>>, vector<10x128xf32>
    tpu.vector_store %arg8[%c0_163, %c0_164], %655 {strides = array<i32>} : memref<10x128xf32, #tpu.memory_space<vmem>>, vector<10x128xf32>,
    return
  }
  func.func @transform_0(%arg0: i32) -> (i32, i32, i32, i32) {
    %c0_i32 = arith.constant 0 : i32
    %c0_i32_0 = arith.constant 0 : i32
    %c0_i32_1 = arith.constant 0 : i32
    %c0_i32_2 = arith.constant 0 : i32
    return %c0_i32, %c0_i32_0, %c0_i32_1, %arg0 : i32, i32, i32, i32
  }
  func.func @transform_1(%arg0: i32) -> i32 {
    %c0_i32 = arith.constant 0 : i32
    %c0_i32_0 = arith.constant 0 : i32
    return %c0_i32 : i32
  }
  func.func @transform_2(%arg0: i32) -> i32 {
    %c0_i32 = arith.constant 0 : i32
    %c0_i32_0 = arith.constant 0 : i32
    return %c0_i32 : i32
  }
  func.func @transform_3(%arg0: i32) -> (i32, i32, i32) {
    %c0_i32 = arith.constant 0 : i32
    %c0_i32_0 = arith.constant 0 : i32
    %c0_i32_1 = arith.constant 0 : i32
    %c0_i32_2 = arith.constant 0 : i32
    return %c0_i32, %c0_i32_0, %c0_i32_1 : i32, i32, i32
  }
  func.func @transform_4(%arg0: i32) -> (i32, i32) {
    %c0_i32 = arith.constant 0 : i32
    %c0_i32_0 = arith.constant 0 : i32
    %c0_i32_1 = arith.constant 0 : i32
    return %c0_i32, %c0_i32_0 : i32, i32
  }
  func.func @transform_5(%arg0: i32) -> (i32, i32) {
    %c0_i32 = arith.constant 0 : i32
    %c0_i32_0 = arith.constant 0 : i32
    %c0_i32_1 = arith.constant 0 : i32
    return %c0_i32, %c0_i32_0 : i32, i32
  }
  func.func @transform_6(%arg0: i32) -> (i32, i32) {
    %c0_i32 = arith.constant 0 : i32
    %c0_i32_0 = arith.constant 0 : i32
    %c0_i32_1 = arith.constant 0 : i32
    return %c0_i32, %c0_i32_0 : i32, i32
  }
  func.func @transform_7(%arg0: i32) -> (i32, i32) {
    %c0_i32 = arith.constant 0 : i32
    %c0_i32_0 = arith.constant 0 : i32
    return %c0_i32, %arg0 : i32, i32
  }
}

</mosaic_0001>

<llo_original>
// kernel: forward.1
$region0: #{forward.1}
  #allocation0 [shape = 'u32[]', space=smem, size = 0x4, offset = 0x4, fixed_abs, tag = 'smem constant byte address 0x4 - core index']
  #allocation1 [shape = 'u32[144,128]{1,0:T(1,128)}', space=vmem, size = 0x12000, scoped, tag = 'internal scratch']
  %s0 = inlined_call_operand.vmem [shape: f32[8,8,8,128], index: 0, kind: input, shape index: {}]
  %s1 = inlined_call_operand.vmem [shape: f32[36], index: 1, kind: input, shape index: {}]
  %s2 = inlined_call_operand.vmem [shape: f32[4], index: 2, kind: input, shape index: {}]
  %s3 = inlined_call_operand.vmem [shape: f32[4,32,56], index: 3, kind: input, shape index: {}]
  %s4 = inlined_call_operand.vmem [shape: f32[32,1], index: 4, kind: input, shape index: {}]
  %s5 = inlined_call_operand.vmem [shape: f32[10,32], index: 5, kind: input, shape index: {}]
  %s6 = inlined_call_operand.vmem [shape: f32[10,1], index: 6, kind: input, shape index: {}]
  %s7 = inlined_call_operand.vmem [shape: f32[10,128], index: 7, kind: output, shape index: {}]
  %s8 = sld [smem:[#allocation0]]
  $region46: #{forward.1} parent=0
    _
  %s10 = ssub.s32 1, %s8
  %s11 = scalar_select 0, %s10, %s8
  $region1: #{forward.1} parent=0
    #allocation2 [shape = 'u8[512]{0}', space=smem, size = 0x200, scoped, tag = 'input window, operand 1, single buffered']
    #allocation3 [shape = 's32[1]{0}', space=sflag, size = 0x4, scoped, tag = 'scoped memory for forward.1']
    #allocation4 [shape = 'u8[512]{0}', space=smem, size = 0x200, scoped, tag = 'input window, operand 2, single buffered']
    #allocation5 [shape = 's32[1]{0}', space=sflag, size = 0x4, scoped, tag = 'scoped memory for forward.1']
    %12 = vsyncpa [#allocation3], 0
    %13 = vsyncpa [#allocation5], 0
    // Predicated region
    $region2: #{forward.1} parent=1 // pred_check
      _
    $region3: #{forward.1} parent=1 // pred_check_branch
      %15 = sbr.rel (0) target = $region5
    $region4: #{forward.1} parent=1 // pred_region
      _
    $region5: #{forward.1} parent=1 // pred_fallthru
      _
    // Predicated region
    $region6: #{forward.1} parent=1 // pred_check
      _
    $region7: #{forward.1} parent=1 // pred_check_branch
      %17 = sbr.rel (0) target = $region9
    $region8: #{forward.1} parent=1 // pred_region
      %s19 = ssub.s32 16, 16
      %20 = vsyncadd [#allocation3], %s19
      %s22 = sshll.u32 %s1, 4
      %s23 = int_to_ptr.vmem [resolvable:$true] %s22
      %25 = dma.vmem_to_smem %s23, 16, [#allocation2], [#allocation3]
    $region9: #{forward.1} parent=1 // pred_fallthru
      _
    // Predicated region
    $region10: #{forward.1} parent=1 // pred_check
      _
    $region11: #{forward.1} parent=1 // pred_check_branch
      %27 = sbr.rel (0) target = $region13
    $region12: #{forward.1} parent=1 // pred_region
      %s29 = ssub.s32 16, 16
      %30 = vsyncadd [#allocation5], %s29
      %s32 = sshll.u32 %s2, 4
      %s33 = int_to_ptr.vmem [resolvable:$true] %s32
      %35 = dma.vmem_to_smem %s33, 16, [#allocation4], [#allocation5]
    $region13: #{forward.1} parent=1 // pred_fallthru
      _
    // Predicated region
    $region14: #{forward.1} parent=1 // pred_check
      _
    $region15: #{forward.1} parent=1 // pred_check_branch
      %37 = sbr.rel (0) target = $region17
    $region16: #{forward.1} parent=1 // pred_region
      _
    $region17: #{forward.1} parent=1 // pred_fallthru
      _
    // Predicated region
    $region18: #{forward.1} parent=1 // pred_check
      _
    $region19: #{forward.1} parent=1 // pred_check_branch
      %39 = sbr.rel (0) target = $region21
    $region20: #{forward.1} parent=1 // pred_region
      _
    $region21: #{forward.1} parent=1 // pred_fallthru
      _
    // Predicated region
    $region22: #{forward.1} parent=1 // pred_check
      _
    $region23: #{forward.1} parent=1 // pred_check_branch
      %41 = sbr.rel (0) target = $region25
    $region24: #{forward.1} parent=1 // pred_region
      _
    $region25: #{forward.1} parent=1 // pred_fallthru
      _
    // Predicated region
    $region26: #{forward.1} parent=1 // pred_check
      _
    $region27: #{forward.1} parent=1 // pred_check_branch
      %43 = sbr.rel (0) target = $region29
    $region28: #{forward.1} parent=1 // pred_region
      _
    $region29: #{forward.1} parent=1 // pred_fallthru
      _
    // Predicated region
    $region30: #{forward.1} parent=1 // pred_check
      _
    $region31: #{forward.1} parent=1 // pred_check_branch
      %45 = sbr.rel (0) target = $region33
    $region32: #{forward.1} parent=1 // pred_region
      %46 = dma.done [#allocation3], 16
    $region33: #{forward.1} parent=1 // pred_fallthru
      _
    // Predicated region
    $region34: #{forward.1} parent=1 // pred_check
      _
    $region35: #{forward.1} parent=1 // pred_check_branch
      %48 = sbr.rel (0) target = $region37
    $region36: #{forward.1} parent=1 // pred_region
      %49 = dma.done [#allocation5], 16
    $region37: #{forward.1} parent=1 // pred_fallthru
      _
    %50 = sfence
    %v51 = vld [vmem:[%s3] sm:$0xff]
    %v52 = vld [vmem:[%s3 + $0x8] sm:$0xff]
    %v53 = vld [vmem:[%s3 + $0x10] sm:$0xff]
    %v54 = vld [vmem:[%s3 + $0x18] sm:$0xff]
    %v55 = vld [vmem:[%s3 + $0x20] sm:$0xff]
    %v56 = vld [vmem:[%s3 + $0x28] sm:$0xff]
    %v57 = vld [vmem:[%s3 + $0x30] sm:$0xff]
    %v58 = vld [vmem:[%s3 + $0x38] sm:$0xff]
    %v59 = vld [vmem:[%s3 + $0x40] sm:$0xff]
    %v60 = vld [vmem:[%s3 + $0x48] sm:$0xff]
    %v61 = vld [vmem:[%s3 + $0x50] sm:$0xff]
    %v62 = vld [vmem:[%s3 + $0x58] sm:$0xff]
    %v63 = vld [vmem:[%s3 + $0x60] sm:$0xff]
    %v64 = vld [vmem:[%s3 + $0x68] sm:$0xff]
    %v65 = vld [vmem:[%s3 + $0x70] sm:$0xff]
    %v66 = vld [vmem:[%s3 + $0x78] sm:$0xff]
    %v67 = vld [vmem:[%s4] sm:$0xff]
    %v68 = vld [vmem:[%s4 + $0x8] sm:$0xff]
    %v69 = vld [vmem:[%s4 + $0x10] sm:$0xff]
    %v70 = vld [vmem:[%s4 + $0x18] sm:$0xff]
    %v71 = vld [vmem:[%s0] sm:$0xff]
    %v72 = vld [vmem:[%s0 + $0x8] sm:$0xff]
    %v73 = vld [vmem:[%s0 + $0x10] sm:$0xff]
    %v74 = vld [vmem:[%s0 + $0x18] sm:$0xff]
    %v75 = vld [vmem:[%s0 + $0x20] sm:$0xff]
    %v76 = vld [vmem:[%s0 + $0x28] sm:$0xff]
    %v77 = vld [vmem:[%s0 + $0x30] sm:$0xff]
    %v78 = vld [vmem:[%s0 + $0x38] sm:$0xff]
    %s79 = scalar_lea.vmem %s0, 64
    %v80 = vld [vmem:[%s79] sm:$0xff]
    %v81 = vld [vmem:[%s79 + $0x8] sm:$0xff]
    %v82 = vld [vmem:[%s79 + $0x10] sm:$0xff]
    %v83 = vld [vmem:[%s79 + $0x18] sm:$0xff]
    %v84 = vld [vmem:[%s79 + $0x20] sm:$0xff]
    %v85 = vld [vmem:[%s79 + $0x28] sm:$0xff]
    %v86 = vld [vmem:[%s79 + $0x30] sm:$0xff]
    %v87 = vld [vmem:[%s79 + $0x38] sm:$0xff]
    %s88 = scalar_lea.vmem %s0, 128
    %v89 = vld [vmem:[%s88] sm:$0xff]
    %v90 = vld [vmem:[%s88 + $0x8] sm:$0xff]
    %v91 = vld [vmem:[%s88 + $0x10] sm:$0xff]
    %v92 = vld [vmem:[%s88 + $0x18] sm:$0xff]
    %v93 = vld [vmem:[%s88 + $0x20] sm:$0xff]
    %v94 = vld [vmem:[%s88 + $0x28] sm:$0xff]
    %v95 = vld [vmem:[%s88 + $0x30] sm:$0xff]
    %v96 = vld [vmem:[%s88 + $0x38] sm:$0xff]
    %s97 = scalar_lea.vmem %s0, 192
    %v98 = vld [vmem:[%s97] sm:$0xff]
    %v99 = vld [vmem:[%s97 + $0x8] sm:$0xff]
    %v100 = vld [vmem:[%s97 + $0x10] sm:$0xff]
    %v101 = vld [vmem:[%s97 + $0x18] sm:$0xff]
    %v102 = vld [vmem:[%s97 + $0x20] sm:$0xff]
    %v103 = vld [vmem:[%s97 + $0x28] sm:$0xff]
    %v104 = vld [vmem:[%s97 + $0x30] sm:$0xff]
    %v105 = vld [vmem:[%s97 + $0x38] sm:$0xff]
    %s106 = scalar_lea.vmem %s0, 256
    %v107 = vld [vmem:[%s106] sm:$0xff]
    %v108 = vld [vmem:[%s106 + $0x8] sm:$0xff]
    %v109 = vld [vmem:[%s106 + $0x10] sm:$0xff]
    %v110 = vld [vmem:[%s106 + $0x18] sm:$0xff]
    %v111 = vld [vmem:[%s106 + $0x20] sm:$0xff]
    %v112 = vld [vmem:[%s106 + $0x28] sm:$0xff]
    %v113 = vld [vmem:[%s106 + $0x30] sm:$0xff]
    %v114 = vld [vmem:[%s106 + $0x38] sm:$0xff]
    %s115 = scalar_lea.vmem %s0, 320
    %v116 = vld [vmem:[%s115] sm:$0xff]
    %v117 = vld [vmem:[%s115 + $0x8] sm:$0xff]
    %v118 = vld [vmem:[%s115 + $0x10] sm:$0xff]
    %v119 = vld [vmem:[%s115 + $0x18] sm:$0xff]
    %v120 = vld [vmem:[%s115 + $0x20] sm:$0xff]
    %v121 = vld [vmem:[%s115 + $0x28] sm:$0xff]
    %v122 = vld [vmem:[%s115 + $0x30] sm:$0xff]
    %v123 = vld [vmem:[%s115 + $0x38] sm:$0xff]
    %s124 = scalar_lea.vmem %s0, 384
    %v125 = vld [vmem:[%s124] sm:$0xff]
    %v126 = vld [vmem:[%s124 + $0x8] sm:$0xff]
    %v127 = vld [vmem:[%s124 + $0x10] sm:$0xff]
    %v128 = vld [vmem:[%s124 + $0x18] sm:$0xff]
    %v129 = vld [vmem:[%s124 + $0x20] sm:$0xff]
    %v130 = vld [vmem:[%s124 + $0x28] sm:$0xff]
    %v131 = vld [vmem:[%s124 + $0x30] sm:$0xff]
    %v132 = vld [vmem:[%s124 + $0x38] sm:$0xff]
    %s133 = scalar_lea.vmem %s0, 448
    %v134 = vld [vmem:[%s133] sm:$0xff]
    %v135 = vld [vmem:[%s133 + $0x8] sm:$0xff]
    %v136 = vld [vmem:[%s133 + $0x10] sm:$0xff]
    %v137 = vld [vmem:[%s133 + $0x18] sm:$0xff]
    %v138 = vld [vmem:[%s133 + $0x20] sm:$0xff]
    %v139 = vld [vmem:[%s133 + $0x28] sm:$0xff]
    %v140 = vld [vmem:[%s133 + $0x30] sm:$0xff]
    %v141 = vld [vmem:[%s133 + $0x38] sm:$0xff]
    %s142 = sld [smem:[#allocation2]]
    %v143 = vstv %s142
    %v144 = vmul.f32 %v71, %v143
    %v145 = vmul.f32 %v72, %v143
    %v146 = vmul.f32 %v73, %v143
    %v147 = vmul.f32 %v74, %v143
    %v148 = vmul.f32 %v75, %v143
    %v149 = vmul.f32 %v76, %v143
    %v150 = vmul.f32 %v77, %v143
    %s151 = sld [smem:[#allocation2 + $0x1]]
    %v152 = vstv %s151
    %v153 = vmul.f32 %v80, %v152
    %v154 = vmul.f32 %v81, %v152
    %v155 = vmul.f32 %v82, %v152
    %v156 = vmul.f32 %v83, %v152
    %v157 = vmul.f32 %v84, %v152
    %v158 = vmul.f32 %v85, %v152
    %v159 = vmul.f32 %v86, %v152
    %v160 = vadd.f32 %v144, %v153
    %v161 = vadd.f32 %v145, %v154
    %v162 = vadd.f32 %v146, %v155
    %v163 = vadd.f32 %v147, %v156
    %v164 = vadd.f32 %v148, %v157
    %v165 = vadd.f32 %v149, %v158
    %v166 = vadd.f32 %v150, %v159
    %s167 = sld [smem:[#allocation2 + $0x2]]
    %v168 = vstv %s167
    %v169 = vmul.f32 %v89, %v168
    %v170 = vmul.f32 %v90, %v168
    %v171 = vmul.f32 %v91, %v168
    %v172 = vmul.f32 %v92, %v168
    %v173 = vmul.f32 %v93, %v168
    %v174 = vmul.f32 %v94, %v168
    %v175 = vmul.f32 %v95, %v168
    %v176 = vadd.f32 %v160, %v169
    %v177 = vadd.f32 %v161, %v170
    %v178 = vadd.f32 %v162, %v171
    %v179 = vadd.f32 %v163, %v172
    %v180 = vadd.f32 %v164, %v173
    %v181 = vadd.f32 %v165, %v174
    %v182 = vadd.f32 %v166, %v175
    %s183 = sld [smem:[#allocation2 + $0x3]]
    %v184 = vstv %s183
    %v185 = vmul.f32 %v107, %v184
    %v186 = vmul.f32 %v108, %v184
    %v187 = vmul.f32 %v109, %v184
    %v188 = vmul.f32 %v110, %v184
    %v189 = vmul.f32 %v111, %v184
    %v190 = vmul.f32 %v112, %v184
    %v191 = vmul.f32 %v113, %v184
    %v192 = vadd.f32 %v176, %v185
    %v193 = vadd.f32 %v177, %v186
    %v194 = vadd.f32 %v178, %v187
    %v195 = vadd.f32 %v179, %v188
    %v196 = vadd.f32 %v180, %v189
    %v197 = vadd.f32 %v181, %v190
    %v198 = vadd.f32 %v182, %v191
    %s199 = sld [smem:[#allocation2 + $0x4]]
    %v200 = vstv %s199
    %v201 = vmul.f32 %v116, %v200
    %v202 = vmul.f32 %v117, %v200
    %v203 = vmul.f32 %v118, %v200
    %v204 = vmul.f32 %v119, %v200
    %v205 = vmul.f32 %v120, %v200
    %v206 = vmul.f32 %v121, %v200
    %v207 = vmul.f32 %v122, %v200
    %v208 = vadd.f32 %v192, %v201
    %v209 = vadd.f32 %v193, %v202
    %v210 = vadd.f32 %v194, %v203
    %v211 = vadd.f32 %v195, %v204
    %v212 = vadd.f32 %v196, %v205
    %v213 = vadd.f32 %v197, %v206
    %v214 = vadd.f32 %v198, %v207
    %s215 = sld [smem:[#allocation2 + $0x5]]
    %v216 = vstv %s215
    %v217 = vmul.f32 %v125, %v216
    %v218 = vmul.f32 %v126, %v216
    %v219 = vmul.f32 %v127, %v216
    %v220 = vmul.f32 %v128, %v216
    %v221 = vmul.f32 %v129, %v216
    %v222 = vmul.f32 %v130, %v216
    %v223 = vmul.f32 %v131, %v216
    %v224 = vadd.f32 %v208, %v217
    %v225 = vadd.f32 %v209, %v218
    %v226 = vadd.f32 %v210, %v219
    %v227 = vadd.f32 %v211, %v220
    %v228 = vadd.f32 %v212, %v221
    %v229 = vadd.f32 %v213, %v222
    %v230 = vadd.f32 %v214, %v223
    %s231 = sld [smem:[#allocation2 + $0x6]]
    %v232 = vstv %s231
    %v233 = vmul.f32 %v72, %v232
    %v234 = vmul.f32 %v73, %v232
    %v235 = vmul.f32 %v74, %v232
    %v236 = vmul.f32 %v75, %v232
    %v237 = vmul.f32 %v76, %v232
    %v238 = vmul.f32 %v77, %v232
    %v239 = vmul.f32 %v78, %v232
    %v240 = vadd.f32 %v224, %v233
    %v241 = vadd.f32 %v225, %v234
    %v242 = vadd.f32 %v226, %v235
    %v243 = vadd.f32 %v227, %v236
    %v244 = vadd.f32 %v228, %v237
    %v245 = vadd.f32 %v229, %v238
    %v246 = vadd.f32 %v230, %v239
    %s247 = sld [smem:[#allocation2 + $0x7]]
    %v248 = vstv %s247
    %v249 = vmul.f32 %v81, %v248
    %v250 = vmul.f32 %v82, %v248
    %v251 = vmul.f32 %v83, %v248
    %v252 = vmul.f32 %v84, %v248
    %v253 = vmul.f32 %v85, %v248
    %v254 = vmul.f32 %v86, %v248
    %v255 = vmul.f32 %v87, %v248
    %v256 = vadd.f32 %v240, %v249
    %v257 = vadd.f32 %v241, %v250
    %v258 = vadd.f32 %v242, %v251
    %v259 = vadd.f32 %v243, %v252
    %v260 = vadd.f32 %v244, %v253
    %v261 = vadd.f32 %v245, %v254
    %v262 = vadd.f32 %v246, %v255
    %s263 = sld [smem:[#allocation2 + $0x8]]
    %v264 = vstv %s263
    %v265 = vmul.f32 %v90, %v264
    %v266 = vmul.f32 %v91, %v264
    %v267 = vmul.f32 %v92, %v264
    %v268 = vmul.f32 %v93, %v264
    %v269 = vmul.f32 %v94, %v264
    %v270 = vmul.f32 %v95, %v264
    %v271 = vmul.f32 %v96, %v264
    %v272 = vadd.f32 %v256, %v265
    %v273 = vadd.f32 %v257, %v266
    %v274 = vadd.f32 %v258, %v267
    %v275 = vadd.f32 %v259, %v268
    %v276 = vadd.f32 %v260, %v269
    %v277 = vadd.f32 %v261, %v270
    %v278 = vadd.f32 %v262, %v271
    %v279 = vmul.f32 %v80, %v143
    %v280 = vmul.f32 %v81, %v143
    %v281 = vmul.f32 %v82, %v143
    %v282 = vmul.f32 %v83, %v143
    %v283 = vmul.f32 %v84, %v143
    %v284 = vmul.f32 %v85, %v143
    %v285 = vmul.f32 %v86, %v143
    %v286 = vmul.f32 %v89, %v152
    %v287 = vmul.f32 %v90, %v152
    %v288 = vmul.f32 %v91, %v152
    %v289 = vmul.f32 %v92, %v152
    %v290 = vmul.f32 %v93, %v152
    %v291 = vmul.f32 %v94, %v152
    %v292 = vmul.f32 %v95, %v152
    %v293 = vadd.f32 %v279, %v286
    %v294 = vadd.f32 %v280, %v287
    %v295 = vadd.f32 %v281, %v288
    %v296 = vadd.f32 %v282, %v289
    %v297 = vadd.f32 %v283, %v290
    %v298 = vadd.f32 %v284, %v291
    %v299 = vadd.f32 %v285, %v292
    %v300 = vmul.f32 %v98, %v168
    %v301 = vmul.f32 %v99, %v168
    %v302 = vmul.f32 %v100, %v168
    %v303 = vmul.f32 %v101, %v168
    %v304 = vmul.f32 %v102, %v168
    %v305 = vmul.f32 %v103, %v168
    %v306 = vmul.f32 %v104, %v168
    %v307 = vadd.f32 %v293, %v300
    %v308 = vadd.f32 %v294, %v301
    %v309 = vadd.f32 %v295, %v302
    %v310 = vadd.f32 %v296, %v303
    %v311 = vadd.f32 %v297, %v304
    %v312 = vadd.f32 %v298, %v305
    %v313 = vadd.f32 %v299, %v306
    %v314 = vmul.f32 %v116, %v184
    %v315 = vmul.f32 %v117, %v184
    %v316 = vmul.f32 %v118, %v184
    %v317 = vmul.f32 %v119, %v184
    %v318 = vmul.f32 %v120, %v184
    %v319 = vmul.f32 %v121, %v184
    %v320 = vmul.f32 %v122, %v184
    %v321 = vadd.f32 %v307, %v314
    %v322 = vadd.f32 %v308, %v315
    %v323 = vadd.f32 %v309, %v316
    %v324 = vadd.f32 %v310, %v317
    %v325 = vadd.f32 %v311, %v318
    %v326 = vadd.f32 %v312, %v319
    %v327 = vadd.f32 %v313, %v320
    %v328 = vmul.f32 %v125, %v200
    %v329 = vmul.f32 %v126, %v200
    %v330 = vmul.f32 %v127, %v200
    %v331 = vmul.f32 %v128, %v200
    %v332 = vmul.f32 %v129, %v200
    %v333 = vmul.f32 %v130, %v200
    %v334 = vmul.f32 %v131, %v200
    %v335 = vadd.f32 %v321, %v328
    %v336 = vadd.f32 %v322, %v329
    %v337 = vadd.f32 %v323, %v330
    %v338 = vadd.f32 %v324, %v331
    %v339 = vadd.f32 %v325, %v332
    %v340 = vadd.f32 %v326, %v333
    %v341 = vadd.f32 %v327, %v334
    %v342 = vmul.f32 %v134, %v216
    %v343 = vmul.f32 %v135, %v216
    %v344 = vmul.f32 %v136, %v216
    %v345 = vmul.f32 %v137, %v216
    %v346 = vmul.f32 %v138, %v216
    %v347 = vmul.f32 %v139, %v216
    %v348 = vmul.f32 %v140, %v216
    %v349 = vadd.f32 %v335, %v342
    %v350 = vadd.f32 %v336, %v343
    %v351 = vadd.f32 %v337, %v344
    %v352 = vadd.f32 %v338, %v345
    %v353 = vadd.f32 %v339, %v346
    %v354 = vadd.f32 %v340, %v347
    %v355 = vadd.f32 %v341, %v348
    %v356 = vmul.f32 %v81, %v232
    %v357 = vmul.f32 %v82, %v232
    %v358 = vmul.f32 %v83, %v232
    %v359 = vmul.f32 %v84, %v232
    %v360 = vmul.f32 %v85, %v232
    %v361 = vmul.f32 %v86, %v232
    %v362 = vmul.f32 %v87, %v232
    %v363 = vadd.f32 %v349, %v356
    %v364 = vadd.f32 %v350, %v357
    %v365 = vadd.f32 %v351, %v358
    %v366 = vadd.f32 %v352, %v359
    %v367 = vadd.f32 %v353, %v360
    %v368 = vadd.f32 %v354, %v361
    %v369 = vadd.f32 %v355, %v362
    %v370 = vmul.f32 %v90, %v248
    %v371 = vmul.f32 %v91, %v248
    %v372 = vmul.f32 %v92, %v248
    %v373 = vmul.f32 %v93, %v248
    %v374 = vmul.f32 %v94, %v248
    %v375 = vmul.f32 %v95, %v248
    %v376 = vmul.f32 %v96, %v248
    %v377 = vadd.f32 %v363, %v370
    %v378 = vadd.f32 %v364, %v371
    %v379 = vadd.f32 %v365, %v372
    %v380 = vadd.f32 %v366, %v373
    %v381 = vadd.f32 %v367, %v374
    %v382 = vadd.f32 %v368, %v375
    %v383 = vadd.f32 %v369, %v376
    %v384 = vmul.f32 %v99, %v264
    %v385 = vmul.f32 %v100, %v264
    %v386 = vmul.f32 %v101, %v264
    %v387 = vmul.f32 %v102, %v264
    %v388 = vmul.f32 %v103, %v264
    %v389 = vmul.f32 %v104, %v264
    %v390 = vmul.f32 %v105, %v264
    %v391 = vadd.f32 %v377, %v384
    %v392 = vadd.f32 %v378, %v385
    %v393 = vadd.f32 %v379, %v386
    %v394 = vadd.f32 %v380, %v387
    %v395 = vadd.f32 %v381, %v388
    %v396 = vadd.f32 %v382, %v389
    %v397 = vadd.f32 %v383, %v390
    %v398 = vmax.f32 %v272, %v391
    %v399 = vmax.f32 %v273, %v392
    %v400 = vmax.f32 %v274, %v393
    %v401 = vmax.f32 %v275, %v394
    %v402 = vmax.f32 %v276, %v395
    %v403 = vmax.f32 %v277, %v396
    %v404 = vmax.f32 %v278, %v397
    %v405 = vmul.f32 %v107, %v143
    %v406 = vmul.f32 %v108, %v143
    %v407 = vmul.f32 %v109, %v143
    %v408 = vmul.f32 %v110, %v143
    %v409 = vmul.f32 %v111, %v143
    %v410 = vmul.f32 %v112, %v143
    %v411 = vmul.f32 %v113, %v143
    %v412 = vmul.f32 %v116, %v152
    %v413 = vmul.f32 %v117, %v152
    %v414 = vmul.f32 %v118, %v152
    %v415 = vmul.f32 %v119, %v152
    %v416 = vmul.f32 %v120, %v152
    %v417 = vmul.f32 %v121, %v152
    %v418 = vmul.f32 %v122, %v152
    %v419 = vadd.f32 %v405, %v412
    %v420 = vadd.f32 %v406, %v413
    %v421 = vadd.f32 %v407, %v414
    %v422 = vadd.f32 %v408, %v415
    %v423 = vadd.f32 %v409, %v416
    %v424 = vadd.f32 %v410, %v417
    %v425 = vadd.f32 %v411, %v418
    %v426 = vmul.f32 %v125, %v168
    %v427 = vmul.f32 %v126, %v168
    %v428 = vmul.f32 %v127, %v168
    %v429 = vmul.f32 %v128, %v168
    %v430 = vmul.f32 %v129, %v168
    %v431 = vmul.f32 %v130, %v168
    %v432 = vmul.f32 %v131, %v168
    %v433 = vadd.f32 %v419, %v426
    %v434 = vadd.f32 %v420, %v427
    %v435 = vadd.f32 %v421, %v428
    %v436 = vadd.f32 %v422, %v429
    %v437 = vadd.f32 %v423, %v430
    %v438 = vadd.f32 %v424, %v431
    %v439 = vadd.f32 %v425, %v432
    %v440 = vmul.f32 %v72, %v184
    %v441 = vmul.f32 %v73, %v184
    %v442 = vmul.f32 %v74, %v184
    %v443 = vmul.f32 %v75, %v184
    %v444 = vmul.f32 %v76, %v184
    %v445 = vmul.f32 %v77, %v184
    %v446 = vmul.f32 %v78, %v184
    %v447 = vadd.f32 %v433, %v440
    %v448 = vadd.f32 %v434, %v441
    %v449 = vadd.f32 %v435, %v442
    %v450 = vadd.f32 %v436, %v443
    %v451 = vadd.f32 %v437, %v444
    %v452 = vadd.f32 %v438, %v445
    %v453 = vadd.f32 %v439, %v446
    %v454 = vmul.f32 %v81, %v200
    %v455 = vmul.f32 %v82, %v200
    %v456 = vmul.f32 %v83, %v200
    %v457 = vmul.f32 %v84, %v200
    %v458 = vmul.f32 %v85, %v200
    %v459 = vmul.f32 %v86, %v200
    %v460 = vmul.f32 %v87, %v200
    %v461 = vadd.f32 %v447, %v454
    %v462 = vadd.f32 %v448, %v455
    %v463 = vadd.f32 %v449, %v456
    %v464 = vadd.f32 %v450, %v457
    %v465 = vadd.f32 %v451, %v458
    %v466 = vadd.f32 %v452, %v459
    %v467 = vadd.f32 %v453, %v460
    %v468 = vmul.f32 %v90, %v216
    %v469 = vmul.f32 %v91, %v216
    %v470 = vmul.f32 %v92, %v216
    %v471 = vmul.f32 %v93, %v216
    %v472 = vmul.f32 %v94, %v216
    %v473 = vmul.f32 %v95, %v216
    %v474 = vmul.f32 %v96, %v216
    %v475 = vadd.f32 %v461, %v468
    %v476 = vadd.f32 %v462, %v469
    %v477 = vadd.f32 %v463, %v470
    %v478 = vadd.f32 %v464, %v471
    %v479 = vadd.f32 %v465, %v472
    %v480 = vadd.f32 %v466, %v473
    %v481 = vadd.f32 %v467, %v474
    %v482 = vmul.f32 %v108, %v232
    %v483 = vmul.f32 %v109, %v232
    %v484 = vmul.f32 %v110, %v232
    %v485 = vmul.f32 %v111, %v232
    %v486 = vmul.f32 %v112, %v232
    %v487 = vmul.f32 %v113, %v232
    %v488 = vmul.f32 %v114, %v232
    %v489 = vadd.f32 %v475, %v482
    %v490 = vadd.f32 %v476, %v483
    %v491 = vadd.f32 %v477, %v484
    %v492 = vadd.f32 %v478, %v485
    %v493 = vadd.f32 %v479, %v486
    %v494 = vadd.f32 %v480, %v487
    %v495 = vadd.f32 %v481, %v488
    %v496 = vmul.f32 %v117, %v248
    %v497 = vmul.f32 %v118, %v248
    %v498 = vmul.f32 %v119, %v248
    %v499 = vmul.f32 %v120, %v248
    %v500 = vmul.f32 %v121, %v248
    %v501 = vmul.f32 %v122, %v248
    %v502 = vmul.f32 %v123, %v248
    %v503 = vadd.f32 %v489, %v496
    %v504 = vadd.f32 %v490, %v497
    %v505 = vadd.f32 %v491, %v498
    %v506 = vadd.f32 %v492, %v499
    %v507 = vadd.f32 %v493, %v500
    %v508 = vadd.f32 %v494, %v501
    %v509 = vadd.f32 %v495, %v502
    %v510 = vmul.f32 %v126, %v264
    %v511 = vmul.f32 %v127, %v264
    %v512 = vmul.f32 %v128, %v264
    %v513 = vmul.f32 %v129, %v264
    %v514 = vmul.f32 %v130, %v264
    %v515 = vmul.f32 %v131, %v264
    %v516 = vmul.f32 %v132, %v264
    %v517 = vadd.f32 %v503, %v510
    %v518 = vadd.f32 %v504, %v511
    %v519 = vadd.f32 %v505, %v512
    %v520 = vadd.f32 %v506, %v513
    %v521 = vadd.f32 %v507, %v514
    %v522 = vadd.f32 %v508, %v515
    %v523 = vadd.f32 %v509, %v516
    %v524 = vmax.f32 %v398, %v517
    %v525 = vmax.f32 %v399, %v518
    %v526 = vmax.f32 %v400, %v519
    %v527 = vmax.f32 %v401, %v520
    %v528 = vmax.f32 %v402, %v521
    %v529 = vmax.f32 %v403, %v522
    %v530 = vmax.f32 %v404, %v523
    %v531 = vmul.f32 %v116, %v143
    %v532 = vmul.f32 %v117, %v143
    %v533 = vmul.f32 %v118, %v143
    %v534 = vmul.f32 %v119, %v143
    %v535 = vmul.f32 %v120, %v143
    %v536 = vmul.f32 %v121, %v143
    %v537 = vmul.f32 %v122, %v143
    %v538 = vmul.f32 %v125, %v152
    %v539 = vmul.f32 %v126, %v152
    %v540 = vmul.f32 %v127, %v152
    %v541 = vmul.f32 %v128, %v152
    %v542 = vmul.f32 %v129, %v152
    %v543 = vmul.f32 %v130, %v152
    %v544 = vmul.f32 %v131, %v152
    %v545 = vadd.f32 %v531, %v538
    %v546 = vadd.f32 %v532, %v539
    %v547 = vadd.f32 %v533, %v540
    %v548 = vadd.f32 %v534, %v541
    %v549 = vadd.f32 %v535, %v542
    %v550 = vadd.f32 %v536, %v543
    %v551 = vadd.f32 %v537, %v544
    %v552 = vmul.f32 %v134, %v168
    %v553 = vmul.f32 %v135, %v168
    %v554 = vmul.f32 %v136, %v168
    %v555 = vmul.f32 %v137, %v168
    %v556 = vmul.f32 %v138, %v168
    %v557 = vmul.f32 %v139, %v168
    %v558 = vmul.f32 %v140, %v168
    %v559 = vadd.f32 %v545, %v552
    %v560 = vadd.f32 %v546, %v553
    %v561 = vadd.f32 %v547, %v554
    %v562 = vadd.f32 %v548, %v555
    %v563 = vadd.f32 %v549, %v556
    %v564 = vadd.f32 %v550, %v557
    %v565 = vadd.f32 %v551, %v558
    %v566 = vmul.f32 %v81, %v184
    %v567 = vmul.f32 %v82, %v184
    %v568 = vmul.f32 %v83, %v184
    %v569 = vmul.f32 %v84, %v184
    %v570 = vmul.f32 %v85, %v184
    %v571 = vmul.f32 %v86, %v184
    %v572 = vmul.f32 %v87, %v184
    %v573 = vadd.f32 %v559, %v566
    %v574 = vadd.f32 %v560, %v567
    %v575 = vadd.f32 %v561, %v568
    %v576 = vadd.f32 %v562, %v569
    %v577 = vadd.f32 %v563, %v570
    %v578 = vadd.f32 %v564, %v571
    %v579 = vadd.f32 %v565, %v572
    %v580 = vmul.f32 %v90, %v200
    %v581 = vmul.f32 %v91, %v200
    %v582 = vmul.f32 %v92, %v200
    %v583 = vmul.f32 %v93, %v200
    %v584 = vmul.f32 %v94, %v200
    %v585 = vmul.f32 %v95, %v200
    %v586 = vmul.f32 %v96, %v200
    %v587 = vadd.f32 %v573, %v580
    %v588 = vadd.f32 %v574, %v581
    %v589 = vadd.f32 %v575, %v582
    %v590 = vadd.f32 %v576, %v583
    %v591 = vadd.f32 %v577, %v584
    %v592 = vadd.f32 %v578, %v585
    %v593 = vadd.f32 %v579, %v586
    %v594 = vmul.f32 %v99, %v216
    %v595 = vmul.f32 %v100, %v216
    %v596 = vmul.f32 %v101, %v216
    %v597 = vmul.f32 %v102, %v216
    %v598 = vmul.f32 %v103, %v216
    %v599 = vmul.f32 %v104, %v216
    %v600 = vmul.f32 %v105, %v216
    %v601 = vadd.f32 %v587, %v594
    %v602 = vadd.f32 %v588, %v595
    %v603 = vadd.f32 %v589, %v596
    %v604 = vadd.f32 %v590, %v597
    %v605 = vadd.f32 %v591, %v598
    %v606 = vadd.f32 %v592, %v599
    %v607 = vadd.f32 %v593, %v600
    %v608 = vmul.f32 %v117, %v232
    %v609 = vmul.f32 %v118, %v232
    %v610 = vmul.f32 %v119, %v232
    %v611 = vmul.f32 %v120, %v232
    %v612 = vmul.f32 %v121, %v232
    %v613 = vmul.f32 %v122, %v232
    %v614 = vmul.f32 %v123, %v232
    %v615 = vadd.f32 %v601, %v608
    %v616 = vadd.f32 %v602, %v609
    %v617 = vadd.f32 %v603, %v610
    %v618 = vadd.f32 %v604, %v611
    %v619 = vadd.f32 %v605, %v612
    %v620 = vadd.f32 %v606, %v613
    %v621 = vadd.f32 %v607, %v614
    %v622 = vmul.f32 %v126, %v248
    %v623 = vmul.f32 %v127, %v248
    %v624 = vmul.f32 %v128, %v248
    %v625 = vmul.f32 %v129, %v248
    %v626 = vmul.f32 %v130, %v248
    %v627 = vmul.f32 %v131, %v248
    %v628 = vmul.f32 %v132, %v248
    %v629 = vadd.f32 %v615, %v622
    %v630 = vadd.f32 %v616, %v623
    %v631 = vadd.f32 %v617, %v624
    %v632 = vadd.f32 %v618, %v625
    %v633 = vadd.f32 %v619, %v626
    %v634 = vadd.f32 %v620, %v627
    %v635 = vadd.f32 %v621, %v628
    %v636 = vmul.f32 %v135, %v264
    %v637 = vmul.f32 %v136, %v264
    %v638 = vmul.f32 %v137, %v264
    %v639 = vmul.f32 %v138, %v264
    %v640 = vmul.f32 %v139, %v264
    %v641 = vmul.f32 %v140, %v264
    %v642 = vmul.f32 %v141, %v264
    %v643 = vadd.f32 %v629, %v636
    %v644 = vadd.f32 %v630, %v637
    %v645 = vadd.f32 %v631, %v638
    %v646 = vadd.f32 %v632, %v639
    %v647 = vadd.f32 %v633, %v640
    %v648 = vadd.f32 %v634, %v641
    %v649 = vadd.f32 %v635, %v642
    %v650 = vmax.f32 %v524, %v643
    %v651 = vmax.f32 %v525, %v644
    %v652 = vmax.f32 %v526, %v645
    %v653 = vmax.f32 %v527, %v646
    %v654 = vmax.f32 %v528, %v647
    %v655 = vmax.f32 %v529, %v648
    %v656 = vmax.f32 %v530, %v649
    %s657 = sld [smem:[#allocation4]]
    %v658 = vstv %s657
    %v659 = vadd.f32 %v650, %v658
    %v660 = vadd.f32 %v651, %v658
    %v661 = vadd.f32 %v652, %v658
    %v662 = vadd.f32 %v653, %v658
    %v663 = vadd.f32 %v654, %v658
    %v664 = vadd.f32 %v655, %v658
    %v665 = vadd.f32 %v656, %v658
    %v666 = vmax.f32 %v659, 0.0
    %v667 = vmax.f32 %v660, 0.0
    %v668 = vmax.f32 %v661, 0.0
    %v669 = vmax.f32 %v662, 0.0
    %v670 = vmax.f32 %v663, 0.0
    %v671 = vmax.f32 %v664, 0.0
    %v672 = vmax.f32 %v665, 0.0
    %s673 = sld [smem:[#allocation2 + $0x9]]
    %v674 = vstv %s673
    %v675 = vmul.f32 %v71, %v674
    %v676 = vmul.f32 %v72, %v674
    %v677 = vmul.f32 %v73, %v674
    %v678 = vmul.f32 %v74, %v674
    %v679 = vmul.f32 %v75, %v674
    %v680 = vmul.f32 %v76, %v674
    %v681 = vmul.f32 %v77, %v674
    %s682 = sld [smem:[#allocation2 + $0xa]]
    %v683 = vstv %s682
    %v684 = vmul.f32 %v80, %v683
    %v685 = vmul.f32 %v81, %v683
    %v686 = vmul.f32 %v82, %v683
    %v687 = vmul.f32 %v83, %v683
    %v688 = vmul.f32 %v84, %v683
    %v689 = vmul.f32 %v85, %v683
    %v690 = vmul.f32 %v86, %v683
    %v691 = vadd.f32 %v675, %v684
    %v692 = vadd.f32 %v676, %v685
    %v693 = vadd.f32 %v677, %v686
    %v694 = vadd.f32 %v678, %v687
    %v695 = vadd.f32 %v679, %v688
    %v696 = vadd.f32 %v680, %v689
    %v697 = vadd.f32 %v681, %v690
    %s698 = sld [smem:[#allocation2 + $0xb]]
    %v699 = vstv %s698
    %v700 = vmul.f32 %v89, %v699
    %v701 = vmul.f32 %v90, %v699
    %v702 = vmul.f32 %v91, %v699
    %v703 = vmul.f32 %v92, %v699
    %v704 = vmul.f32 %v93, %v699
    %v705 = vmul.f32 %v94, %v699
    %v706 = vmul.f32 %v95, %v699
    %v707 = vadd.f32 %v691, %v700
    %v708 = vadd.f32 %v692, %v701
    %v709 = vadd.f32 %v693, %v702
    %v710 = vadd.f32 %v694, %v703
    %v711 = vadd.f32 %v695, %v704
    %v712 = vadd.f32 %v696, %v705
    %v713 = vadd.f32 %v697, %v706
    %s714 = sld [smem:[#allocation2 + $0xc]]
    %v715 = vstv %s714
    %v716 = vmul.f32 %v107, %v715
    %v717 = vmul.f32 %v108, %v715
    %v718 = vmul.f32 %v109, %v715
    %v719 = vmul.f32 %v110, %v715
    %v720 = vmul.f32 %v111, %v715
    %v721 = vmul.f32 %v112, %v715
    %v722 = vmul.f32 %v113, %v715
    %v723 = vadd.f32 %v707, %v716
    %v724 = vadd.f32 %v708, %v717
    %v725 = vadd.f32 %v709, %v718
    %v726 = vadd.f32 %v710, %v719
    %v727 = vadd.f32 %v711, %v720
    %v728 = vadd.f32 %v712, %v721
    %v729 = vadd.f32 %v713, %v722
    %s730 = sld [smem:[#allocation2 + $0xd]]
    %v731 = vstv %s730
    %v732 = vmul.f32 %v116, %v731
    %v733 = vmul.f32 %v117, %v731
    %v734 = vmul.f32 %v118, %v731
    %v735 = vmul.f32 %v119, %v731
    %v736 = vmul.f32 %v120, %v731
    %v737 = vmul.f32 %v121, %v731
    %v738 = vmul.f32 %v122, %v731
    %v739 = vadd.f32 %v723, %v732
    %v740 = vadd.f32 %v724, %v733
    %v741 = vadd.f32 %v725, %v734
    %v742 = vadd.f32 %v726, %v735
    %v743 = vadd.f32 %v727, %v736
    %v744 = vadd.f32 %v728, %v737
    %v745 = vadd.f32 %v729, %v738
    %s746 = sld [smem:[#allocation2 + $0xe]]
    %v747 = vstv %s746
    %v748 = vmul.f32 %v125, %v747
    %v749 = vmul.f32 %v126, %v747
    %v750 = vmul.f32 %v127, %v747
    %v751 = vmul.f32 %v128, %v747
    %v752 = vmul.f32 %v129, %v747
    %v753 = vmul.f32 %v130, %v747
    %v754 = vmul.f32 %v131, %v747
    %v755 = vadd.f32 %v739, %v748
    %v756 = vadd.f32 %v740, %v749
    %v757 = vadd.f32 %v741, %v750
    %v758 = vadd.f32 %v742, %v751
    %v759 = vadd.f32 %v743, %v752
    %v760 = vadd.f32 %v744, %v753
    %v761 = vadd.f32 %v745, %v754
    %s762 = sld [smem:[#allocation2 + $0xf]]
    %v763 = vstv %s762
    %v764 = vmul.f32 %v72, %v763
    %v765 = vmul.f32 %v73, %v763
    %v766 = vmul.f32 %v74, %v763
    %v767 = vmul.f32 %v75, %v763
    %v768 = vmul.f32 %v76, %v763
    %v769 = vmul.f32 %v77, %v763
    %v770 = vmul.f32 %v78, %v763
    %v771 = vadd.f32 %v755, %v764
    %v772 = vadd.f32 %v756, %v765
    %v773 = vadd.f32 %v757, %v766
    %v774 = vadd.f32 %v758, %v767
    %v775 = vadd.f32 %v759, %v768
    %v776 = vadd.f32 %v760, %v769
    %v777 = vadd.f32 %v761, %v770
    %s778 = sld [smem:[#allocation2 + $0x10]]
    %v779 = vstv %s778
    %v780 = vmul.f32 %v81, %v779
    %v781 = vmul.f32 %v82, %v779
    %v782 = vmul.f32 %v83, %v779
    %v783 = vmul.f32 %v84, %v779
    %v784 = vmul.f32 %v85, %v779
    %v785 = vmul.f32 %v86, %v779
    %v786 = vmul.f32 %v87, %v779
    %v787 = vadd.f32 %v771, %v780
    %v788 = vadd.f32 %v772, %v781
    %v789 = vadd.f32 %v773, %v782
    %v790 = vadd.f32 %v774, %v783
    %v791 = vadd.f32 %v775, %v784
    %v792 = vadd.f32 %v776, %v785
    %v793 = vadd.f32 %v777, %v786
    %s794 = sld [smem:[#allocation2 + $0x11]]
    %v795 = vstv %s794
    %v796 = vmul.f32 %v90, %v795
    %v797 = vmul.f32 %v91, %v795
    %v798 = vmul.f32 %v92, %v795
    %v799 = vmul.f32 %v93, %v795
    %v800 = vmul.f32 %v94, %v795
    %v801 = vmul.f32 %v95, %v795
    %v802 = vmul.f32 %v96, %v795
    %v803 = vadd.f32 %v787, %v796
    %v804 = vadd.f32 %v788, %v797
    %v805 = vadd.f32 %v789, %v798
    %v806 = vadd.f32 %v790, %v799
    %v807 = vadd.f32 %v791, %v800
    %v808 = vadd.f32 %v792, %v801
    %v809 = vadd.f32 %v793, %v802
    %v810 = vmul.f32 %v80, %v674
    %v811 = vmul.f32 %v81, %v674
    %v812 = vmul.f32 %v82, %v674
    %v813 = vmul.f32 %v83, %v674
    %v814 = vmul.f32 %v84, %v674
    %v815 = vmul.f32 %v85, %v674
    %v816 = vmul.f32 %v86, %v674
    %v817 = vmul.f32 %v89, %v683
    %v818 = vmul.f32 %v90, %v683
    %v819 = vmul.f32 %v91, %v683
    %v820 = vmul.f32 %v92, %v683
    %v821 = vmul.f32 %v93, %v683
    %v822 = vmul.f32 %v94, %v683
    %v823 = vmul.f32 %v95, %v683
    %v824 = vadd.f32 %v810, %v817
    %v825 = vadd.f32 %v811, %v818
    %v826 = vadd.f32 %v812, %v819
    %v827 = vadd.f32 %v813, %v820
    %v828 = vadd.f32 %v814, %v821
    %v829 = vadd.f32 %v815, %v822
    %v830 = vadd.f32 %v816, %v823
    %v831 = vmul.f32 %v98, %v699
    %v832 = vmul.f32 %v99, %v699
    %v833 = vmul.f32 %v100, %v699
    %v834 = vmul.f32 %v101, %v699
    %v835 = vmul.f32 %v102, %v699
    %v836 = vmul.f32 %v103, %v699
    %v837 = vmul.f32 %v104, %v699
    %v838 = vadd.f32 %v824, %v831
    %v839 = vadd.f32 %v825, %v832
    %v840 = vadd.f32 %v826, %v833
    %v841 = vadd.f32 %v827, %v834
    %v842 = vadd.f32 %v828, %v835
    %v843 = vadd.f32 %v829, %v836
    %v844 = vadd.f32 %v830, %v837
    %v845 = vmul.f32 %v116, %v715
    %v846 = vmul.f32 %v117, %v715
    %v847 = vmul.f32 %v118, %v715
    %v848 = vmul.f32 %v119, %v715
    %v849 = vmul.f32 %v120, %v715
    %v850 = vmul.f32 %v121, %v715
    %v851 = vmul.f32 %v122, %v715
    %v852 = vadd.f32 %v838, %v845
    %v853 = vadd.f32 %v839, %v846
    %v854 = vadd.f32 %v840, %v847
    %v855 = vadd.f32 %v841, %v848
    %v856 = vadd.f32 %v842, %v849
    %v857 = vadd.f32 %v843, %v850
    %v858 = vadd.f32 %v844, %v851
    %v859 = vmul.f32 %v125, %v731
    %v860 = vmul.f32 %v126, %v731
    %v861 = vmul.f32 %v127, %v731
    %v862 = vmul.f32 %v128, %v731
    %v863 = vmul.f32 %v129, %v731
    %v864 = vmul.f32 %v130, %v731
    %v865 = vmul.f32 %v131, %v731
    %v866 = vadd.f32 %v852, %v859
    %v867 = vadd.f32 %v853, %v860
    %v868 = vadd.f32 %v854, %v861
    %v869 = vadd.f32 %v855, %v862
    %v870 = vadd.f32 %v856, %v863
    %v871 = vadd.f32 %v857, %v864
    %v872 = vadd.f32 %v858, %v865
    %v873 = vmul.f32 %v134, %v747
    %v874 = vmul.f32 %v135, %v747
    %v875 = vmul.f32 %v136, %v747
    %v876 = vmul.f32 %v137, %v747
    %v877 = vmul.f32 %v138, %v747
    %v878 = vmul.f32 %v139, %v747
    %v879 = vmul.f32 %v140, %v747
    %v880 = vadd.f32 %v866, %v873
    %v881 = vadd.f32 %v867, %v874
    %v882 = vadd.f32 %v868, %v875
    %v883 = vadd.f32 %v869, %v876
    %v884 = vadd.f32 %v870, %v877
    %v885 = vadd.f32 %v871, %v878
    %v886 = vadd.f32 %v872, %v879
    %v887 = vmul.f32 %v81, %v763
    %v888 = vmul.f32 %v82, %v763
    %v889 = vmul.f32 %v83, %v763
    %v890 = vmul.f32 %v84, %v763
    %v891 = vmul.f32 %v85, %v763
    %v892 = vmul.f32 %v86, %v763
    %v893 = vmul.f32 %v87, %v763
    %v894 = vadd.f32 %v880, %v887
    %v895 = vadd.f32 %v881, %v888
    %v896 = vadd.f32 %v882, %v889
    %v897 = vadd.f32 %v883, %v890
    %v898 = vadd.f32 %v884, %v891
    %v899 = vadd.f32 %v885, %v892
    %v900 = vadd.f32 %v886, %v893
    %v901 = vmul.f32 %v90, %v779
    %v902 = vmul.f32 %v91, %v779
    %v903 = vmul.f32 %v92, %v779
    %v904 = vmul.f32 %v93, %v779
    %v905 = vmul.f32 %v94, %v779
    %v906 = vmul.f32 %v95, %v779
    %v907 = vmul.f32 %v96, %v779
    %v908 = vadd.f32 %v894, %v901
    %v909 = vadd.f32 %v895, %v902
    %v910 = vadd.f32 %v896, %v903
    %v911 = vadd.f32 %v897, %v904
    %v912 = vadd.f32 %v898, %v905
    %v913 = vadd.f32 %v899, %v906
    %v914 = vadd.f32 %v900, %v907
    %v915 = vmul.f32 %v99, %v795
    %v916 = vmul.f32 %v100, %v795
    %v917 = vmul.f32 %v101, %v795
    %v918 = vmul.f32 %v102, %v795
    %v919 = vmul.f32 %v103, %v795
    %v920 = vmul.f32 %v104, %v795
    %v921 = vmul.f32 %v105, %v795
    %v922 = vadd.f32 %v908, %v915
    %v923 = vadd.f32 %v909, %v916
    %v924 = vadd.f32 %v910, %v917
    %v925 = vadd.f32 %v911, %v918
    %v926 = vadd.f32 %v912, %v919
    %v927 = vadd.f32 %v913, %v920
    %v928 = vadd.f32 %v914, %v921
    %v929 = vmax.f32 %v803, %v922
    %v930 = vmax.f32 %v804, %v923
    %v931 = vmax.f32 %v805, %v924
    %v932 = vmax.f32 %v806, %v925
    %v933 = vmax.f32 %v807, %v926
    %v934 = vmax.f32 %v808, %v927
    %v935 = vmax.f32 %v809, %v928
    %v936 = vmul.f32 %v107, %v674
    %v937 = vmul.f32 %v108, %v674
    %v938 = vmul.f32 %v109, %v674
    %v939 = vmul.f32 %v110, %v674
    %v940 = vmul.f32 %v111, %v674
    %v941 = vmul.f32 %v112, %v674
    %v942 = vmul.f32 %v113, %v674
    %v943 = vmul.f32 %v116, %v683
    %v944 = vmul.f32 %v117, %v683
    %v945 = vmul.f32 %v118, %v683
    %v946 = vmul.f32 %v119, %v683
    %v947 = vmul.f32 %v120, %v683
    %v948 = vmul.f32 %v121, %v683
    %v949 = vmul.f32 %v122, %v683
    %v950 = vadd.f32 %v936, %v943
    %v951 = vadd.f32 %v937, %v944
    %v952 = vadd.f32 %v938, %v945
    %v953 = vadd.f32 %v939, %v946
    %v954 = vadd.f32 %v940, %v947
    %v955 = vadd.f32 %v941, %v948
    %v956 = vadd.f32 %v942, %v949
    %v957 = vmul.f32 %v125, %v699
    %v958 = vmul.f32 %v126, %v699
    %v959 = vmul.f32 %v127, %v699
    %v960 = vmul.f32 %v128, %v699
    %v961 = vmul.f32 %v129, %v699
    %v962 = vmul.f32 %v130, %v699
    %v963 = vmul.f32 %v131, %v699
    %v964 = vadd.f32 %v950, %v957
    %v965 = vadd.f32 %v951, %v958
    %v966 = vadd.f32 %v952, %v959
    %v967 = vadd.f32 %v953, %v960
    %v968 = vadd.f32 %v954, %v961
    %v969 = vadd.f32 %v955, %v962
    %v970 = vadd.f32 %v956, %v963
    %v971 = vmul.f32 %v72, %v715
    %v972 = vmul.f32 %v73, %v715
    %v973 = vmul.f32 %v74, %v715
    %v974 = vmul.f32 %v75, %v715
    %v975 = vmul.f32 %v76, %v715
    %v976 = vmul.f32 %v77, %v715
    %v977 = vmul.f32 %v78, %v715
    %v978 = vadd.f32 %v964, %v971
    %v979 = vadd.f32 %v965, %v972
    %v980 = vadd.f32 %v966, %v973
    %v981 = vadd.f32 %v967, %v974
    %v982 = vadd.f32 %v968, %v975
    %v983 = vadd.f32 %v969, %v976
    %v984 = vadd.f32 %v970, %v977
    %v985 = vmul.f32 %v81, %v731
    %v986 = vmul.f32 %v82, %v731
    %v987 = vmul.f32 %v83, %v731
    %v988 = vmul.f32 %v84, %v731
    %v989 = vmul.f32 %v85, %v731
    %v990 = vmul.f32 %v86, %v731
    %v991 = vmul.f32 %v87, %v731
    %v992 = vadd.f32 %v978, %v985
    %v993 = vadd.f32 %v979, %v986
    %v994 = vadd.f32 %v980, %v987
    %v995 = vadd.f32 %v981, %v988
    %v996 = vadd.f32 %v982, %v989
    %v997 = vadd.f32 %v983, %v990
    %v998 = vadd.f32 %v984, %v991
    %v999 = vmul.f32 %v90, %v747
    %v1000 = vmul.f32 %v91, %v747
    %v1001 = vmul.f32 %v92, %v747
    %v1002 = vmul.f32 %v93, %v747
    %v1003 = vmul.f32 %v94, %v747
    %v1004 = vmul.f32 %v95, %v747
    %v1005 = vmul.f32 %v96, %v747
    %v1006 = vadd.f32 %v992, %v999
    %v1007 = vadd.f32 %v993, %v1000
    %v1008 = vadd.f32 %v994, %v1001
    %v1009 = vadd.f32 %v995, %v1002
    %v1010 = vadd.f32 %v996, %v1003
    %v1011 = vadd.f32 %v997, %v1004
    %v1012 = vadd.f32 %v998, %v1005
    %v1013 = vmul.f32 %v108, %v763
    %v1014 = vmul.f32 %v109, %v763
    %v1015 = vmul.f32 %v110, %v763
    %v1016 = vmul.f32 %v111, %v763
    %v1017 = vmul.f32 %v112, %v763
    %v1018 = vmul.f32 %v113, %v763
    %v1019 = vmul.f32 %v114, %v763
    %v1020 = vadd.f32 %v1006, %v1013
    %v1021 = vadd.f32 %v1007, %v1014
    %v1022 = vadd.f32 %v1008, %v1015
    %v1023 = vadd.f32 %v1009, %v1016
    %v1024 = vadd.f32 %v1010, %v1017
    %v1025 = vadd.f32 %v1011, %v1018
    %v1026 = vadd.f32 %v1012, %v1019
    %v1027 = vmul.f32 %v117, %v779
    %v1028 = vmul.f32 %v118, %v779
    %v1029 = vmul.f32 %v119, %v779
    %v1030 = vmul.f32 %v120, %v779
    %v1031 = vmul.f32 %v121, %v779
    %v1032 = vmul.f32 %v122, %v779
    %v1033 = vmul.f32 %v123, %v779
    %v1034 = vadd.f32 %v1020, %v1027
    %v1035 = vadd.f32 %v1021, %v1028
    %v1036 = vadd.f32 %v1022, %v1029
    %v1037 = vadd.f32 %v1023, %v1030
    %v1038 = vadd.f32 %v1024, %v1031
    %v1039 = vadd.f32 %v1025, %v1032
    %v1040 = vadd.f32 %v1026, %v1033
    %v1041 = vmul.f32 %v126, %v795
    %v1042 = vmul.f32 %v127, %v795
    %v1043 = vmul.f32 %v128, %v795
    %v1044 = vmul.f32 %v129, %v795
    %v1045 = vmul.f32 %v130, %v795
    %v1046 = vmul.f32 %v131, %v795
    %v1047 = vmul.f32 %v132, %v795
    %v1048 = vadd.f32 %v1034, %v1041
    %v1049 = vadd.f32 %v1035, %v1042
    %v1050 = vadd.f32 %v1036, %v1043
    %v1051 = vadd.f32 %v1037, %v1044
    %v1052 = vadd.f32 %v1038, %v1045
    %v1053 = vadd.f32 %v1039, %v1046
    %v1054 = vadd.f32 %v1040, %v1047
    %v1055 = vmax.f32 %v929, %v1048
    %v1056 = vmax.f32 %v930, %v1049
    %v1057 = vmax.f32 %v931, %v1050
    %v1058 = vmax.f32 %v932, %v1051
    %v1059 = vmax.f32 %v933, %v1052
    %v1060 = vmax.f32 %v934, %v1053
    %v1061 = vmax.f32 %v935, %v1054
    %v1062 = vmul.f32 %v116, %v674
    %v1063 = vmul.f32 %v117, %v674
    %v1064 = vmul.f32 %v118, %v674
    %v1065 = vmul.f32 %v119, %v674
    %v1066 = vmul.f32 %v120, %v674
    %v1067 = vmul.f32 %v121, %v674
    %v1068 = vmul.f32 %v122, %v674
    %v1069 = vmul.f32 %v125, %v683
    %v1070 = vmul.f32 %v126, %v683
    %v1071 = vmul.f32 %v127, %v683
    %v1072 = vmul.f32 %v128, %v683
    %v1073 = vmul.f32 %v129, %v683
    %v1074 = vmul.f32 %v130, %v683
    %v1075 = vmul.f32 %v131, %v683
    %v1076 = vadd.f32 %v1062, %v1069
    %v1077 = vadd.f32 %v1063, %v1070
    %v1078 = vadd.f32 %v1064, %v1071
    %v1079 = vadd.f32 %v1065, %v1072
    %v1080 = vadd.f32 %v1066, %v1073
    %v1081 = vadd.f32 %v1067, %v1074
    %v1082 = vadd.f32 %v1068, %v1075
    %v1083 = vmul.f32 %v134, %v699
    %v1084 = vmul.f32 %v135, %v699
    %v1085 = vmul.f32 %v136, %v699
    %v1086 = vmul.f32 %v137, %v699
    %v1087 = vmul.f32 %v138, %v699
    %v1088 = vmul.f32 %v139, %v699
    %v1089 = vmul.f32 %v140, %v699
    %v1090 = vadd.f32 %v1076, %v1083
    %v1091 = vadd.f32 %v1077, %v1084
    %v1092 = vadd.f32 %v1078, %v1085
    %v1093 = vadd.f32 %v1079, %v1086
    %v1094 = vadd.f32 %v1080, %v1087
    %v1095 = vadd.f32 %v1081, %v1088
    %v1096 = vadd.f32 %v1082, %v1089
    %v1097 = vmul.f32 %v81, %v715
    %v1098 = vmul.f32 %v82, %v715
    %v1099 = vmul.f32 %v83, %v715
    %v1100 = vmul.f32 %v84, %v715
    %v1101 = vmul.f32 %v85, %v715
    %v1102 = vmul.f32 %v86, %v715
    %v1103 = vmul.f32 %v87, %v715
    %v1104 = vadd.f32 %v1090, %v1097
    %v1105 = vadd.f32 %v1091, %v1098
    %v1106 = vadd.f32 %v1092, %v1099
    %v1107 = vadd.f32 %v1093, %v1100
    %v1108 = vadd.f32 %v1094, %v1101
    %v1109 = vadd.f32 %v1095, %v1102
    %v1110 = vadd.f32 %v1096, %v1103
    %v1111 = vmul.f32 %v90, %v731
    %v1112 = vmul.f32 %v91, %v731
    %v1113 = vmul.f32 %v92, %v731
    %v1114 = vmul.f32 %v93, %v731
    %v1115 = vmul.f32 %v94, %v731
    %v1116 = vmul.f32 %v95, %v731
    %v1117 = vmul.f32 %v96, %v731
    %v1118 = vadd.f32 %v1104, %v1111
    %v1119 = vadd.f32 %v1105, %v1112
    %v1120 = vadd.f32 %v1106, %v1113
    %v1121 = vadd.f32 %v1107, %v1114
    %v1122 = vadd.f32 %v1108, %v1115
    %v1123 = vadd.f32 %v1109, %v1116
    %v1124 = vadd.f32 %v1110, %v1117
    %v1125 = vmul.f32 %v99, %v747
    %v1126 = vmul.f32 %v100, %v747
    %v1127 = vmul.f32 %v101, %v747
    %v1128 = vmul.f32 %v102, %v747
    %v1129 = vmul.f32 %v103, %v747
    %v1130 = vmul.f32 %v104, %v747
    %v1131 = vmul.f32 %v105, %v747
    %v1132 = vadd.f32 %v1118, %v1125
    %v1133 = vadd.f32 %v1119, %v1126
    %v1134 = vadd.f32 %v1120, %v1127
    %v1135 = vadd.f32 %v1121, %v1128
    %v1136 = vadd.f32 %v1122, %v1129
    %v1137 = vadd.f32 %v1123, %v1130
    %v1138 = vadd.f32 %v1124, %v1131
    %v1139 = vmul.f32 %v117, %v763
    %v1140 = vmul.f32 %v118, %v763
    %v1141 = vmul.f32 %v119, %v763
    %v1142 = vmul.f32 %v120, %v763
    %v1143 = vmul.f32 %v121, %v763
    %v1144 = vmul.f32 %v122, %v763
    %v1145 = vmul.f32 %v123, %v763
    %v1146 = vadd.f32 %v1132, %v1139
    %v1147 = vadd.f32 %v1133, %v1140
    %v1148 = vadd.f32 %v1134, %v1141
    %v1149 = vadd.f32 %v1135, %v1142
    %v1150 = vadd.f32 %v1136, %v1143
    %v1151 = vadd.f32 %v1137, %v1144
    %v1152 = vadd.f32 %v1138, %v1145
    %v1153 = vmul.f32 %v126, %v779
    %v1154 = vmul.f32 %v127, %v779
    %v1155 = vmul.f32 %v128, %v779
    %v1156 = vmul.f32 %v129, %v779
    %v1157 = vmul.f32 %v130, %v779
    %v1158 = vmul.f32 %v131, %v779
    %v1159 = vmul.f32 %v132, %v779
    %v1160 = vadd.f32 %v1146, %v1153
    %v1161 = vadd.f32 %v1147, %v1154
    %v1162 = vadd.f32 %v1148, %v1155
    %v1163 = vadd.f32 %v1149, %v1156
    %v1164 = vadd.f32 %v1150, %v1157
    %v1165 = vadd.f32 %v1151, %v1158
    %v1166 = vadd.f32 %v1152, %v1159
    %v1167 = vmul.f32 %v135, %v795
    %v1168 = vmul.f32 %v136, %v795
    %v1169 = vmul.f32 %v137, %v795
    %v1170 = vmul.f32 %v138, %v795
    %v1171 = vmul.f32 %v139, %v795
    %v1172 = vmul.f32 %v140, %v795
    %v1173 = vmul.f32 %v141, %v795
    %v1174 = vadd.f32 %v1160, %v1167
    %v1175 = vadd.f32 %v1161, %v1168
    %v1176 = vadd.f32 %v1162, %v1169
    %v1177 = vadd.f32 %v1163, %v1170
    %v1178 = vadd.f32 %v1164, %v1171
    %v1179 = vadd.f32 %v1165, %v1172
    %v1180 = vadd.f32 %v1166, %v1173
    %v1181 = vmax.f32 %v1055, %v1174
    %v1182 = vmax.f32 %v1056, %v1175
    %v1183 = vmax.f32 %v1057, %v1176
    %v1184 = vmax.f32 %v1058, %v1177
    %v1185 = vmax.f32 %v1059, %v1178
    %v1186 = vmax.f32 %v1060, %v1179
    %v1187 = vmax.f32 %v1061, %v1180
    %s1188 = sld [smem:[#allocation4 + $0x1]]
    %v1189 = vstv %s1188
    %v1190 = vadd.f32 %v1181, %v1189
    %v1191 = vadd.f32 %v1182, %v1189
    %v1192 = vadd.f32 %v1183, %v1189
    %v1193 = vadd.f32 %v1184, %v1189
    %v1194 = vadd.f32 %v1185, %v1189
    %v1195 = vadd.f32 %v1186, %v1189
    %v1196 = vadd.f32 %v1187, %v1189
    %v1197 = vmax.f32 %v1190, 0.0
    %v1198 = vmax.f32 %v1191, 0.0
    %v1199 = vmax.f32 %v1192, 0.0
    %v1200 = vmax.f32 %v1193, 0.0
    %v1201 = vmax.f32 %v1194, 0.0
    %v1202 = vmax.f32 %v1195, 0.0
    %v1203 = vmax.f32 %v1196, 0.0
    %vm1204 = vcmask 457728
    %v1206 = vsel %vm1204, %v55, 0
    %v1209 = vsel %vm1204, %v56, 0
    %v1212 = vsel %vm1204, %v57, 0
    %v1215 = vsel %vm1204, %v58, 0
    %1217 = vmatprep.subr.mxu0 0.0
    %1218 = vmatpush1.msra.mxu0 %v1197
    %1219 = vmatprep.subr.mxu0 0.0
    %1220 = vmatpush1.msra.mxu0 %v1198
    %1221 = vmatprep.subr.mxu0 0.0
    %1222 = vmatpush1.msra.mxu0 %v1199
    %1223 = vmatprep.subr.mxu0 0.0
    %1224 = vmatpush1.msra.mxu0 %v1200
    %1225 = vmatprep.subr.mxu0 0.0
    %1226 = vmatpush1.msra.mxu0 %v1201
    %1227 = vmatprep.subr.mxu0 0.0
    %1228 = vmatpush1.msra.mxu0 %v1202
    %1229 = vmatprep.subr.mxu0 0.0
    %1230 = vmatpush1.msra.mxu0 %v1203
    %1231 = vmatprep.subr.mxu0 0.0
    %1232 = vmatpush1.msra.mxu0 0.0
    %1233 = vmatprep.subr.mxu0 0.0
    %1234 = vmatpush1.msra.mxu0 0.0
    %1235 = vmatprep.subr.mxu0 0.0
    %1236 = vmatpush1.msra.mxu0 0.0
    %1237 = vmatprep.subr.mxu0 0.0
    %1238 = vmatpush1.msra.mxu0 0.0
    %1239 = vmatprep.subr.mxu0 0.0
    %1240 = vmatpush1.msra.mxu0 0.0
    %1241 = vmatprep.subr.mxu0 0.0
    %1242 = vmatpush1.msra.mxu0 0.0
    %1243 = vmatprep.subr.mxu0 0.0
    %1244 = vmatpush1.msra.mxu0 0.0
    %1245 = vmatprep.subr.mxu0 0.0
    %1246 = vmatpush1.msra.mxu0 0.0
    %1247 = vmatprep.subr.mxu0 0.0
    %1248 = vmatpush1.msra.mxu0 0.0
    %1249 = vmatprep.subr.mxu0 0.0
    %1250 = vmatpush1.msra.mxu0 0.0
    %1251 = vmatprep.subr.mxu0 0.0
    %1252 = vmatpush1.msra.mxu0 0.0
    %1253 = vmatprep.subr.mxu0 0.0
    %1254 = vmatpush1.msra.mxu0 0.0
    %1255 = vmatprep.subr.mxu0 0.0
    %1256 = vmatpush1.msra.mxu0 0.0
    %1257 = vmatprep.subr.mxu0 0.0
    %1258 = vmatpush1.msra.mxu0 0.0
    %1259 = vmatprep.subr.mxu0 0.0
    %1260 = vmatpush1.msra.mxu0 0.0
    %1261 = vmatprep.subr.mxu0 0.0
    %1262 = vmatpush1.msra.mxu0 0.0
    %1263 = vmatprep.subr.mxu0 0.0
    %1264 = vmatpush1.msra.mxu0 0.0
    %1265 = vmatprep.subr.mxu0 0.0
    %1266 = vmatpush1.msra.mxu0 0.0
    %1267 = vmatprep.subr.mxu0 0.0
    %1268 = vmatpush1.msra.mxu0 0.0
    %1269 = vmatprep.subr.mxu0 0.0
    %1270 = vmatpush1.msra.mxu0 0.0
    %1271 = vmatprep.subr.mxu0 0.0
    %1272 = vmatpush1.msra.mxu0 0.0
    %1273 = vmatprep.subr.mxu0 0.0
    %1274 = vmatpush1.msra.mxu0 0.0
    %1275 = vmatprep.subr.mxu0 0.0
    %1276 = vmatpush1.msra.mxu0 0.0
    %1277 = vmatprep.subr.mxu0 0.0
    %1278 = vmatpush1.msra.mxu0 0.0
    %1279 = vmatprep.subr.mxu0 0.0
    %1280 = vmatpush1.msra.mxu0 0.0
    %1281 = vmatprep.mubr.f32.mxu0 0.0
    %1282 = vmatmul.mubr.f32.gmra.mrb[0].mxu0 %v1206
    %v1283 = vpop.f32.mrb[0].mxu0
    %v1284 = vadd.f32 0.0, %v1283
    %v1285 = vpop.f32.mrb[0].mxu0
    %1286 = vmatprep.mubr.f32.mxu0 0.0
    %1287 = vmatmul.mubr.f32.gmra.mrb[0].mxu0 %v1209
    %v1288 = vpop.f32.mrb[0].mxu0
    %v1289 = vadd.f32 0.0, %v1288
    %v1290 = vpop.f32.mrb[0].mxu0
    %1291 = vmatprep.mubr.f32.mxu0 0.0
    %1292 = vmatmul.mubr.f32.gmra.mrb[0].mxu0 %v1212
    %v1293 = vpop.f32.mrb[0].mxu0
    %v1294 = vadd.f32 0.0, %v1293
    %v1295 = vpop.f32.mrb[0].mxu0
    %1296 = vmatprep.mubr.f32.mxu0 0.0
    %1297 = vmatmul.mubr.f32.gmra.mrb[0].mxu0 %v1215
    %v1298 = vpop.f32.mrb[0].mxu0
    %v1299 = vadd.f32 0.0, %v1298
    %v1300 = vpop.f32.mrb[0].mxu0
    %1301 = vdwg.mxu0
    %v1303 = vsel %vm1204, %v51, 0
    %v1306 = vsel %vm1204, %v52, 0
    %v1309 = vsel %vm1204, %v53, 0
    %v1312 = vsel %vm1204, %v54, 0
    %1314 = vmatprep.subr.mxu0 0.0
    %1315 = vmatpush1.msra.mxu0 %v666
    %1316 = vmatprep.subr.mxu0 0.0
    %1317 = vmatpush1.msra.mxu0 %v667
    %1318 = vmatprep.subr.mxu0 0.0
    %1319 = vmatpush1.msra.mxu0 %v668
    %1320 = vmatprep.subr.mxu0 0.0
    %1321 = vmatpush1.msra.mxu0 %v669
    %1322 = vmatprep.subr.mxu0 0.0
    %1323 = vmatpush1.msra.mxu0 %v670
    %1324 = vmatprep.subr.mxu0 0.0
    %1325 = vmatpush1.msra.mxu0 %v671
    %1326 = vmatprep.subr.mxu0 0.0
    %1327 = vmatpush1.msra.mxu0 %v672
    %1328 = vmatprep.subr.mxu0 0.0
    %1329 = vmatpush1.msra.mxu0 0.0
    %1330 = vmatprep.subr.mxu0 0.0
    %1331 = vmatpush1.msra.mxu0 0.0
    %1332 = vmatprep.subr.mxu0 0.0
    %1333 = vmatpush1.msra.mxu0 0.0
    %1334 = vmatprep.subr.mxu0 0.0
    %1335 = vmatpush1.msra.mxu0 0.0
    %1336 = vmatprep.subr.mxu0 0.0
    %1337 = vmatpush1.msra.mxu0 0.0
    %1338 = vmatprep.subr.mxu0 0.0
    %1339 = vmatpush1.msra.mxu0 0.0
    %1340 = vmatprep.subr.mxu0 0.0
    %1341 = vmatpush1.msra.mxu0 0.0
    %1342 = vmatprep.subr.mxu0 0.0
    %1343 = vmatpush1.msra.mxu0 0.0
    %1344 = vmatprep.subr.mxu0 0.0
    %1345 = vmatpush1.msra.mxu0 0.0
    %1346 = vmatprep.subr.mxu0 0.0
    %1347 = vmatpush1.msra.mxu0 0.0
    %1348 = vmatprep.subr.mxu0 0.0
    %1349 = vmatpush1.msra.mxu0 0.0
    %1350 = vmatprep.subr.mxu0 0.0
    %1351 = vmatpush1.msra.mxu0 0.0
    %1352 = vmatprep.subr.mxu0 0.0
    %1353 = vmatpush1.msra.mxu0 0.0
    %1354 = vmatprep.subr.mxu0 0.0
    %1355 = vmatpush1.msra.mxu0 0.0
    %1356 = vmatprep.subr.mxu0 0.0
    %1357 = vmatpush1.msra.mxu0 0.0
    %1358 = vmatprep.subr.mxu0 0.0
    %1359 = vmatpush1.msra.mxu0 0.0
    %1360 = vmatprep.subr.mxu0 0.0
    %1361 = vmatpush1.msra.mxu0 0.0
    %1362 = vmatprep.subr.mxu0 0.0
    %1363 = vmatpush1.msra.mxu0 0.0
    %1364 = vmatprep.subr.mxu0 0.0
    %1365 = vmatpush1.msra.mxu0 0.0
    %1366 = vmatprep.subr.mxu0 0.0
    %1367 = vmatpush1.msra.mxu0 0.0
    %1368 = vmatprep.subr.mxu0 0.0
    %1369 = vmatpush1.msra.mxu0 0.0
    %1370 = vmatprep.subr.mxu0 0.0
    %1371 = vmatpush1.msra.mxu0 0.0
    %1372 = vmatprep.subr.mxu0 0.0
    %1373 = vmatpush1.msra.mxu0 0.0
    %1374 = vmatprep.subr.mxu0 0.0
    %1375 = vmatpush1.msra.mxu0 0.0
    %1376 = vmatprep.subr.mxu0 0.0
    %1377 = vmatpush1.msra.mxu0 0.0
    %1378 = vmatprep.mubr.f32.mxu0 0.0
    %1379 = vmatmul.mubr.f32.gmra.mrb[0].mxu0 %v1303
    %v1380 = vpop.f32.mrb[0].mxu0
    %v1381 = vadd.f32 %v1284, %v1380
    %v1382 = vpop.f32.mrb[0].mxu0
    %1383 = vmatprep.mubr.f32.mxu0 0.0
    %1384 = vmatmul.mubr.f32.gmra.mrb[0].mxu0 %v1306
    %v1385 = vpop.f32.mrb[0].mxu0
    %v1386 = vadd.f32 %v1289, %v1385
    %v1387 = vpop.f32.mrb[0].mxu0
    %1388 = vmatprep.mubr.f32.mxu0 0.0
    %1389 = vmatmul.mubr.f32.gmra.mrb[0].mxu0 %v1309
    %v1390 = vpop.f32.mrb[0].mxu0
    %v1391 = vadd.f32 %v1294, %v1390
    %v1392 = vpop.f32.mrb[0].mxu0
    %1393 = vmatprep.mubr.f32.mxu0 0.0
    %1394 = vmatmul.mubr.f32.gmra.mrb[0].mxu0 %v1312
    %v1395 = vpop.f32.mrb[0].mxu0
    %v1396 = vadd.f32 %v1299, %v1395
    %v1397 = vpop.f32.mrb[0].mxu0
    %1398 = vdwg.mxu0
    %s1399 = sld [smem:[#allocation2 + $0x12]]
    %v1400 = vstv %s1399
    %v1401 = vmul.f32 %v71, %v1400
    %v1402 = vmul.f32 %v72, %v1400
    %v1403 = vmul.f32 %v73, %v1400
    %v1404 = vmul.f32 %v74, %v1400
    %v1405 = vmul.f32 %v75, %v1400
    %v1406 = vmul.f32 %v76, %v1400
    %v1407 = vmul.f32 %v77, %v1400
    %s1408 = sld [smem:[#allocation2 + $0x13]]
    %v1409 = vstv %s1408
    %v1410 = vmul.f32 %v80, %v1409
    %v1411 = vmul.f32 %v81, %v1409
    %v1412 = vmul.f32 %v82, %v1409
    %v1413 = vmul.f32 %v83, %v1409
    %v1414 = vmul.f32 %v84, %v1409
    %v1415 = vmul.f32 %v85, %v1409
    %v1416 = vmul.f32 %v86, %v1409
    %v1417 = vadd.f32 %v1401, %v1410
    %v1418 = vadd.f32 %v1402, %v1411
    %v1419 = vadd.f32 %v1403, %v1412
    %v1420 = vadd.f32 %v1404, %v1413
    %v1421 = vadd.f32 %v1405, %v1414
    %v1422 = vadd.f32 %v1406, %v1415
    %v1423 = vadd.f32 %v1407, %v1416
    %s1424 = sld [smem:[#allocation2 + $0x14]]
    %v1425 = vstv %s1424
    %v1426 = vmul.f32 %v89, %v1425
    %v1427 = vmul.f32 %v90, %v1425
    %v1428 = vmul.f32 %v91, %v1425
    %v1429 = vmul.f32 %v92, %v1425
    %v1430 = vmul.f32 %v93, %v1425
    %v1431 = vmul.f32 %v94, %v1425
    %v1432 = vmul.f32 %v95, %v1425
    %v1433 = vadd.f32 %v1417, %v1426
    %v1434 = vadd.f32 %v1418, %v1427
    %v1435 = vadd.f32 %v1419, %v1428
    %v1436 = vadd.f32 %v1420, %v1429
    %v1437 = vadd.f32 %v1421, %v1430
    %v1438 = vadd.f32 %v1422, %v1431
    %v1439 = vadd.f32 %v1423, %v1432
    %s1440 = sld [smem:[#allocation2 + $0x15]]
    %v1441 = vstv %s1440
    %v1442 = vmul.f32 %v107, %v1441
    %v1443 = vmul.f32 %v108, %v1441
    %v1444 = vmul.f32 %v109, %v1441
    %v1445 = vmul.f32 %v110, %v1441
    %v1446 = vmul.f32 %v111, %v1441
    %v1447 = vmul.f32 %v112, %v1441
    %v1448 = vmul.f32 %v113, %v1441
    %v1449 = vadd.f32 %v1433, %v1442
    %v1450 = vadd.f32 %v1434, %v1443
    %v1451 = vadd.f32 %v1435, %v1444
    %v1452 = vadd.f32 %v1436, %v1445
    %v1453 = vadd.f32 %v1437, %v1446
    %v1454 = vadd.f32 %v1438, %v1447
    %v1455 = vadd.f32 %v1439, %v1448
    %s1456 = sld [smem:[#allocation2 + $0x16]]
    %v1457 = vstv %s1456
    %v1458 = vmul.f32 %v116, %v1457
    %v1459 = vmul.f32 %v117, %v1457
    %v1460 = vmul.f32 %v118, %v1457
    %v1461 = vmul.f32 %v119, %v1457
    %v1462 = vmul.f32 %v120, %v1457
    %v1463 = vmul.f32 %v121, %v1457
    %v1464 = vmul.f32 %v122, %v1457
    %v1465 = vadd.f32 %v1449, %v1458
    %v1466 = vadd.f32 %v1450, %v1459
    %v1467 = vadd.f32 %v1451, %v1460
    %v1468 = vadd.f32 %v1452, %v1461
    %v1469 = vadd.f32 %v1453, %v1462
    %v1470 = vadd.f32 %v1454, %v1463
    %v1471 = vadd.f32 %v1455, %v1464
    %s1472 = sld [smem:[#allocation2 + $0x17]]
    %v1473 = vstv %s1472
    %v1474 = vmul.f32 %v125, %v1473
    %v1475 = vmul.f32 %v126, %v1473
    %v1476 = vmul.f32 %v127, %v1473
    %v1477 = vmul.f32 %v128, %v1473
    %v1478 = vmul.f32 %v129, %v1473
    %v1479 = vmul.f32 %v130, %v1473
    %v1480 = vmul.f32 %v131, %v1473
    %v1481 = vadd.f32 %v1465, %v1474
    %v1482 = vadd.f32 %v1466, %v1475
    %v1483 = vadd.f32 %v1467, %v1476
    %v1484 = vadd.f32 %v1468, %v1477
    %v1485 = vadd.f32 %v1469, %v1478
    %v1486 = vadd.f32 %v1470, %v1479
    %v1487 = vadd.f32 %v1471, %v1480
    %s1488 = sld [smem:[#allocation2 + $0x18]]
    %v1489 = vstv %s1488
    %v1490 = vmul.f32 %v72, %v1489
    %v1491 = vmul.f32 %v73, %v1489
    %v1492 = vmul.f32 %v74, %v1489
    %v1493 = vmul.f32 %v75, %v1489
    %v1494 = vmul.f32 %v76, %v1489
    %v1495 = vmul.f32 %v77, %v1489
    %v1496 = vmul.f32 %v78, %v1489
    %v1497 = vadd.f32 %v1481, %v1490
    %v1498 = vadd.f32 %v1482, %v1491
    %v1499 = vadd.f32 %v1483, %v1492
    %v1500 = vadd.f32 %v1484, %v1493
    %v1501 = vadd.f32 %v1485, %v1494
    %v1502 = vadd.f32 %v1486, %v1495
    %v1503 = vadd.f32 %v1487, %v1496
    %s1504 = sld [smem:[#allocation2 + $0x19]]
    %v1505 = vstv %s1504
    %v1506 = vmul.f32 %v81, %v1505
    %v1507 = vmul.f32 %v82, %v1505
    %v1508 = vmul.f32 %v83, %v1505
    %v1509 = vmul.f32 %v84, %v1505
    %v1510 = vmul.f32 %v85, %v1505
    %v1511 = vmul.f32 %v86, %v1505
    %v1512 = vmul.f32 %v87, %v1505
    %v1513 = vadd.f32 %v1497, %v1506
    %v1514 = vadd.f32 %v1498, %v1507
    %v1515 = vadd.f32 %v1499, %v1508
    %v1516 = vadd.f32 %v1500, %v1509
    %v1517 = vadd.f32 %v1501, %v1510
    %v1518 = vadd.f32 %v1502, %v1511
    %v1519 = vadd.f32 %v1503, %v1512
    %s1520 = sld [smem:[#allocation2 + $0x1a]]
    %v1521 = vstv %s1520
    %v1522 = vmul.f32 %v90, %v1521
    %v1523 = vmul.f32 %v91, %v1521
    %v1524 = vmul.f32 %v92, %v1521
    %v1525 = vmul.f32 %v93, %v1521
    %v1526 = vmul.f32 %v94, %v1521
    %v1527 = vmul.f32 %v95, %v1521
    %v1528 = vmul.f32 %v96, %v1521
    %v1529 = vadd.f32 %v1513, %v1522
    %v1530 = vadd.f32 %v1514, %v1523
    %v1531 = vadd.f32 %v1515, %v1524
    %v1532 = vadd.f32 %v1516, %v1525
    %v1533 = vadd.f32 %v1517, %v1526
    %v1534 = vadd.f32 %v1518, %v1527
    %v1535 = vadd.f32 %v1519, %v1528
    %v1536 = vmul.f32 %v80, %v1400
    %v1537 = vmul.f32 %v81, %v1400
    %v1538 = vmul.f32 %v82, %v1400
    %v1539 = vmul.f32 %v83, %v1400
    %v1540 = vmul.f32 %v84, %v1400
    %v1541 = vmul.f32 %v85, %v1400
    %v1542 = vmul.f32 %v86, %v1400
    %v1543 = vmul.f32 %v89, %v1409
    %v1544 = vmul.f32 %v90, %v1409
    %v1545 = vmul.f32 %v91, %v1409
    %v1546 = vmul.f32 %v92, %v1409
    %v1547 = vmul.f32 %v93, %v1409
    %v1548 = vmul.f32 %v94, %v1409
    %v1549 = vmul.f32 %v95, %v1409
    %v1550 = vadd.f32 %v1536, %v1543
    %v1551 = vadd.f32 %v1537, %v1544
    %v1552 = vadd.f32 %v1538, %v1545
    %v1553 = vadd.f32 %v1539, %v1546
    %v1554 = vadd.f32 %v1540, %v1547
    %v1555 = vadd.f32 %v1541, %v1548
    %v1556 = vadd.f32 %v1542, %v1549
    %v1557 = vmul.f32 %v98, %v1425
    %v1558 = vmul.f32 %v99, %v1425
    %v1559 = vmul.f32 %v100, %v1425
    %v1560 = vmul.f32 %v101, %v1425
    %v1561 = vmul.f32 %v102, %v1425
    %v1562 = vmul.f32 %v103, %v1425
    %v1563 = vmul.f32 %v104, %v1425
    %v1564 = vadd.f32 %v1550, %v1557
    %v1565 = vadd.f32 %v1551, %v1558
    %v1566 = vadd.f32 %v1552, %v1559
    %v1567 = vadd.f32 %v1553, %v1560
    %v1568 = vadd.f32 %v1554, %v1561
    %v1569 = vadd.f32 %v1555, %v1562
    %v1570 = vadd.f32 %v1556, %v1563
    %v1571 = vmul.f32 %v116, %v1441
    %v1572 = vmul.f32 %v117, %v1441
    %v1573 = vmul.f32 %v118, %v1441
    %v1574 = vmul.f32 %v119, %v1441
    %v1575 = vmul.f32 %v120, %v1441
    %v1576 = vmul.f32 %v121, %v1441
    %v1577 = vmul.f32 %v122, %v1441
    %v1578 = vadd.f32 %v1564, %v1571
    %v1579 = vadd.f32 %v1565, %v1572
    %v1580 = vadd.f32 %v1566, %v1573
    %v1581 = vadd.f32 %v1567, %v1574
    %v1582 = vadd.f32 %v1568, %v1575
    %v1583 = vadd.f32 %v1569, %v1576
    %v1584 = vadd.f32 %v1570, %v1577
    %v1585 = vmul.f32 %v125, %v1457
    %v1586 = vmul.f32 %v126, %v1457
    %v1587 = vmul.f32 %v127, %v1457
    %v1588 = vmul.f32 %v128, %v1457
    %v1589 = vmul.f32 %v129, %v1457
    %v1590 = vmul.f32 %v130, %v1457
    %v1591 = vmul.f32 %v131, %v1457
    %v1592 = vadd.f32 %v1578, %v1585
    %v1593 = vadd.f32 %v1579, %v1586
    %v1594 = vadd.f32 %v1580, %v1587
    %v1595 = vadd.f32 %v1581, %v1588
    %v1596 = vadd.f32 %v1582, %v1589
    %v1597 = vadd.f32 %v1583, %v1590
    %v1598 = vadd.f32 %v1584, %v1591
    %v1599 = vmul.f32 %v134, %v1473
    %v1600 = vmul.f32 %v135, %v1473
    %v1601 = vmul.f32 %v136, %v1473
    %v1602 = vmul.f32 %v137, %v1473
    %v1603 = vmul.f32 %v138, %v1473
    %v1604 = vmul.f32 %v139, %v1473
    %v1605 = vmul.f32 %v140, %v1473
    %v1606 = vadd.f32 %v1592, %v1599
    %v1607 = vadd.f32 %v1593, %v1600
    %v1608 = vadd.f32 %v1594, %v1601
    %v1609 = vadd.f32 %v1595, %v1602
    %v1610 = vadd.f32 %v1596, %v1603
    %v1611 = vadd.f32 %v1597, %v1604
    %v1612 = vadd.f32 %v1598, %v1605
    %v1613 = vmul.f32 %v81, %v1489
    %v1614 = vmul.f32 %v82, %v1489
    %v1615 = vmul.f32 %v83, %v1489
    %v1616 = vmul.f32 %v84, %v1489
    %v1617 = vmul.f32 %v85, %v1489
    %v1618 = vmul.f32 %v86, %v1489
    %v1619 = vmul.f32 %v87, %v1489
    %v1620 = vadd.f32 %v1606, %v1613
    %v1621 = vadd.f32 %v1607, %v1614
    %v1622 = vadd.f32 %v1608, %v1615
    %v1623 = vadd.f32 %v1609, %v1616
    %v1624 = vadd.f32 %v1610, %v1617
    %v1625 = vadd.f32 %v1611, %v1618
    %v1626 = vadd.f32 %v1612, %v1619
    %v1627 = vmul.f32 %v90, %v1505
    %v1628 = vmul.f32 %v91, %v1505
    %v1629 = vmul.f32 %v92, %v1505
    %v1630 = vmul.f32 %v93, %v1505
    %v1631 = vmul.f32 %v94, %v1505
    %v1632 = vmul.f32 %v95, %v1505
    %v1633 = vmul.f32 %v96, %v1505
    %v1634 = vadd.f32 %v1620, %v1627
    %v1635 = vadd.f32 %v1621, %v1628
    %v1636 = vadd.f32 %v1622, %v1629
    %v1637 = vadd.f32 %v1623, %v1630
    %v1638 = vadd.f32 %v1624, %v1631
    %v1639 = vadd.f32 %v1625, %v1632
    %v1640 = vadd.f32 %v1626, %v1633
    %v1641 = vmul.f32 %v99, %v1521
    %v1642 = vmul.f32 %v100, %v1521
    %v1643 = vmul.f32 %v101, %v1521
    %v1644 = vmul.f32 %v102, %v1521
    %v1645 = vmul.f32 %v103, %v1521
    %v1646 = vmul.f32 %v104, %v1521
    %v1647 = vmul.f32 %v105, %v1521
    %v1648 = vadd.f32 %v1634, %v1641
    %v1649 = vadd.f32 %v1635, %v1642
    %v1650 = vadd.f32 %v1636, %v1643
    %v1651 = vadd.f32 %v1637, %v1644
    %v1652 = vadd.f32 %v1638, %v1645
    %v1653 = vadd.f32 %v1639, %v1646
    %v1654 = vadd.f32 %v1640, %v1647
    %v1655 = vmax.f32 %v1529, %v1648
    %v1656 = vmax.f32 %v1530, %v1649
    %v1657 = vmax.f32 %v1531, %v1650
    %v1658 = vmax.f32 %v1532, %v1651
    %v1659 = vmax.f32 %v1533, %v1652
    %v1660 = vmax.f32 %v1534, %v1653
    %v1661 = vmax.f32 %v1535, %v1654
    %v1662 = vmul.f32 %v107, %v1400
    %v1663 = vmul.f32 %v108, %v1400
    %v1664 = vmul.f32 %v109, %v1400
    %v1665 = vmul.f32 %v110, %v1400
    %v1666 = vmul.f32 %v111, %v1400
    %v1667 = vmul.f32 %v112, %v1400
    %v1668 = vmul.f32 %v113, %v1400
    %v1669 = vmul.f32 %v116, %v1409
    %v1670 = vmul.f32 %v117, %v1409
    %v1671 = vmul.f32 %v118, %v1409
    %v1672 = vmul.f32 %v119, %v1409
    %v1673 = vmul.f32 %v120, %v1409
    %v1674 = vmul.f32 %v121, %v1409
    %v1675 = vmul.f32 %v122, %v1409
    %v1676 = vadd.f32 %v1662, %v1669
    %v1677 = vadd.f32 %v1663, %v1670
    %v1678 = vadd.f32 %v1664, %v1671
    %v1679 = vadd.f32 %v1665, %v1672
    %v1680 = vadd.f32 %v1666, %v1673
    %v1681 = vadd.f32 %v1667, %v1674
    %v1682 = vadd.f32 %v1668, %v1675
    %v1683 = vmul.f32 %v125, %v1425
    %v1684 = vmul.f32 %v126, %v1425
    %v1685 = vmul.f32 %v127, %v1425
    %v1686 = vmul.f32 %v128, %v1425
    %v1687 = vmul.f32 %v129, %v1425
    %v1688 = vmul.f32 %v130, %v1425
    %v1689 = vmul.f32 %v131, %v1425
    %v1690 = vadd.f32 %v1676, %v1683
    %v1691 = vadd.f32 %v1677, %v1684
    %v1692 = vadd.f32 %v1678, %v1685
    %v1693 = vadd.f32 %v1679, %v1686
    %v1694 = vadd.f32 %v1680, %v1687
    %v1695 = vadd.f32 %v1681, %v1688
    %v1696 = vadd.f32 %v1682, %v1689
    %v1697 = vmul.f32 %v72, %v1441
    %v1698 = vmul.f32 %v73, %v1441
    %v1699 = vmul.f32 %v74, %v1441
    %v1700 = vmul.f32 %v75, %v1441
    %v1701 = vmul.f32 %v76, %v1441
    %v1702 = vmul.f32 %v77, %v1441
    %v1703 = vmul.f32 %v78, %v1441
    %v1704 = vadd.f32 %v1690, %v1697
    %v1705 = vadd.f32 %v1691, %v1698
    %v1706 = vadd.f32 %v1692, %v1699
    %v1707 = vadd.f32 %v1693, %v1700
    %v1708 = vadd.f32 %v1694, %v1701
    %v1709 = vadd.f32 %v1695, %v1702
    %v1710 = vadd.f32 %v1696, %v1703
    %v1711 = vmul.f32 %v81, %v1457
    %v1712 = vmul.f32 %v82, %v1457
    %v1713 = vmul.f32 %v83, %v1457
    %v1714 = vmul.f32 %v84, %v1457
    %v1715 = vmul.f32 %v85, %v1457
    %v1716 = vmul.f32 %v86, %v1457
    %v1717 = vmul.f32 %v87, %v1457
    %v1718 = vadd.f32 %v1704, %v1711
    %v1719 = vadd.f32 %v1705, %v1712
    %v1720 = vadd.f32 %v1706, %v1713
    %v1721 = vadd.f32 %v1707, %v1714
    %v1722 = vadd.f32 %v1708, %v1715
    %v1723 = vadd.f32 %v1709, %v1716
    %v1724 = vadd.f32 %v1710, %v1717
    %v1725 = vmul.f32 %v90, %v1473
    %v1726 = vmul.f32 %v91, %v1473
    %v1727 = vmul.f32 %v92, %v1473
    %v1728 = vmul.f32 %v93, %v1473
    %v1729 = vmul.f32 %v94, %v1473
    %v1730 = vmul.f32 %v95, %v1473
    %v1731 = vmul.f32 %v96, %v1473
    %v1732 = vadd.f32 %v1718, %v1725
    %v1733 = vadd.f32 %v1719, %v1726
    %v1734 = vadd.f32 %v1720, %v1727
    %v1735 = vadd.f32 %v1721, %v1728
    %v1736 = vadd.f32 %v1722, %v1729
    %v1737 = vadd.f32 %v1723, %v1730
    %v1738 = vadd.f32 %v1724, %v1731
    %v1739 = vmul.f32 %v108, %v1489
    %v1740 = vmul.f32 %v109, %v1489
    %v1741 = vmul.f32 %v110, %v1489
    %v1742 = vmul.f32 %v111, %v1489
    %v1743 = vmul.f32 %v112, %v1489
    %v1744 = vmul.f32 %v113, %v1489
    %v1745 = vmul.f32 %v114, %v1489
    %v1746 = vadd.f32 %v1732, %v1739
    %v1747 = vadd.f32 %v1733, %v1740
    %v1748 = vadd.f32 %v1734, %v1741
    %v1749 = vadd.f32 %v1735, %v1742
    %v1750 = vadd.f32 %v1736, %v1743
    %v1751 = vadd.f32 %v1737, %v1744
    %v1752 = vadd.f32 %v1738, %v1745
    %v1753 = vmul.f32 %v117, %v1505
    %v1754 = vmul.f32 %v118, %v1505
    %v1755 = vmul.f32 %v119, %v1505
    %v1756 = vmul.f32 %v120, %v1505
    %v1757 = vmul.f32 %v121, %v1505
    %v1758 = vmul.f32 %v122, %v1505
    %v1759 = vmul.f32 %v123, %v1505
    %v1760 = vadd.f32 %v1746, %v1753
    %v1761 = vadd.f32 %v1747, %v1754
    %v1762 = vadd.f32 %v1748, %v1755
    %v1763 = vadd.f32 %v1749, %v1756
    %v1764 = vadd.f32 %v1750, %v1757
    %v1765 = vadd.f32 %v1751, %v1758
    %v1766 = vadd.f32 %v1752, %v1759
    %v1767 = vmul.f32 %v126, %v1521
    %v1768 = vmul.f32 %v127, %v1521
    %v1769 = vmul.f32 %v128, %v1521
    %v1770 = vmul.f32 %v129, %v1521
    %v1771 = vmul.f32 %v130, %v1521
    %v1772 = vmul.f32 %v131, %v1521
    %v1773 = vmul.f32 %v132, %v1521
    %v1774 = vadd.f32 %v1760, %v1767
    %v1775 = vadd.f32 %v1761, %v1768
    %v1776 = vadd.f32 %v1762, %v1769
    %v1777 = vadd.f32 %v1763, %v1770
    %v1778 = vadd.f32 %v1764, %v1771
    %v1779 = vadd.f32 %v1765, %v1772
    %v1780 = vadd.f32 %v1766, %v1773
    %v1781 = vmax.f32 %v1655, %v1774
    %v1782 = vmax.f32 %v1656, %v1775
    %v1783 = vmax.f32 %v1657, %v1776
    %v1784 = vmax.f32 %v1658, %v1777
    %v1785 = vmax.f32 %v1659, %v1778
    %v1786 = vmax.f32 %v1660, %v1779
    %v1787 = vmax.f32 %v1661, %v1780
    %v1788 = vmul.f32 %v116, %v1400
    %v1789 = vmul.f32 %v117, %v1400
    %v1790 = vmul.f32 %v118, %v1400
    %v1791 = vmul.f32 %v119, %v1400
    %v1792 = vmul.f32 %v120, %v1400
    %v1793 = vmul.f32 %v121, %v1400
    %v1794 = vmul.f32 %v122, %v1400
    %v1795 = vmul.f32 %v125, %v1409
    %v1796 = vmul.f32 %v126, %v1409
    %v1797 = vmul.f32 %v127, %v1409
    %v1798 = vmul.f32 %v128, %v1409
    %v1799 = vmul.f32 %v129, %v1409
    %v1800 = vmul.f32 %v130, %v1409
    %v1801 = vmul.f32 %v131, %v1409
    %v1802 = vadd.f32 %v1788, %v1795
    %v1803 = vadd.f32 %v1789, %v1796
    %v1804 = vadd.f32 %v1790, %v1797
    %v1805 = vadd.f32 %v1791, %v1798
    %v1806 = vadd.f32 %v1792, %v1799
    %v1807 = vadd.f32 %v1793, %v1800
    %v1808 = vadd.f32 %v1794, %v1801
    %v1809 = vmul.f32 %v134, %v1425
    %v1810 = vmul.f32 %v135, %v1425
    %v1811 = vmul.f32 %v136, %v1425
    %v1812 = vmul.f32 %v137, %v1425
    %v1813 = vmul.f32 %v138, %v1425
    %v1814 = vmul.f32 %v139, %v1425
    %v1815 = vmul.f32 %v140, %v1425
    %v1816 = vadd.f32 %v1802, %v1809
    %v1817 = vadd.f32 %v1803, %v1810
    %v1818 = vadd.f32 %v1804, %v1811
    %v1819 = vadd.f32 %v1805, %v1812
    %v1820 = vadd.f32 %v1806, %v1813
    %v1821 = vadd.f32 %v1807, %v1814
    %v1822 = vadd.f32 %v1808, %v1815
    %v1823 = vmul.f32 %v81, %v1441
    %v1824 = vmul.f32 %v82, %v1441
    %v1825 = vmul.f32 %v83, %v1441
    %v1826 = vmul.f32 %v84, %v1441
    %v1827 = vmul.f32 %v85, %v1441
    %v1828 = vmul.f32 %v86, %v1441
    %v1829 = vmul.f32 %v87, %v1441
    %v1830 = vadd.f32 %v1816, %v1823
    %v1831 = vadd.f32 %v1817, %v1824
    %v1832 = vadd.f32 %v1818, %v1825
    %v1833 = vadd.f32 %v1819, %v1826
    %v1834 = vadd.f32 %v1820, %v1827
    %v1835 = vadd.f32 %v1821, %v1828
    %v1836 = vadd.f32 %v1822, %v1829
    %v1837 = vmul.f32 %v90, %v1457
    %v1838 = vmul.f32 %v91, %v1457
    %v1839 = vmul.f32 %v92, %v1457
    %v1840 = vmul.f32 %v93, %v1457
    %v1841 = vmul.f32 %v94, %v1457
    %v1842 = vmul.f32 %v95, %v1457
    %v1843 = vmul.f32 %v96, %v1457
    %v1844 = vadd.f32 %v1830, %v1837
    %v1845 = vadd.f32 %v1831, %v1838
    %v1846 = vadd.f32 %v1832, %v1839
    %v1847 = vadd.f32 %v1833, %v1840
    %v1848 = vadd.f32 %v1834, %v1841
    %v1849 = vadd.f32 %v1835, %v1842
    %v1850 = vadd.f32 %v1836, %v1843
    %v1851 = vmul.f32 %v99, %v1473
    %v1852 = vmul.f32 %v100, %v1473
    %v1853 = vmul.f32 %v101, %v1473
    %v1854 = vmul.f32 %v102, %v1473
    %v1855 = vmul.f32 %v103, %v1473
    %v1856 = vmul.f32 %v104, %v1473
    %v1857 = vmul.f32 %v105, %v1473
    %v1858 = vadd.f32 %v1844, %v1851
    %v1859 = vadd.f32 %v1845, %v1852
    %v1860 = vadd.f32 %v1846, %v1853
    %v1861 = vadd.f32 %v1847, %v1854
    %v1862 = vadd.f32 %v1848, %v1855
    %v1863 = vadd.f32 %v1849, %v1856
    %v1864 = vadd.f32 %v1850, %v1857
    %v1865 = vmul.f32 %v117, %v1489
    %v1866 = vmul.f32 %v118, %v1489
    %v1867 = vmul.f32 %v119, %v1489
    %v1868 = vmul.f32 %v120, %v1489
    %v1869 = vmul.f32 %v121, %v1489
    %v1870 = vmul.f32 %v122, %v1489
    %v1871 = vmul.f32 %v123, %v1489
    %v1872 = vadd.f32 %v1858, %v1865
    %v1873 = vadd.f32 %v1859, %v1866
    %v1874 = vadd.f32 %v1860, %v1867
    %v1875 = vadd.f32 %v1861, %v1868
    %v1876 = vadd.f32 %v1862, %v1869
    %v1877 = vadd.f32 %v1863, %v1870
    %v1878 = vadd.f32 %v1864, %v1871
    %v1879 = vmul.f32 %v126, %v1505
    %v1880 = vmul.f32 %v127, %v1505
    %v1881 = vmul.f32 %v128, %v1505
    %v1882 = vmul.f32 %v129, %v1505
    %v1883 = vmul.f32 %v130, %v1505
    %v1884 = vmul.f32 %v131, %v1505
    %v1885 = vmul.f32 %v132, %v1505
    %v1886 = vadd.f32 %v1872, %v1879
    %v1887 = vadd.f32 %v1873, %v1880
    %v1888 = vadd.f32 %v1874, %v1881
    %v1889 = vadd.f32 %v1875, %v1882
    %v1890 = vadd.f32 %v1876, %v1883
    %v1891 = vadd.f32 %v1877, %v1884
    %v1892 = vadd.f32 %v1878, %v1885
    %v1893 = vmul.f32 %v135, %v1521
    %v1894 = vmul.f32 %v136, %v1521
    %v1895 = vmul.f32 %v137, %v1521
    %v1896 = vmul.f32 %v138, %v1521
    %v1897 = vmul.f32 %v139, %v1521
    %v1898 = vmul.f32 %v140, %v1521
    %v1899 = vmul.f32 %v141, %v1521
    %v1900 = vadd.f32 %v1886, %v1893
    %v1901 = vadd.f32 %v1887, %v1894
    %v1902 = vadd.f32 %v1888, %v1895
    %v1903 = vadd.f32 %v1889, %v1896
    %v1904 = vadd.f32 %v1890, %v1897
    %v1905 = vadd.f32 %v1891, %v1898
    %v1906 = vadd.f32 %v1892, %v1899
    %v1907 = vmax.f32 %v1781, %v1900
    %v1908 = vmax.f32 %v1782, %v1901
    %v1909 = vmax.f32 %v1783, %v1902
    %v1910 = vmax.f32 %v1784, %v1903
    %v1911 = vmax.f32 %v1785, %v1904
    %v1912 = vmax.f32 %v1786, %v1905
    %v1913 = vmax.f32 %v1787, %v1906
    %s1914 = sld [smem:[#allocation4 + $0x2]]
    %v1915 = vstv %s1914
    %v1916 = vadd.f32 %v1907, %v1915
    %v1917 = vadd.f32 %v1908, %v1915
    %v1918 = vadd.f32 %v1909, %v1915
    %v1919 = vadd.f32 %v1910, %v1915
    %v1920 = vadd.f32 %v1911, %v1915
    %v1921 = vadd.f32 %v1912, %v1915
    %v1922 = vadd.f32 %v1913, %v1915
    %v1923 = vmax.f32 %v1916, 0.0
    %v1924 = vmax.f32 %v1917, 0.0
    %v1925 = vmax.f32 %v1918, 0.0
    %v1926 = vmax.f32 %v1919, 0.0
    %v1927 = vmax.f32 %v1920, 0.0
    %v1928 = vmax.f32 %v1921, 0.0
    %v1929 = vmax.f32 %v1922, 0.0
    %v1931 = vsel %vm1204, %v59, 0
    %v1934 = vsel %vm1204, %v60, 0
    %v1937 = vsel %vm1204, %v61, 0
    %v1940 = vsel %vm1204, %v62, 0
    %1942 = vmatprep.subr.mxu0 0.0
    %1943 = vmatpush1.msra.mxu0 %v1923
    %1944 = vmatprep.subr.mxu0 0.0
    %1945 = vmatpush1.msra.mxu0 %v1924
    %1946 = vmatprep.subr.mxu0 0.0
    %1947 = vmatpush1.msra.mxu0 %v1925
    %1948 = vmatprep.subr.mxu0 0.0
    %1949 = vmatpush1.msra.mxu0 %v1926
    %1950 = vmatprep.subr.mxu0 0.0
    %1951 = vmatpush1.msra.mxu0 %v1927
    %1952 = vmatprep.subr.mxu0 0.0
    %1953 = vmatpush1.msra.mxu0 %v1928
    %1954 = vmatprep.subr.mxu0 0.0
    %1955 = vmatpush1.msra.mxu0 %v1929
    %1956 = vmatprep.subr.mxu0 0.0
    %1957 = vmatpush1.msra.mxu0 0.0
    %1958 = vmatprep.subr.mxu0 0.0
    %1959 = vmatpush1.msra.mxu0 0.0
    %1960 = vmatprep.subr.mxu0 0.0
    %1961 = vmatpush1.msra.mxu0 0.0
    %1962 = vmatprep.subr.mxu0 0.0
    %1963 = vmatpush1.msra.mxu0 0.0
    %1964 = vmatprep.subr.mxu0 0.0
    %1965 = vmatpush1.msra.mxu0 0.0
    %1966 = vmatprep.subr.mxu0 0.0
    %1967 = vmatpush1.msra.mxu0 0.0
    %1968 = vmatprep.subr.mxu0 0.0
    %1969 = vmatpush1.msra.mxu0 0.0
    %1970 = vmatprep.subr.mxu0 0.0
    %1971 = vmatpush1.msra.mxu0 0.0
    %1972 = vmatprep.subr.mxu0 0.0
    %1973 = vmatpush1.msra.mxu0 0.0
    %1974 = vmatprep.subr.mxu0 0.0
    %1975 = vmatpush1.msra.mxu0 0.0
    %1976 = vmatprep.subr.mxu0 0.0
    %1977 = vmatpush1.msra.mxu0 0.0
    %1978 = vmatprep.subr.mxu0 0.0
    %1979 = vmatpush1.msra.mxu0 0.0
    %1980 = vmatprep.subr.mxu0 0.0
    %1981 = vmatpush1.msra.mxu0 0.0
    %1982 = vmatprep.subr.mxu0 0.0
    %1983 = vmatpush1.msra.mxu0 0.0
    %1984 = vmatprep.subr.mxu0 0.0
    %1985 = vmatpush1.msra.mxu0 0.0
    %1986 = vmatprep.subr.mxu0 0.0
    %1987 = vmatpush1.msra.mxu0 0.0
    %1988 = vmatprep.subr.mxu0 0.0
    %1989 = vmatpush1.msra.mxu0 0.0
    %1990 = vmatprep.subr.mxu0 0.0
    %1991 = vmatpush1.msra.mxu0 0.0
    %1992 = vmatprep.subr.mxu0 0.0
    %1993 = vmatpush1.msra.mxu0 0.0
    %1994 = vmatprep.subr.mxu0 0.0
    %1995 = vmatpush1.msra.mxu0 0.0
    %1996 = vmatprep.subr.mxu0 0.0
    %1997 = vmatpush1.msra.mxu0 0.0
    %1998 = vmatprep.subr.mxu0 0.0
    %1999 = vmatpush1.msra.mxu0 0.0
    %2000 = vmatprep.subr.mxu0 0.0
    %2001 = vmatpush1.msra.mxu0 0.0
    %2002 = vmatprep.subr.mxu0 0.0
    %2003 = vmatpush1.msra.mxu0 0.0
    %2004 = vmatprep.subr.mxu0 0.0
    %2005 = vmatpush1.msra.mxu0 0.0
    %2006 = vmatprep.mubr.f32.mxu0 0.0
    %2007 = vmatmul.mubr.f32.gmra.mrb[0].mxu0 %v1931
    %v2008 = vpop.f32.mrb[0].mxu0
    %v2009 = vadd.f32 0.0, %v2008
    %v2010 = vpop.f32.mrb[0].mxu0
    %2011 = vmatprep.mubr.f32.mxu0 0.0
    %2012 = vmatmul.mubr.f32.gmra.mrb[0].mxu0 %v1934
    %v2013 = vpop.f32.mrb[0].mxu0
    %v2014 = vadd.f32 0.0, %v2013
    %v2015 = vpop.f32.mrb[0].mxu0
    %2016 = vmatprep.mubr.f32.mxu0 0.0
    %2017 = vmatmul.mubr.f32.gmra.mrb[0].mxu0 %v1937
    %v2018 = vpop.f32.mrb[0].mxu0
    %v2019 = vadd.f32 0.0, %v2018
    %v2020 = vpop.f32.mrb[0].mxu0
    %2021 = vmatprep.mubr.f32.mxu0 0.0
    %2022 = vmatmul.mubr.f32.gmra.mrb[0].mxu0 %v1940
    %v2023 = vpop.f32.mrb[0].mxu0
    %v2024 = vadd.f32 0.0, %v2023
    %v2025 = vpop.f32.mrb[0].mxu0
    %2026 = vdwg.mxu0
    %v2027 = vadd.f32 %v1381, %v2009
    %v2028 = vadd.f32 %v1386, %v2014
    %v2029 = vadd.f32 %v1391, %v2019
    %v2030 = vadd.f32 %v1396, %v2024
    %s2031 = sld [smem:[#allocation2 + $0x1b]]
    %v2032 = vstv %s2031
    %v2033 = vmul.f32 %v71, %v2032
    %v2034 = vmul.f32 %v72, %v2032
    %v2035 = vmul.f32 %v73, %v2032
    %v2036 = vmul.f32 %v74, %v2032
    %v2037 = vmul.f32 %v75, %v2032
    %v2038 = vmul.f32 %v76, %v2032
    %v2039 = vmul.f32 %v77, %v2032
    %s2040 = sld [smem:[#allocation2 + $0x1c]]
    %v2041 = vstv %s2040
    %v2042 = vmul.f32 %v80, %v2041
    %v2043 = vmul.f32 %v81, %v2041
    %v2044 = vmul.f32 %v82, %v2041
    %v2045 = vmul.f32 %v83, %v2041
    %v2046 = vmul.f32 %v84, %v2041
    %v2047 = vmul.f32 %v85, %v2041
    %v2048 = vmul.f32 %v86, %v2041
    %v2049 = vadd.f32 %v2033, %v2042
    %v2050 = vadd.f32 %v2034, %v2043
    %v2051 = vadd.f32 %v2035, %v2044
    %v2052 = vadd.f32 %v2036, %v2045
    %v2053 = vadd.f32 %v2037, %v2046
    %v2054 = vadd.f32 %v2038, %v2047
    %v2055 = vadd.f32 %v2039, %v2048
    %s2056 = sld [smem:[#allocation2 + $0x1d]]
    %v2057 = vstv %s2056
    %v2058 = vmul.f32 %v89, %v2057
    %v2059 = vmul.f32 %v90, %v2057
    %v2060 = vmul.f32 %v91, %v2057
    %v2061 = vmul.f32 %v92, %v2057
    %v2062 = vmul.f32 %v93, %v2057
    %v2063 = vmul.f32 %v94, %v2057
    %v2064 = vmul.f32 %v95, %v2057
    %v2065 = vadd.f32 %v2049, %v2058
    %v2066 = vadd.f32 %v2050, %v2059
    %v2067 = vadd.f32 %v2051, %v2060
    %v2068 = vadd.f32 %v2052, %v2061
    %v2069 = vadd.f32 %v2053, %v2062
    %v2070 = vadd.f32 %v2054, %v2063
    %v2071 = vadd.f32 %v2055, %v2064
    %s2072 = sld [smem:[#allocation2 + $0x1e]]
    %v2073 = vstv %s2072
    %v2074 = vmul.f32 %v107, %v2073
    %v2075 = vmul.f32 %v108, %v2073
    %v2076 = vmul.f32 %v109, %v2073
    %v2077 = vmul.f32 %v110, %v2073
    %v2078 = vmul.f32 %v111, %v2073
    %v2079 = vmul.f32 %v112, %v2073
    %v2080 = vmul.f32 %v113, %v2073
    %v2081 = vadd.f32 %v2065, %v2074
    %v2082 = vadd.f32 %v2066, %v2075
    %v2083 = vadd.f32 %v2067, %v2076
    %v2084 = vadd.f32 %v2068, %v2077
    %v2085 = vadd.f32 %v2069, %v2078
    %v2086 = vadd.f32 %v2070, %v2079
    %v2087 = vadd.f32 %v2071, %v2080
    %s2088 = sld [smem:[#allocation2 + $0x1f]]
    %v2089 = vstv %s2088
    %v2090 = vmul.f32 %v116, %v2089
    %v2091 = vmul.f32 %v117, %v2089
    %v2092 = vmul.f32 %v118, %v2089
    %v2093 = vmul.f32 %v119, %v2089
    %v2094 = vmul.f32 %v120, %v2089
    %v2095 = vmul.f32 %v121, %v2089
    %v2096 = vmul.f32 %v122, %v2089
    %v2097 = vadd.f32 %v2081, %v2090
    %v2098 = vadd.f32 %v2082, %v2091
    %v2099 = vadd.f32 %v2083, %v2092
    %v2100 = vadd.f32 %v2084, %v2093
    %v2101 = vadd.f32 %v2085, %v2094
    %v2102 = vadd.f32 %v2086, %v2095
    %v2103 = vadd.f32 %v2087, %v2096
    %s2104 = sld [smem:[#allocation2 + $0x20]]
    %v2105 = vstv %s2104
    %v2106 = vmul.f32 %v125, %v2105
    %v2107 = vmul.f32 %v126, %v2105
    %v2108 = vmul.f32 %v127, %v2105
    %v2109 = vmul.f32 %v128, %v2105
    %v2110 = vmul.f32 %v129, %v2105
    %v2111 = vmul.f32 %v130, %v2105
    %v2112 = vmul.f32 %v131, %v2105
    %v2113 = vadd.f32 %v2097, %v2106
    %v2114 = vadd.f32 %v2098, %v2107
    %v2115 = vadd.f32 %v2099, %v2108
    %v2116 = vadd.f32 %v2100, %v2109
    %v2117 = vadd.f32 %v2101, %v2110
    %v2118 = vadd.f32 %v2102, %v2111
    %v2119 = vadd.f32 %v2103, %v2112
    %s2120 = sld [smem:[#allocation2 + $0x21]]
    %v2121 = vstv %s2120
    %v2122 = vmul.f32 %v72, %v2121
    %v2123 = vmul.f32 %v73, %v2121
    %v2124 = vmul.f32 %v74, %v2121
    %v2125 = vmul.f32 %v75, %v2121
    %v2126 = vmul.f32 %v76, %v2121
    %v2127 = vmul.f32 %v77, %v2121
    %v2128 = vmul.f32 %v78, %v2121
    %v2129 = vadd.f32 %v2113, %v2122
    %v2130 = vadd.f32 %v2114, %v2123
    %v2131 = vadd.f32 %v2115, %v2124
    %v2132 = vadd.f32 %v2116, %v2125
    %v2133 = vadd.f32 %v2117, %v2126
    %v2134 = vadd.f32 %v2118, %v2127
    %v2135 = vadd.f32 %v2119, %v2128
    %s2136 = sld [smem:[#allocation2 + $0x22]]
    %v2137 = vstv %s2136
    %v2138 = vmul.f32 %v81, %v2137
    %v2139 = vmul.f32 %v82, %v2137
    %v2140 = vmul.f32 %v83, %v2137
    %v2141 = vmul.f32 %v84, %v2137
    %v2142 = vmul.f32 %v85, %v2137
    %v2143 = vmul.f32 %v86, %v2137
    %v2144 = vmul.f32 %v87, %v2137
    %v2145 = vadd.f32 %v2129, %v2138
    %v2146 = vadd.f32 %v2130, %v2139
    %v2147 = vadd.f32 %v2131, %v2140
    %v2148 = vadd.f32 %v2132, %v2141
    %v2149 = vadd.f32 %v2133, %v2142
    %v2150 = vadd.f32 %v2134, %v2143
    %v2151 = vadd.f32 %v2135, %v2144
    %s2152 = sld [smem:[#allocation2 + $0x23]]
    %v2153 = vstv %s2152
    %v2154 = vmul.f32 %v90, %v2153
    %v2155 = vmul.f32 %v91, %v2153
    %v2156 = vmul.f32 %v92, %v2153
    %v2157 = vmul.f32 %v93, %v2153
    %v2158 = vmul.f32 %v94, %v2153
    %v2159 = vmul.f32 %v95, %v2153
    %v2160 = vmul.f32 %v96, %v2153
    %v2161 = vadd.f32 %v2145, %v2154
    %v2162 = vadd.f32 %v2146, %v2155
    %v2163 = vadd.f32 %v2147, %v2156
    %v2164 = vadd.f32 %v2148, %v2157
    %v2165 = vadd.f32 %v2149, %v2158
    %v2166 = vadd.f32 %v2150, %v2159
    %v2167 = vadd.f32 %v2151, %v2160
    %v2168 = vmul.f32 %v80, %v2032
    %v2169 = vmul.f32 %v81, %v2032
    %v2170 = vmul.f32 %v82, %v2032
    %v2171 = vmul.f32 %v83, %v2032
    %v2172 = vmul.f32 %v84, %v2032
    %v2173 = vmul.f32 %v85, %v2032
    %v2174 = vmul.f32 %v86, %v2032
    %v2175 = vmul.f32 %v89, %v2041
    %v2176 = vmul.f32 %v90, %v2041
    %v2177 = vmul.f32 %v91, %v2041
    %v2178 = vmul.f32 %v92, %v2041
    %v2179 = vmul.f32 %v93, %v2041
    %v2180 = vmul.f32 %v94, %v2041
    %v2181 = vmul.f32 %v95, %v2041
    %v2182 = vadd.f32 %v2168, %v2175
    %v2183 = vadd.f32 %v2169, %v2176
    %v2184 = vadd.f32 %v2170, %v2177
    %v2185 = vadd.f32 %v2171, %v2178
    %v2186 = vadd.f32 %v2172, %v2179
    %v2187 = vadd.f32 %v2173, %v2180
    %v2188 = vadd.f32 %v2174, %v2181
    %v2189 = vmul.f32 %v98, %v2057
    %v2190 = vmul.f32 %v99, %v2057
    %v2191 = vmul.f32 %v100, %v2057
    %v2192 = vmul.f32 %v101, %v2057
    %v2193 = vmul.f32 %v102, %v2057
    %v2194 = vmul.f32 %v103, %v2057
    %v2195 = vmul.f32 %v104, %v2057
    %v2196 = vadd.f32 %v2182, %v2189
    %v2197 = vadd.f32 %v2183, %v2190
    %v2198 = vadd.f32 %v2184, %v2191
    %v2199 = vadd.f32 %v2185, %v2192
    %v2200 = vadd.f32 %v2186, %v2193
    %v2201 = vadd.f32 %v2187, %v2194
    %v2202 = vadd.f32 %v2188, %v2195
    %v2203 = vmul.f32 %v116, %v2073
    %v2204 = vmul.f32 %v117, %v2073
    %v2205 = vmul.f32 %v118, %v2073
    %v2206 = vmul.f32 %v119, %v2073
    %v2207 = vmul.f32 %v120, %v2073
    %v2208 = vmul.f32 %v121, %v2073
    %v2209 = vmul.f32 %v122, %v2073
    %v2210 = vadd.f32 %v2196, %v2203
    %v2211 = vadd.f32 %v2197, %v2204
    %v2212 = vadd.f32 %v2198, %v2205
    %v2213 = vadd.f32 %v2199, %v2206
    %v2214 = vadd.f32 %v2200, %v2207
    %v2215 = vadd.f32 %v2201, %v2208
    %v2216 = vadd.f32 %v2202, %v2209
    %v2217 = vmul.f32 %v125, %v2089
    %v2218 = vmul.f32 %v126, %v2089
    %v2219 = vmul.f32 %v127, %v2089
    %v2220 = vmul.f32 %v128, %v2089
    %v2221 = vmul.f32 %v129, %v2089
    %v2222 = vmul.f32 %v130, %v2089
    %v2223 = vmul.f32 %v131, %v2089
    %v2224 = vadd.f32 %v2210, %v2217
    %v2225 = vadd.f32 %v2211, %v2218
    %v2226 = vadd.f32 %v2212, %v2219
    %v2227 = vadd.f32 %v2213, %v2220
    %v2228 = vadd.f32 %v2214, %v2221
    %v2229 = vadd.f32 %v2215, %v2222
    %v2230 = vadd.f32 %v2216, %v2223
    %v2231 = vmul.f32 %v134, %v2105
    %v2232 = vmul.f32 %v135, %v2105
    %v2233 = vmul.f32 %v136, %v2105
    %v2234 = vmul.f32 %v137, %v2105
    %v2235 = vmul.f32 %v138, %v2105
    %v2236 = vmul.f32 %v139, %v2105
    %v2237 = vmul.f32 %v140, %v2105
    %v2238 = vadd.f32 %v2224, %v2231
    %v2239 = vadd.f32 %v2225, %v2232
    %v2240 = vadd.f32 %v2226, %v2233
    %v2241 = vadd.f32 %v2227, %v2234
    %v2242 = vadd.f32 %v2228, %v2235
    %v2243 = vadd.f32 %v2229, %v2236
    %v2244 = vadd.f32 %v2230, %v2237
    %v2245 = vmul.f32 %v81, %v2121
    %v2246 = vmul.f32 %v82, %v2121
    %v2247 = vmul.f32 %v83, %v2121
    %v2248 = vmul.f32 %v84, %v2121
    %v2249 = vmul.f32 %v85, %v2121
    %v2250 = vmul.f32 %v86, %v2121
    %v2251 = vmul.f32 %v87, %v2121
    %v2252 = vadd.f32 %v2238, %v2245
    %v2253 = vadd.f32 %v2239, %v2246
    %v2254 = vadd.f32 %v2240, %v2247
    %v2255 = vadd.f32 %v2241, %v2248
    %v2256 = vadd.f32 %v2242, %v2249
    %v2257 = vadd.f32 %v2243, %v2250
    %v2258 = vadd.f32 %v2244, %v2251
    %v2259 = vmul.f32 %v90, %v2137
    %v2260 = vmul.f32 %v91, %v2137
    %v2261 = vmul.f32 %v92, %v2137
    %v2262 = vmul.f32 %v93, %v2137
    %v2263 = vmul.f32 %v94, %v2137
    %v2264 = vmul.f32 %v95, %v2137
    %v2265 = vmul.f32 %v96, %v2137
    %v2266 = vadd.f32 %v2252, %v2259
    %v2267 = vadd.f32 %v2253, %v2260
    %v2268 = vadd.f32 %v2254, %v2261
    %v2269 = vadd.f32 %v2255, %v2262
    %v2270 = vadd.f32 %v2256, %v2263
    %v2271 = vadd.f32 %v2257, %v2264
    %v2272 = vadd.f32 %v2258, %v2265
    %v2273 = vmul.f32 %v99, %v2153
    %v2274 = vmul.f32 %v100, %v2153
    %v2275 = vmul.f32 %v101, %v2153
    %v2276 = vmul.f32 %v102, %v2153
    %v2277 = vmul.f32 %v103, %v2153
    %v2278 = vmul.f32 %v104, %v2153
    %v2279 = vmul.f32 %v105, %v2153
    %v2280 = vadd.f32 %v2266, %v2273
    %v2281 = vadd.f32 %v2267, %v2274
    %v2282 = vadd.f32 %v2268, %v2275
    %v2283 = vadd.f32 %v2269, %v2276
    %v2284 = vadd.f32 %v2270, %v2277
    %v2285 = vadd.f32 %v2271, %v2278
    %v2286 = vadd.f32 %v2272, %v2279
    %v2287 = vmax.f32 %v2161, %v2280
    %v2288 = vmax.f32 %v2162, %v2281
    %v2289 = vmax.f32 %v2163, %v2282
    %v2290 = vmax.f32 %v2164, %v2283
    %v2291 = vmax.f32 %v2165, %v2284
    %v2292 = vmax.f32 %v2166, %v2285
    %v2293 = vmax.f32 %v2167, %v2286
    %v2294 = vmul.f32 %v107, %v2032
    %v2295 = vmul.f32 %v108, %v2032
    %v2296 = vmul.f32 %v109, %v2032
    %v2297 = vmul.f32 %v110, %v2032
    %v2298 = vmul.f32 %v111, %v2032
    %v2299 = vmul.f32 %v112, %v2032
    %v2300 = vmul.f32 %v113, %v2032
    %v2301 = vmul.f32 %v116, %v2041
    %v2302 = vmul.f32 %v117, %v2041
    %v2303 = vmul.f32 %v118, %v2041
    %v2304 = vmul.f32 %v119, %v2041
    %v2305 = vmul.f32 %v120, %v2041
    %v2306 = vmul.f32 %v121, %v2041
    %v2307 = vmul.f32 %v122, %v2041
    %v2308 = vadd.f32 %v2294, %v2301
    %v2309 = vadd.f32 %v2295, %v2302
    %v2310 = vadd.f32 %v2296, %v2303
    %v2311 = vadd.f32 %v2297, %v2304
    %v2312 = vadd.f32 %v2298, %v2305
    %v2313 = vadd.f32 %v2299, %v2306
    %v2314 = vadd.f32 %v2300, %v2307
    %v2315 = vmul.f32 %v125, %v2057
    %v2316 = vmul.f32 %v126, %v2057
    %v2317 = vmul.f32 %v127, %v2057
    %v2318 = vmul.f32 %v128, %v2057
    %v2319 = vmul.f32 %v129, %v2057
    %v2320 = vmul.f32 %v130, %v2057
    %v2321 = vmul.f32 %v131, %v2057
    %v2322 = vadd.f32 %v2308, %v2315
    %v2323 = vadd.f32 %v2309, %v2316
    %v2324 = vadd.f32 %v2310, %v2317
    %v2325 = vadd.f32 %v2311, %v2318
    %v2326 = vadd.f32 %v2312, %v2319
    %v2327 = vadd.f32 %v2313, %v2320
    %v2328 = vadd.f32 %v2314, %v2321
    %v2329 = vmul.f32 %v72, %v2073
    %v2330 = vmul.f32 %v73, %v2073
    %v2331 = vmul.f32 %v74, %v2073
    %v2332 = vmul.f32 %v75, %v2073
    %v2333 = vmul.f32 %v76, %v2073
    %v2334 = vmul.f32 %v77, %v2073
    %v2335 = vmul.f32 %v78, %v2073
    %v2336 = vadd.f32 %v2322, %v2329
    %v2337 = vadd.f32 %v2323, %v2330
    %v2338 = vadd.f32 %v2324, %v2331
    %v2339 = vadd.f32 %v2325, %v2332
    %v2340 = vadd.f32 %v2326, %v2333
    %v2341 = vadd.f32 %v2327, %v2334
    %v2342 = vadd.f32 %v2328, %v2335
    %v2343 = vmul.f32 %v81, %v2089
    %v2344 = vmul.f32 %v82, %v2089
    %v2345 = vmul.f32 %v83, %v2089
    %v2346 = vmul.f32 %v84, %v2089
    %v2347 = vmul.f32 %v85, %v2089
    %v2348 = vmul.f32 %v86, %v2089
    %v2349 = vmul.f32 %v87, %v2089
    %v2350 = vadd.f32 %v2336, %v2343
    %v2351 = vadd.f32 %v2337, %v2344
    %v2352 = vadd.f32 %v2338, %v2345
    %v2353 = vadd.f32 %v2339, %v2346
    %v2354 = vadd.f32 %v2340, %v2347
    %v2355 = vadd.f32 %v2341, %v2348
    %v2356 = vadd.f32 %v2342, %v2349
    %v2357 = vmul.f32 %v90, %v2105
    %v2358 = vmul.f32 %v91, %v2105
    %v2359 = vmul.f32 %v92, %v2105
    %v2360 = vmul.f32 %v93, %v2105
    %v2361 = vmul.f32 %v94, %v2105
    %v2362 = vmul.f32 %v95, %v2105
    %v2363 = vmul.f32 %v96, %v2105
    %v2364 = vadd.f32 %v2350, %v2357
    %v2365 = vadd.f32 %v2351, %v2358
    %v2366 = vadd.f32 %v2352, %v2359
    %v2367 = vadd.f32 %v2353, %v2360
    %v2368 = vadd.f32 %v2354, %v2361
    %v2369 = vadd.f32 %v2355, %v2362
    %v2370 = vadd.f32 %v2356, %v2363
    %v2371 = vmul.f32 %v108, %v2121
    %v2372 = vmul.f32 %v109, %v2121
    %v2373 = vmul.f32 %v110, %v2121
    %v2374 = vmul.f32 %v111, %v2121
    %v2375 = vmul.f32 %v112, %v2121
    %v2376 = vmul.f32 %v113, %v2121
    %v2377 = vmul.f32 %v114, %v2121
    %v2378 = vadd.f32 %v2364, %v2371
    %v2379 = vadd.f32 %v2365, %v2372
    %v2380 = vadd.f32 %v2366, %v2373
    %v2381 = vadd.f32 %v2367, %v2374
    %v2382 = vadd.f32 %v2368, %v2375
    %v2383 = vadd.f32 %v2369, %v2376
    %v2384 = vadd.f32 %v2370, %v2377
    %v2385 = vmul.f32 %v117, %v2137
    %v2386 = vmul.f32 %v118, %v2137
    %v2387 = vmul.f32 %v119, %v2137
    %v2388 = vmul.f32 %v120, %v2137
    %v2389 = vmul.f32 %v121, %v2137
    %v2390 = vmul.f32 %v122, %v2137
    %v2391 = vmul.f32 %v123, %v2137
    %v2392 = vadd.f32 %v2378, %v2385
    %v2393 = vadd.f32 %v2379, %v2386
    %v2394 = vadd.f32 %v2380, %v2387
    %v2395 = vadd.f32 %v2381, %v2388
    %v2396 = vadd.f32 %v2382, %v2389
    %v2397 = vadd.f32 %v2383, %v2390
    %v2398 = vadd.f32 %v2384, %v2391
    %v2399 = vmul.f32 %v126, %v2153
    %v2400 = vmul.f32 %v127, %v2153
    %v2401 = vmul.f32 %v128, %v2153
    %v2402 = vmul.f32 %v129, %v2153
    %v2403 = vmul.f32 %v130, %v2153
    %v2404 = vmul.f32 %v131, %v2153
    %v2405 = vmul.f32 %v132, %v2153
    %v2406 = vadd.f32 %v2392, %v2399
    %v2407 = vadd.f32 %v2393, %v2400
    %v2408 = vadd.f32 %v2394, %v2401
    %v2409 = vadd.f32 %v2395, %v2402
    %v2410 = vadd.f32 %v2396, %v2403
    %v2411 = vadd.f32 %v2397, %v2404
    %v2412 = vadd.f32 %v2398, %v2405
    %v2413 = vmax.f32 %v2287, %v2406
    %v2414 = vmax.f32 %v2288, %v2407
    %v2415 = vmax.f32 %v2289, %v2408
    %v2416 = vmax.f32 %v2290, %v2409
    %v2417 = vmax.f32 %v2291, %v2410
    %v2418 = vmax.f32 %v2292, %v2411
    %v2419 = vmax.f32 %v2293, %v2412
    %v2420 = vmul.f32 %v116, %v2032
    %v2421 = vmul.f32 %v117, %v2032
    %v2422 = vmul.f32 %v118, %v2032
    %v2423 = vmul.f32 %v119, %v2032
    %v2424 = vmul.f32 %v120, %v2032
    %v2425 = vmul.f32 %v121, %v2032
    %v2426 = vmul.f32 %v122, %v2032
    %v2427 = vmul.f32 %v125, %v2041
    %v2428 = vmul.f32 %v126, %v2041
    %v2429 = vmul.f32 %v127, %v2041
    %v2430 = vmul.f32 %v128, %v2041
    %v2431 = vmul.f32 %v129, %v2041
    %v2432 = vmul.f32 %v130, %v2041
    %v2433 = vmul.f32 %v131, %v2041
    %v2434 = vadd.f32 %v2420, %v2427
    %v2435 = vadd.f32 %v2421, %v2428
    %v2436 = vadd.f32 %v2422, %v2429
    %v2437 = vadd.f32 %v2423, %v2430
    %v2438 = vadd.f32 %v2424, %v2431
    %v2439 = vadd.f32 %v2425, %v2432
    %v2440 = vadd.f32 %v2426, %v2433
    %v2441 = vmul.f32 %v134, %v2057
    %v2442 = vmul.f32 %v135, %v2057
    %v2443 = vmul.f32 %v136, %v2057
    %v2444 = vmul.f32 %v137, %v2057
    %v2445 = vmul.f32 %v138, %v2057
    %v2446 = vmul.f32 %v139, %v2057
    %v2447 = vmul.f32 %v140, %v2057
    %v2448 = vadd.f32 %v2434, %v2441
    %v2449 = vadd.f32 %v2435, %v2442
    %v2450 = vadd.f32 %v2436, %v2443
    %v2451 = vadd.f32 %v2437, %v2444
    %v2452 = vadd.f32 %v2438, %v2445
    %v2453 = vadd.f32 %v2439, %v2446
    %v2454 = vadd.f32 %v2440, %v2447
    %v2455 = vmul.f32 %v81, %v2073
    %v2456 = vmul.f32 %v82, %v2073
    %v2457 = vmul.f32 %v83, %v2073
    %v2458 = vmul.f32 %v84, %v2073
    %v2459 = vmul.f32 %v85, %v2073
    %v2460 = vmul.f32 %v86, %v2073
    %v2461 = vmul.f32 %v87, %v2073
    %v2462 = vadd.f32 %v2448, %v2455
    %v2463 = vadd.f32 %v2449, %v2456
    %v2464 = vadd.f32 %v2450, %v2457
    %v2465 = vadd.f32 %v2451, %v2458
    %v2466 = vadd.f32 %v2452, %v2459
    %v2467 = vadd.f32 %v2453, %v2460
    %v2468 = vadd.f32 %v2454, %v2461
    %v2469 = vmul.f32 %v90, %v2089
    %v2470 = vmul.f32 %v91, %v2089
    %v2471 = vmul.f32 %v92, %v2089
    %v2472 = vmul.f32 %v93, %v2089
    %v2473 = vmul.f32 %v94, %v2089
    %v2474 = vmul.f32 %v95, %v2089
    %v2475 = vmul.f32 %v96, %v2089
    %v2476 = vadd.f32 %v2462, %v2469
    %v2477 = vadd.f32 %v2463, %v2470
    %v2478 = vadd.f32 %v2464, %v2471
    %v2479 = vadd.f32 %v2465, %v2472
    %v2480 = vadd.f32 %v2466, %v2473
    %v2481 = vadd.f32 %v2467, %v2474
    %v2482 = vadd.f32 %v2468, %v2475
    %v2483 = vmul.f32 %v99, %v2105
    %v2484 = vmul.f32 %v100, %v2105
    %v2485 = vmul.f32 %v101, %v2105
    %v2486 = vmul.f32 %v102, %v2105
    %v2487 = vmul.f32 %v103, %v2105
    %v2488 = vmul.f32 %v104, %v2105
    %v2489 = vmul.f32 %v105, %v2105
    %v2490 = vadd.f32 %v2476, %v2483
    %v2491 = vadd.f32 %v2477, %v2484
    %v2492 = vadd.f32 %v2478, %v2485
    %v2493 = vadd.f32 %v2479, %v2486
    %v2494 = vadd.f32 %v2480, %v2487
    %v2495 = vadd.f32 %v2481, %v2488
    %v2496 = vadd.f32 %v2482, %v2489
    %v2497 = vmul.f32 %v117, %v2121
    %v2498 = vmul.f32 %v118, %v2121
    %v2499 = vmul.f32 %v119, %v2121
    %v2500 = vmul.f32 %v120, %v2121
    %v2501 = vmul.f32 %v121, %v2121
    %v2502 = vmul.f32 %v122, %v2121
    %v2503 = vmul.f32 %v123, %v2121
    %v2504 = vadd.f32 %v2490, %v2497
    %v2505 = vadd.f32 %v2491, %v2498
    %v2506 = vadd.f32 %v2492, %v2499
    %v2507 = vadd.f32 %v2493, %v2500
    %v2508 = vadd.f32 %v2494, %v2501
    %v2509 = vadd.f32 %v2495, %v2502
    %v2510 = vadd.f32 %v2496, %v2503
    %v2511 = vmul.f32 %v126, %v2137
    %v2512 = vmul.f32 %v127, %v2137
    %v2513 = vmul.f32 %v128, %v2137
    %v2514 = vmul.f32 %v129, %v2137
    %v2515 = vmul.f32 %v130, %v2137
    %v2516 = vmul.f32 %v131, %v2137
    %v2517 = vmul.f32 %v132, %v2137
    %v2518 = vadd.f32 %v2504, %v2511
    %v2519 = vadd.f32 %v2505, %v2512
    %v2520 = vadd.f32 %v2506, %v2513
    %v2521 = vadd.f32 %v2507, %v2514
    %v2522 = vadd.f32 %v2508, %v2515
    %v2523 = vadd.f32 %v2509, %v2516
    %v2524 = vadd.f32 %v2510, %v2517
    %v2525 = vmul.f32 %v135, %v2153
    %v2526 = vmul.f32 %v136, %v2153
    %v2527 = vmul.f32 %v137, %v2153
    %v2528 = vmul.f32 %v138, %v2153
    %v2529 = vmul.f32 %v139, %v2153
    %v2530 = vmul.f32 %v140, %v2153
    %v2531 = vmul.f32 %v141, %v2153
    %v2532 = vadd.f32 %v2518, %v2525
    %v2533 = vadd.f32 %v2519, %v2526
    %v2534 = vadd.f32 %v2520, %v2527
    %v2535 = vadd.f32 %v2521, %v2528
    %v2536 = vadd.f32 %v2522, %v2529
    %v2537 = vadd.f32 %v2523, %v2530
    %v2538 = vadd.f32 %v2524, %v2531
    %v2539 = vmax.f32 %v2413, %v2532
    %v2540 = vmax.f32 %v2414, %v2533
    %v2541 = vmax.f32 %v2415, %v2534
    %v2542 = vmax.f32 %v2416, %v2535
    %v2543 = vmax.f32 %v2417, %v2536
    %v2544 = vmax.f32 %v2418, %v2537
    %v2545 = vmax.f32 %v2419, %v2538
    %s2546 = sld [smem:[#allocation4 + $0x3]]
    %v2547 = vstv %s2546
    %v2548 = vadd.f32 %v2539, %v2547
    %v2549 = vadd.f32 %v2540, %v2547
    %v2550 = vadd.f32 %v2541, %v2547
    %v2551 = vadd.f32 %v2542, %v2547
    %v2552 = vadd.f32 %v2543, %v2547
    %v2553 = vadd.f32 %v2544, %v2547
    %v2554 = vadd.f32 %v2545, %v2547
    %v2555 = vmax.f32 %v2548, 0.0
    %v2556 = vmax.f32 %v2549, 0.0
    %v2557 = vmax.f32 %v2550, 0.0
    %v2558 = vmax.f32 %v2551, 0.0
    %v2559 = vmax.f32 %v2552, 0.0
    %v2560 = vmax.f32 %v2553, 0.0
    %v2561 = vmax.f32 %v2554, 0.0
    %v2563 = vsel %vm1204, %v63, 0
    %v2566 = vsel %vm1204, %v64, 0
    %v2569 = vsel %vm1204, %v65, 0
    %v2572 = vsel %vm1204, %v66, 0
    %2574 = vmatprep.subr.mxu0 0.0
    %2575 = vmatpush1.msra.mxu0 %v2555
    %2576 = vmatprep.subr.mxu0 0.0
    %2577 = vmatpush1.msra.mxu0 %v2556
    %2578 = vmatprep.subr.mxu0 0.0
    %2579 = vmatpush1.msra.mxu0 %v2557
    %2580 = vmatprep.subr.mxu0 0.0
    %2581 = vmatpush1.msra.mxu0 %v2558
    %2582 = vmatprep.subr.mxu0 0.0
    %2583 = vmatpush1.msra.mxu0 %v2559
    %2584 = vmatprep.subr.mxu0 0.0
    %2585 = vmatpush1.msra.mxu0 %v2560
    %2586 = vmatprep.subr.mxu0 0.0
    %2587 = vmatpush1.msra.mxu0 %v2561
    %2588 = vmatprep.subr.mxu0 0.0
    %2589 = vmatpush1.msra.mxu0 0.0
    %2590 = vmatprep.subr.mxu0 0.0
    %2591 = vmatpush1.msra.mxu0 0.0
    %2592 = vmatprep.subr.mxu0 0.0
    %2593 = vmatpush1.msra.mxu0 0.0
    %2594 = vmatprep.subr.mxu0 0.0
    %2595 = vmatpush1.msra.mxu0 0.0
    %2596 = vmatprep.subr.mxu0 0.0
    %2597 = vmatpush1.msra.mxu0 0.0
    %2598 = vmatprep.subr.mxu0 0.0
    %2599 = vmatpush1.msra.mxu0 0.0
    %2600 = vmatprep.subr.mxu0 0.0
    %2601 = vmatpush1.msra.mxu0 0.0
    %2602 = vmatprep.subr.mxu0 0.0
    %2603 = vmatpush1.msra.mxu0 0.0
    %2604 = vmatprep.subr.mxu0 0.0
    %2605 = vmatpush1.msra.mxu0 0.0
    %2606 = vmatprep.subr.mxu0 0.0
    %2607 = vmatpush1.msra.mxu0 0.0
    %2608 = vmatprep.subr.mxu0 0.0
    %2609 = vmatpush1.msra.mxu0 0.0
    %2610 = vmatprep.subr.mxu0 0.0
    %2611 = vmatpush1.msra.mxu0 0.0
    %2612 = vmatprep.subr.mxu0 0.0
    %2613 = vmatpush1.msra.mxu0 0.0
    %2614 = vmatprep.subr.mxu0 0.0
    %2615 = vmatpush1.msra.mxu0 0.0
    %2616 = vmatprep.subr.mxu0 0.0
    %2617 = vmatpush1.msra.mxu0 0.0
    %2618 = vmatprep.subr.mxu0 0.0
    %2619 = vmatpush1.msra.mxu0 0.0
    %2620 = vmatprep.subr.mxu0 0.0
    %2621 = vmatpush1.msra.mxu0 0.0
    %2622 = vmatprep.subr.mxu0 0.0
    %2623 = vmatpush1.msra.mxu0 0.0
    %2624 = vmatprep.subr.mxu0 0.0
    %2625 = vmatpush1.msra.mxu0 0.0
    %2626 = vmatprep.subr.mxu0 0.0
    %2627 = vmatpush1.msra.mxu0 0.0
    %2628 = vmatprep.subr.mxu0 0.0
    %2629 = vmatpush1.msra.mxu0 0.0
    %2630 = vmatprep.subr.mxu0 0.0
    %2631 = vmatpush1.msra.mxu0 0.0
    %2632 = vmatprep.subr.mxu0 0.0
    %2633 = vmatpush1.msra.mxu0 0.0
    %2634 = vmatprep.subr.mxu0 0.0
    %2635 = vmatpush1.msra.mxu0 0.0
    %2636 = vmatprep.subr.mxu0 0.0
    %2637 = vmatpush1.msra.mxu0 0.0
    %2638 = vmatprep.mubr.f32.mxu0 0.0
    %2639 = vmatmul.mubr.f32.gmra.mrb[0].mxu0 %v2563
    %v2640 = vpop.f32.mrb[0].mxu0
    %v2641 = vadd.f32 0.0, %v2640
    %v2642 = vpop.f32.mrb[0].mxu0
    %2643 = vmatprep.mubr.f32.mxu0 0.0
    %2644 = vmatmul.mubr.f32.gmra.mrb[0].mxu0 %v2566
    %v2645 = vpop.f32.mrb[0].mxu0
    %v2646 = vadd.f32 0.0, %v2645
    %v2647 = vpop.f32.mrb[0].mxu0
    %2648 = vmatprep.mubr.f32.mxu0 0.0
    %2649 = vmatmul.mubr.f32.gmra.mrb[0].mxu0 %v2569
    %v2650 = vpop.f32.mrb[0].mxu0
    %v2651 = vadd.f32 0.0, %v2650
    %v2652 = vpop.f32.mrb[0].mxu0
    %2653 = vmatprep.mubr.f32.mxu0 0.0
    %2654 = vmatmul.mubr.f32.gmra.mrb[0].mxu0 %v2572
    %v2655 = vpop.f32.mrb[0].mxu0
    %v2656 = vadd.f32 0.0, %v2655
    %v2657 = vpop.f32.mrb[0].mxu0
    %2658 = vdwg.mxu0
    %v2659 = vadd.f32 %v2027, %v2641
    %v2660 = vadd.f32 %v2028, %v2646
    %v2661 = vadd.f32 %v2029, %v2651
    %v2662 = vadd.f32 %v2030, %v2656
    %2664 = vset.pattern.permute.xlu0 0
    %2665 = vperm.xlu0 %2664, %v67
    %v2666 = vpop.permute.xlu0 %2665
    %2669 = vset.pattern.permute.xlu0 0
    %2670 = vperm.xlu0 %2669, %v68
    %v2671 = vpop.permute.xlu0 %2670
    %2674 = vset.pattern.permute.xlu0 0
    %2675 = vperm.xlu0 %2674, %v69
    %v2676 = vpop.permute.xlu0 %2675
    %2679 = vset.pattern.permute.xlu0 0
    %2680 = vperm.xlu0 %2679, %v70
    %v2681 = vpop.permute.xlu0 %2680
    %v2683 = vadd.f32 %v2659, %v2666
    %v2684 = vadd.f32 %v2660, %v2671
    %v2685 = vadd.f32 %v2661, %v2676
    %v2686 = vadd.f32 %v2662, %v2681
    %v2687 = vmax.f32 %v2683, 0.0
    %v2688 = vmax.f32 %v2684, 0.0
    %v2689 = vmax.f32 %v2685, 0.0
    %v2690 = vmax.f32 %v2686, 0.0
    %v2691 = vld [vmem:[%s5] sm:$0xff]
    %v2692 = vld [vmem:[%s5 + $0x8] sm:$0x3]
    %v2693 = vld [vmem:[%s6] sm:$0xff]
    %v2694 = vld [vmem:[%s6 + $0x8] sm:$0x3]
    %2696 = vset.pattern.permute.xlu0 0
    %2697 = vperm.xlu0 %2696, %v2693
    %v2698 = vpop.permute.xlu0 %2697
    %2701 = vset.pattern.permute.xlu0 0
    %2702 = vperm.xlu0 %2701, %v2694
    %v2703 = vpop.permute.xlu0 %2702
    %vm2705 = vcmask 261120
    %v2707 = vsel %vm2705, %v2691, 0
    %v2710 = vsel %vm2705, %v2692, 0
    %2712 = vmatprep.subr.mxu0 0.0
    %2713 = vmatpush1.msra.mxu0 %v2687
    %2714 = vmatprep.subr.mxu0 0.0
    %2715 = vmatpush1.msra.mxu0 %v2688
    %2716 = vmatprep.subr.mxu0 0.0
    %2717 = vmatpush1.msra.mxu0 %v2689
    %2718 = vmatprep.subr.mxu0 0.0
    %2719 = vmatpush1.msra.mxu0 %v2690
    %2720 = vmatprep.subr.mxu0 0.0
    %2721 = vmatpush1.msra.mxu0 0.0
    %2722 = vmatprep.subr.mxu0 0.0
    %2723 = vmatpush1.msra.mxu0 0.0
    %2724 = vmatprep.subr.mxu0 0.0
    %2725 = vmatpush1.msra.mxu0 0.0
    %2726 = vmatprep.subr.mxu0 0.0
    %2727 = vmatpush1.msra.mxu0 0.0
    %2728 = vmatprep.subr.mxu0 0.0
    %2729 = vmatpush1.msra.mxu0 0.0
    %2730 = vmatprep.subr.mxu0 0.0
    %2731 = vmatpush1.msra.mxu0 0.0
    %2732 = vmatprep.subr.mxu0 0.0
    %2733 = vmatpush1.msra.mxu0 0.0
    %2734 = vmatprep.subr.mxu0 0.0
    %2735 = vmatpush1.msra.mxu0 0.0
    %2736 = vmatprep.subr.mxu0 0.0
    %2737 = vmatpush1.msra.mxu0 0.0
    %2738 = vmatprep.subr.mxu0 0.0
    %2739 = vmatpush1.msra.mxu0 0.0
    %2740 = vmatprep.subr.mxu0 0.0
    %2741 = vmatpush1.msra.mxu0 0.0
    %2742 = vmatprep.subr.mxu0 0.0
    %2743 = vmatpush1.msra.mxu0 0.0
    %2744 = vmatprep.subr.mxu0 0.0
    %2745 = vmatpush1.msra.mxu0 0.0
    %2746 = vmatprep.subr.mxu0 0.0
    %2747 = vmatpush1.msra.mxu0 0.0
    %2748 = vmatprep.subr.mxu0 0.0
    %2749 = vmatpush1.msra.mxu0 0.0
    %2750 = vmatprep.subr.mxu0 0.0
    %2751 = vmatpush1.msra.mxu0 0.0
    %2752 = vmatprep.subr.mxu0 0.0
    %2753 = vmatpush1.msra.mxu0 0.0
    %2754 = vmatprep.subr.mxu0 0.0
    %2755 = vmatpush1.msra.mxu0 0.0
    %2756 = vmatprep.subr.mxu0 0.0
    %2757 = vmatpush1.msra.mxu0 0.0
    %2758 = vmatprep.subr.mxu0 0.0
    %2759 = vmatpush1.msra.mxu0 0.0
    %2760 = vmatprep.subr.mxu0 0.0
    %2761 = vmatpush1.msra.mxu0 0.0
    %2762 = vmatprep.subr.mxu0 0.0
    %2763 = vmatpush1.msra.mxu0 0.0
    %2764 = vmatprep.subr.mxu0 0.0
    %2765 = vmatpush1.msra.mxu0 0.0
    %2766 = vmatprep.subr.mxu0 0.0
    %2767 = vmatpush1.msra.mxu0 0.0
    %2768 = vmatprep.subr.mxu0 0.0
    %2769 = vmatpush1.msra.mxu0 0.0
    %2770 = vmatprep.subr.mxu0 0.0
    %2771 = vmatpush1.msra.mxu0 0.0
    %2772 = vmatprep.subr.mxu0 0.0
    %2773 = vmatpush1.msra.mxu0 0.0
    %2774 = vmatprep.subr.mxu0 0.0
    %2775 = vmatpush1.msra.mxu0 0.0
    %2776 = vmatprep.mubr.f32.mxu0 0.0
    %2777 = vmatmul.mubr.f32.gmra.mrb[0].mxu0 %v2707
    %v2778 = vpop.f32.mrb[0].mxu0
    %v2779 = vadd.f32 %v2698, %v2778
    %v2780 = vpop.f32.mrb[0].mxu0
    %2781 = vmatprep.mubr.f32.mxu0 0.0
    %2782 = vmatmul.mubr.f32.gmra.mrb[0].mxu0 %v2710
    %v2783 = vpop.f32.mrb[0].mxu0
    %v2784 = vadd.f32 %v2703, %v2783
    %v2785 = vpop.f32.mrb[0].mxu0
    %2786 = vdwg.mxu0
    %2787 = vst [vmem:[%s7] sm:$0xff] %v2779
    %2788 = vst [vmem:[%s7 + $0x8] sm:$0x3] %v2784
    // Predicated region
    $region38: #{forward.1} parent=1 // pred_check
      _
    $region39: #{forward.1} parent=1 // pred_check_branch
      %2790 = sbr.rel (0) target = $region41
    $region40: #{forward.1} parent=1 // pred_region
      _
    $region41: #{forward.1} parent=1 // pred_fallthru
      _
    // Predicated region
    $region42: #{forward.1} parent=1 // pred_check
      _
    $region43: #{forward.1} parent=1 // pred_check_branch
      %2792 = sbr.rel (0) target = $region45
    $region44: #{forward.1} parent=1 // pred_region
      _
    $region45: #{forward.1} parent=1 // pred_fallthru
      _
    %2793 = vsyncpa [#allocation3], 1
    %2794 = vsyncpa [#allocation5], 1

</llo_original>
